<compile_context>
chip_gen: v6e
topology: v6e:2x2x1
jax: 0.10.0
libtpu: 0.0.40
codegen_flags: <defaults>
</compile_context>

<pallas_src>
import jax
import jax.numpy as jnp
from jax import lax
from jax.experimental import pallas as pl
from jax.experimental.pallas import tpu as pltpu

GROUPS = 8
EPS = 1e-5
REF_PREC = lax.Precision.HIGHEST   # reference only; the kernel uses native bf16 MXU


def _exact_gelu(x):
    # matches torch.nn.GELU() default (approximate='none')
    return 0.5 * x * (1.0 + lax.erf(x * 0.7071067811865476))


def _gn_gelu(acc, grp, gamma_row, beta_row):
    """GroupNorm(8) + folded affine + exact GELU on a lane-dense (H, W*C) slab.

    acc:        (H, W*C) f32 conv output (bias already added) for one sample
    grp:        (W*C, W*C) "same group" matrix pre-scaled by 1/(H*W*C_per_group)
    gamma_row/beta_row: (1, W*C) per-channel affine tiled along x
    """
    s1 = jnp.sum(acc, axis=0, keepdims=True)                 # (1, W*C) per-lane sums
    mean = jnp.dot(s1, grp, preferred_element_type=jnp.float32)   # group mean, bcast to lanes
    centered = acc - mean
    s2 = jnp.sum(centered * centered, axis=0, keepdims=True)
    var = jnp.dot(s2, grp, preferred_element_type=jnp.float32)    # biased centered variance
    scale = lax.rsqrt(var + EPS) * gamma_row                 # folded affine
    return _exact_gelu(centered * scale + beta_row)          # one fma + GELU per element


def _conv_block_kernel(x_ref, w1_ref, b1_ref, g1_ref, bt1_ref,
                       w2_ref, b2_ref, g2_ref, bt2_ref, grp_ref,
                       o_ref, xpad_ref, hpad_ref):
    # x_ref   : (1, H, W*Cin)        one sample, lane-dense rows
    # w1_ref  : (3, W*Cin, W*Cout)   per-dy banded conv1 weights (bf16)
    # w2_ref  : (3, W*Cout, W*Cout)  per-dy banded conv2 weights (bf16)
    # b*/g*/bt*: (1, W*Cout)         conv bias / GN gamma / GN beta, tiled along x
    # grp_ref : (W*Cout, W*Cout)     same-group matrix / (H*W*cg)
    # o_ref   : (1, H, W*Cout)       lane-dense output slab
    # xpad_ref: (H+2, W*Cin)  VMEM scratch: y-padded input rows
    # hpad_ref: (H+2, W*Cout) VMEM scratch: y-padded layer-1 activation rows
    _, H, WCi = x_ref.shape
    WCo = o_ref.shape[-1]

    grp = grp_ref[...]

    # ---------------- layer 1: Conv3x3 (3 banded matmuls) + GN + GELU ----------------
    # Border-only zeroing: only the two halo rows are cleared each step (safe under
    # megacore "parallel" grid splitting); the interior is fully overwritten below.
    xpad_ref[0:1, :] = jnp.zeros((1, WCi), xpad_ref.dtype)
    xpad_ref[H + 1:H + 2, :] = jnp.zeros((1, WCi), xpad_ref.dtype)
    xpad_ref[1:H + 1, :] = x_ref[0]

    acc1 = jnp.zeros((H, WCo), jnp.float32)
    for dy in range(3):        # static; x-padding is encoded in the band structure
        lhs = xpad_ref[dy:dy + H, :].astype(jnp.bfloat16)
        acc1 = acc1 + jnp.dot(lhs, w1_ref[dy], preferred_element_type=jnp.float32)
    acc1 = acc1 + b1_ref[...]
    y1 = _gn_gelu(acc1, grp, g1_ref[...], bt1_ref[...])       # (H, W*Cout), f32

    # ---------------- layer 2: Conv3x3 (3 banded matmuls) + GN + GELU ----------------
    hpad_ref[0:1, :] = jnp.zeros((1, WCo), hpad_ref.dtype)
    hpad_ref[H + 1:H + 2, :] = jnp.zeros((1, WCo), hpad_ref.dtype)
    hpad_ref[1:H + 1, :] = y1

    acc2 = jnp.zeros((H, WCo), jnp.float32)
    for dy in range(3):
        lhs = hpad_ref[dy:dy + H, :].astype(jnp.bfloat16)
        acc2 = acc2 + jnp.dot(lhs, w2_ref[dy], preferred_element_type=jnp.float32)
    acc2 = acc2 + b2_ref[...]
    y2 = _gn_gelu(acc2, grp, g2_ref[...], bt2_ref[...])        # (H, W*Cout)

    # lane-dense store (512 lanes for W=16, Cout=32); wrapper reshapes back to NHWC
    o_ref[...] = y2[None, :, :].astype(o_ref.dtype)


def _banded_weights(w_hwio, W):
    """HWIO (3,3,Ci,Co) conv weights -> (3, W*Ci, W*Co) bf16 banded matrices.

    T[dy, x*Ci+ci, ox*Co+co] = w[dy, x-ox+1, ci, co] when 0 <= x-ox+1 <= 2, else 0.
    Zero x-padding of the conv falls out of the band structure automatically.
    """
    _, _, Ci, Co = w_hwio.shape
    x = jnp.arange(W)[:, None]          # input x
    ox = jnp.arange(W)[None, :]         # output x
    dx = x - ox + 1                     # (W, W)
    valid = (dx >= 0) & (dx <= 2)
    dx_c = jnp.clip(dx, 0, 2)
    t = jnp.where(valid[None, :, :, None, None], w_hwio[:, dx_c, :, :], 0.0)
    t = t.transpose(0, 1, 3, 2, 4).reshape(3, W * Ci, W * Co)   # (dy, x*Ci+ci, ox*Co+co)
    return t.astype(jnp.bfloat16)


def _tiled_row(v, W):
    """(C,) per-channel vector -> (1, W*C) lane-dense row (entry ox*C+co = v[co])."""
    return jnp.tile(v.reshape(1, -1), (1, W)).astype(jnp.float32)


def conv_block_pallas(x_nhwc, params):
    """Fused ConvBlock on NHWC input. Returns NHWC output."""
    N, H, W, Cin = x_nhwc.shape
    Cout = params["w1"].shape[-1]
    cg = Cout // GROUPS
    WCi, WCo = W * Cin, W * Cout

    x2d = x_nhwc.reshape(N, H, WCi)                 # lane-dense rows, free reshape

    # NOTE: in a real model these would be precomputed once at weight-load time.
    w1t = _banded_weights(params["w1"], W)          # (3, W*Cin,  W*Cout) bf16
    w2t = _banded_weights(params["w2"], W)          # (3, W*Cout, W*Cout) bf16
    b1 = _tiled_row(params["b1"], W)
    b2 = _tiled_row(params["b2"], W)
    g1 = _tiled_row(params["g1"], W)
    g2 = _tiled_row(params["g2"], W)
    bt1 = _tiled_row(params["beta1"], W)
    bt2 = _tiled_row(params["beta2"], W)

    # "Same group" matrix pre-scaled by 1/(H*W*cg): one (1,WC)@(WC,WC) dot turns
    # per-lane sums into the per-group mean broadcast back onto every lane.
    ch = jnp.arange(WCo) % Cout
    same = (ch[:, None] // cg) == (ch[None, :] // cg)
    grp = same.astype(jnp.float32) / float(H * W * cg)

    const2 = lambda n: (0, 0)        # constant blocks: fetched once, stay VMEM-resident
    const3 = lambda n: (0, 0, 0)

    out = pl.pallas_call(
        _conv_block_kernel,
        out_shape=jax.ShapeDtypeStruct((N, H, WCo), x_nhwc.dtype),
        grid=(N,),
        in_specs=[
            pl.BlockSpec((1, H, WCi), lambda n: (n, 0, 0)),
            pl.BlockSpec((3, WCi, WCo), const3),
            pl.BlockSpec((1, WCo), const2),
            pl.BlockSpec((1, WCo), const2),
            pl.BlockSpec((1, WCo), const2),
            pl.BlockSpec((3, WCo, WCo), const3),
            pl.BlockSpec((1, WCo), const2),
            pl.BlockSpec((1, WCo), const2),
            pl.BlockSpec((1, WCo), const2),
            pl.BlockSpec((WCo, WCo), const2),
        ],
        out_specs=pl.BlockSpec((1, H, WCo), lambda n: (n, 0, 0)),
        scratch_shapes=[
            pltpu.VMEM((H + 2, WCi), jnp.float32),   # y-padded input rows
            pltpu.VMEM((H + 2, WCo), jnp.float32),   # y-padded layer-1 activation rows
        ],
        compiler_params=pltpu.CompilerParams(
            dimension_semantics=("parallel",),       # lets v7x split the batch over 2 TCs
            vmem_limit_bytes=32 * 1024 * 1024,
        ),
    )(x2d, w1t, b1, g1, bt1, w2t, b2, g2, bt2, grp)

    return out.reshape(N, H, W, Cout)


def init_conv_block_params(key, in_ch, out_ch):
    """Deterministic synthetic params (Conv HWIO weights; non-trivial GN affine)."""
    k1, k2, k3, k4, k5, k6, k7, k8 = jax.random.split(key, 8)
    bound1 = 1.0 / jnp.sqrt(in_ch * 9)
    bound2 = 1.0 / jnp.sqrt(out_ch * 9)
    return {
        "w1": jax.random.uniform(k1, (3, 3, in_ch, out_ch), jnp.float32, -bound1, bound1),
        "b1": jax.random.uniform(k2, (out_ch,), jnp.float32, -bound1, bound1),
        "g1": 1.0 + 0.1 * jax.random.normal(k5, (out_ch,), jnp.float32),
        "beta1": 0.1 * jax.random.normal(k6, (out_ch,), jnp.float32),
        "w2": jax.random.uniform(k3, (3, 3, out_ch, out_ch), jnp.float32, -bound2, bound2),
        "b2": jax.random.uniform(k4, (out_ch,), jnp.float32, -bound2, bound2),
        "g2": 1.0 + 0.1 * jax.random.normal(k7, (out_ch,), jnp.float32),
        "beta2": 0.1 * jax.random.normal(k8, (out_ch,), jnp.float32),
    }


@jax.jit
def conv_block_forward(x_nchw, params):
    """ConvBlock forward.  Input/output are NCHW to match the PyTorch module."""
    x = jnp.transpose(x_nchw, (0, 2, 3, 1))                 # NCHW -> NHWC
    y = conv_block_pallas(x, params)
    return jnp.transpose(y, (0, 3, 1, 2))                   # NHWC -> NCHW


# ---------------------------- pure-JAX reference (f32) ----------------------------
def _ref_layer(x_nhwc, w, b, gamma, beta):
    y = lax.conv_general_dilated(
        x_nhwc, w, window_strides=(1, 1), padding="SAME",
        dimension_numbers=("NHWC", "HWIO", "NHWC"), precision=REF_PREC)
    y = y + b
    N, H, W, C = y.shape
    yg = y.reshape(N, H, W, GROUPS, C // GROUPS)
    mean = yg.mean(axis=(1, 2, 4), keepdims=True)
    var = yg.var(axis=(1, 2, 4), keepdims=True)
    yg = (yg - mean) * lax.rsqrt(var + EPS)
    y = yg.reshape(N, H, W, C) * gamma + beta
    return _exact_gelu(y)


def conv_block_reference(x_nchw, params):
    x = jnp.transpose(x_nchw, (0, 2, 3, 1))
    x = _ref_layer(x, params["w1"], params["b1"], params["g1"], params["beta1"])
    x = _ref_layer(x, params["w2"], params["b2"], params["g2"], params["beta2"])
    return jnp.transpose(x, (0, 3, 1, 2))


if __name__ == "__main__":
    key = jax.random.PRNGKey(0)
    kx, kp = jax.random.split(key)

    N, IN_CH, OUT_CH, HW = 2, 4, 32, 16
    x = jax.random.normal(kx, (N, IN_CH, HW, HW), jnp.float32)   # NCHW, like PyTorch
    params = init_conv_block_params(kp, IN_CH, OUT_CH)

    out = jax.block_until_ready(conv_block_forward(x, params))
    assert out.shape == (N, OUT_CH, HW, HW), out.shape

    ref = jax.block_until_ready(conv_block_reference(x, params))
    err_max = float(jnp.abs(out - ref).max())
    err_mean = float(jnp.abs(out - ref).mean())
    # kernel conv runs native bf16 MXU (f32 accumulation); compare loosely vs f32 ref
    assert err_max < 5e-2 and err_mean < 1e-2, (err_max, err_mean)

    print("KERNEL_OK")
</pallas_src>

<mosaic_0001>
module attributes {stable_mosaic.version = 11 : i64} {
  func.func @_conv_block_kernel(%arg0: i32, %arg1: memref<1x16x64xf32, #tpu.memory_space<vmem>>, %arg2: memref<3x64x512xbf16, #tpu.memory_space<vmem>>, %arg3: memref<1x512xf32, #tpu.memory_space<vmem>>, %arg4: memref<1x512xf32, #tpu.memory_space<vmem>>, %arg5: memref<1x512xf32, #tpu.memory_space<vmem>>, %arg6: memref<3x512x512xbf16, #tpu.memory_space<vmem>>, %arg7: memref<1x512xf32, #tpu.memory_space<vmem>>, %arg8: memref<1x512xf32, #tpu.memory_space<vmem>>, %arg9: memref<1x512xf32, #tpu.memory_space<vmem>>, %arg10: memref<512x512xf32, #tpu.memory_space<vmem>>, %arg11: memref<1x16x512xf32, #tpu.memory_space<vmem>>, %arg12: memref<18x64xf32, #tpu.memory_space<vmem>>, %arg13: memref<18x512xf32, #tpu.memory_space<vmem>>) attributes {dimension_semantics = [#tpu.dimension_semantics<parallel>], iteration_bounds = array<i64: 2>, scalar_prefetch = 0 : i64, scratch_operands = 2 : i64, tpu.core_type = #tpu.core_type<tc>, window_params = [{transform_indices = @transform_0, window_bounds = array<i64: 1, 16, 64>}, {pipeline_mode = #tpu.pipeline_mode<synchronous>, transform_indices = @transform_1, window_bounds = array<i64: 3, 64, 512>}, {pipeline_mode = #tpu.pipeline_mode<synchronous>, transform_indices = @transform_2, window_bounds = array<i64: 1, 512>}, {pipeline_mode = #tpu.pipeline_mode<synchronous>, transform_indices = @transform_3, window_bounds = array<i64: 1, 512>}, {pipeline_mode = #tpu.pipeline_mode<synchronous>, transform_indices = @transform_4, window_bounds = array<i64: 1, 512>}, {pipeline_mode = #tpu.pipeline_mode<synchronous>, transform_indices = @transform_5, window_bounds = array<i64: 3, 512, 512>}, {pipeline_mode = #tpu.pipeline_mode<synchronous>, transform_indices = @transform_6, window_bounds = array<i64: 1, 512>}, {pipeline_mode = #tpu.pipeline_mode<synchronous>, transform_indices = @transform_7, window_bounds = array<i64: 1, 512>}, {pipeline_mode = #tpu.pipeline_mode<synchronous>, transform_indices = @transform_8, window_bounds = array<i64: 1, 512>}, {pipeline_mode = #tpu.pipeline_mode<synchronous>, transform_indices = @transform_9, window_bounds = array<i64: 512, 512>}, {transform_indices = @transform_10, window_bounds = array<i64: 1, 16, 512>}]} {
    %c0 = arith.constant 0 : index
    %c0_0 = arith.constant 0 : index
    %0 = vector.load %arg10[%c0, %c0_0] : memref<512x512xf32, #tpu.memory_space<vmem>>, vector<512x512xf32>
    %cst = arith.constant 0.000000e+00 : f32
    %1 = vector.broadcast %cst : f32 to vector<1x64xf32>
    %c0_1 = arith.constant 0 : index
    %c0_2 = arith.constant 0 : index
    %2 = vector.load %arg12[%c0_1, %c0_2] : memref<18x64xf32, #tpu.memory_space<vmem>>, vector<1x64xf32>
    tpu.vector_store %arg12[%c0_1, %c0_2], %1 {strides = array<i32>} : memref<18x64xf32, #tpu.memory_space<vmem>>, vector<1x64xf32>,
    %cst_3 = arith.constant 0.000000e+00 : f32
    %3 = vector.broadcast %cst_3 : f32 to vector<1x64xf32>
    %c17 = arith.constant 17 : index
    %c0_4 = arith.constant 0 : index
    %4 = vector.load %arg12[%c17, %c0_4] : memref<18x64xf32, #tpu.memory_space<vmem>>, vector<1x64xf32>
    tpu.vector_store %arg12[%c17, %c0_4], %3 {strides = array<i32>} : memref<18x64xf32, #tpu.memory_space<vmem>>, vector<1x64xf32>,
    %c0_5 = arith.constant 0 : index
    %c0_6 = arith.constant 0 : index
    %c0_7 = arith.constant 0 : index
    %5 = vector.load %arg1[%c0_5, %c0_6, %c0_7] : memref<1x16x64xf32, #tpu.memory_space<vmem>>, vector<1x16x64xf32>
    %6 = vector.shape_cast %5 : vector<1x16x64xf32> to vector<16x64xf32>
    %c1 = arith.constant 1 : index
    %c0_8 = arith.constant 0 : index
    %7 = vector.load %arg12[%c1, %c0_8] : memref<18x64xf32, #tpu.memory_space<vmem>>, vector<16x64xf32>
    tpu.vector_store %arg12[%c1, %c0_8], %6 {strides = array<i32>} : memref<18x64xf32, #tpu.memory_space<vmem>>, vector<16x64xf32>,
    %cst_9 = arith.constant 0.000000e+00 : f32
    %8 = vector.broadcast %cst_9 : f32 to vector<16x512xf32>
    %c0_10 = arith.constant 0 : index
    %c0_11 = arith.constant 0 : index
    %9 = vector.load %arg12[%c0_10, %c0_11] : memref<18x64xf32, #tpu.memory_space<vmem>>, vector<16x64xf32>
    %10 = arith.truncf %9 : vector<16x64xf32> to vector<16x64xbf16>
    %c0_12 = arith.constant 0 : index
    %c0_13 = arith.constant 0 : index
    %c0_14 = arith.constant 0 : index
    %11 = vector.load %arg2[%c0_12, %c0_13, %c0_14] : memref<3x64x512xbf16, #tpu.memory_space<vmem>>, vector<1x64x512xbf16>
    %12 = vector.shape_cast %11 : vector<1x64x512xbf16> to vector<64x512xbf16>
    %cst_15 = arith.constant dense<0.000000e+00> : vector<16x512xf32>
    %13 = tpu.matmul %10, %12, %cst_15 {dimension_numbers = #tpu.dot_dimension_numbers<[1], [0], [0], [1], [0, 0, 1, 1], [], []>} : vector<16x64xbf16>, vector<64x512xbf16>, vector<16x512xf32> -> vector<16x512xf32>
    %14 = arith.addf %8, %13 : vector<16x512xf32>
    %c1_16 = arith.constant 1 : index
    %c0_17 = arith.constant 0 : index
    %15 = vector.load %arg12[%c1_16, %c0_17] : memref<18x64xf32, #tpu.memory_space<vmem>>, vector<16x64xf32>
    %16 = arith.truncf %15 : vector<16x64xf32> to vector<16x64xbf16>
    %c1_18 = arith.constant 1 : index
    %c0_19 = arith.constant 0 : index
    %c0_20 = arith.constant 0 : index
    %17 = vector.load %arg2[%c1_18, %c0_19, %c0_20] : memref<3x64x512xbf16, #tpu.memory_space<vmem>>, vector<1x64x512xbf16>
    %18 = vector.shape_cast %17 : vector<1x64x512xbf16> to vector<64x512xbf16>
    %cst_21 = arith.constant dense<0.000000e+00> : vector<16x512xf32>
    %19 = tpu.matmul %16, %18, %cst_21 {dimension_numbers = #tpu.dot_dimension_numbers<[1], [0], [0], [1], [0, 0, 1, 1], [], []>} : vector<16x64xbf16>, vector<64x512xbf16>, vector<16x512xf32> -> vector<16x512xf32>
    %20 = arith.addf %14, %19 : vector<16x512xf32>
    %c2 = arith.constant 2 : index
    %c0_22 = arith.constant 0 : index
    %21 = vector.load %arg12[%c2, %c0_22] : memref<18x64xf32, #tpu.memory_space<vmem>>, vector<16x64xf32>
    %22 = arith.truncf %21 : vector<16x64xf32> to vector<16x64xbf16>
    %c2_23 = arith.constant 2 : index
    %c0_24 = arith.constant 0 : index
    %c0_25 = arith.constant 0 : index
    %23 = vector.load %arg2[%c2_23, %c0_24, %c0_25] : memref<3x64x512xbf16, #tpu.memory_space<vmem>>, vector<1x64x512xbf16>
    %24 = vector.shape_cast %23 : vector<1x64x512xbf16> to vector<64x512xbf16>
    %cst_26 = arith.constant dense<0.000000e+00> : vector<16x512xf32>
    %25 = tpu.matmul %22, %24, %cst_26 {dimension_numbers = #tpu.dot_dimension_numbers<[1], [0], [0], [1], [0, 0, 1, 1], [], []>} : vector<16x64xbf16>, vector<64x512xbf16>, vector<16x512xf32> -> vector<16x512xf32>
    %26 = arith.addf %20, %25 : vector<16x512xf32>
    %c0_27 = arith.constant 0 : index
    %c0_28 = arith.constant 0 : index
    %27 = vector.load %arg3[%c0_27, %c0_28] : memref<1x512xf32, #tpu.memory_space<vmem>>, vector<1x512xf32>
    %28 = vector.broadcast %27 : vector<1x512xf32> to vector<16x512xf32>
    %29 = arith.addf %26, %28 : vector<16x512xf32>
    %c0_29 = arith.constant 0 : index
    %c0_30 = arith.constant 0 : index
    %30 = vector.load %arg4[%c0_29, %c0_30] : memref<1x512xf32, #tpu.memory_space<vmem>>, vector<1x512xf32>
    %c0_31 = arith.constant 0 : index
    %c0_32 = arith.constant 0 : index
    %31 = vector.load %arg5[%c0_31, %c0_32] : memref<1x512xf32, #tpu.memory_space<vmem>>, vector<1x512xf32>
    %cst_33 = arith.constant dense<0.000000e+00> : vector<512xf32>
    %32 = vector.multi_reduction <add>, %29, %cst_33 [0] : vector<16x512xf32> to vector<512xf32>
    %33 = vector.shape_cast %32 : vector<512xf32> to vector<1x512xf32>
    %cst_34 = arith.constant dense<0.000000e+00> : vector<1x512xf32>
    %34 = tpu.matmul %33, %0, %cst_34 {dimension_numbers = #tpu.dot_dimension_numbers<[1], [0], [0], [1], [0, 0, 1, 1], [], []>} : vector<1x512xf32>, vector<512x512xf32>, vector<1x512xf32> -> vector<1x512xf32>
    %35 = vector.broadcast %34 : vector<1x512xf32> to vector<16x512xf32>
    %36 = arith.subf %29, %35 : vector<16x512xf32>
    %37 = arith.mulf %36, %36 : vector<16x512xf32>
    %cst_35 = arith.constant dense<0.000000e+00> : vector<512xf32>
    %38 = vector.multi_reduction <add>, %37, %cst_35 [0] : vector<16x512xf32> to vector<512xf32>
    %39 = vector.shape_cast %38 : vector<512xf32> to vector<1x512xf32>
    %cst_36 = arith.constant dense<0.000000e+00> : vector<1x512xf32>
    %40 = tpu.matmul %39, %0, %cst_36 {dimension_numbers = #tpu.dot_dimension_numbers<[1], [0], [0], [1], [0, 0, 1, 1], [], []>} : vector<1x512xf32>, vector<512x512xf32>, vector<1x512xf32> -> vector<1x512xf32>
    %cst_37 = arith.constant 9.99999974E-6 : f32
    %41 = vector.broadcast %cst_37 : f32 to vector<1x512xf32>
    %42 = arith.addf %40, %41 : vector<1x512xf32>
    %43 = math.rsqrt %42 : vector<1x512xf32>
    %44 = arith.mulf %43, %30 : vector<1x512xf32>
    %45 = vector.broadcast %44 : vector<1x512xf32> to vector<16x512xf32>
    %46 = arith.mulf %36, %45 : vector<16x512xf32>
    %47 = vector.broadcast %31 : vector<1x512xf32> to vector<16x512xf32>
    %48 = arith.addf %46, %47 : vector<16x512xf32>
    %cst_38 = arith.constant 5.000000e-01 : f32
    %49 = vector.broadcast %cst_38 : f32 to vector<16x512xf32>
    %50 = arith.mulf %49, %48 : vector<16x512xf32>
    %cst_39 = arith.constant 0.707106769 : f32
    %51 = vector.broadcast %cst_39 : f32 to vector<16x512xf32>
    %52 = arith.mulf %48, %51 : vector<16x512xf32>
    %53 = math.erf %52 : vector<16x512xf32>
    %cst_40 = arith.constant 1.000000e+00 : f32
    %54 = vector.broadcast %cst_40 : f32 to vector<16x512xf32>
    %55 = arith.addf %54, %53 : vector<16x512xf32>
    %56 = arith.mulf %50, %55 : vector<16x512xf32>
    %cst_41 = arith.constant 0.000000e+00 : f32
    %57 = vector.broadcast %cst_41 : f32 to vector<1x512xf32>
    %c0_42 = arith.constant 0 : index
    %c0_43 = arith.constant 0 : index
    %58 = vector.load %arg13[%c0_42, %c0_43] : memref<18x512xf32, #tpu.memory_space<vmem>>, vector<1x512xf32>
    tpu.vector_store %arg13[%c0_42, %c0_43], %57 {strides = array<i32>} : memref<18x512xf32, #tpu.memory_space<vmem>>, vector<1x512xf32>,
    %cst_44 = arith.constant 0.000000e+00 : f32
    %59 = vector.broadcast %cst_44 : f32 to vector<1x512xf32>
    %c17_45 = arith.constant 17 : index
    %c0_46 = arith.constant 0 : index
    %60 = vector.load %arg13[%c17_45, %c0_46] : memref<18x512xf32, #tpu.memory_space<vmem>>, vector<1x512xf32>
    tpu.vector_store %arg13[%c17_45, %c0_46], %59 {strides = array<i32>} : memref<18x512xf32, #tpu.memory_space<vmem>>, vector<1x512xf32>,
    %c1_47 = arith.constant 1 : index
    %c0_48 = arith.constant 0 : index
    %61 = vector.load %arg13[%c1_47, %c0_48] : memref<18x512xf32, #tpu.memory_space<vmem>>, vector<16x512xf32>
    tpu.vector_store %arg13[%c1_47, %c0_48], %56 {strides = array<i32>} : memref<18x512xf32, #tpu.memory_space<vmem>>, vector<16x512xf32>,
    %cst_49 = arith.constant 0.000000e+00 : f32
    %62 = vector.broadcast %cst_49 : f32 to vector<16x512xf32>
    %c0_50 = arith.constant 0 : index
    %c0_51 = arith.constant 0 : index
    %63 = vector.load %arg13[%c0_50, %c0_51] : memref<18x512xf32, #tpu.memory_space<vmem>>, vector<16x512xf32>
    %64 = arith.truncf %63 : vector<16x512xf32> to vector<16x512xbf16>
    %c0_52 = arith.constant 0 : index
    %c0_53 = arith.constant 0 : index
    %c0_54 = arith.constant 0 : index
    %65 = vector.load %arg6[%c0_52, %c0_53, %c0_54] : memref<3x512x512xbf16, #tpu.memory_space<vmem>>, vector<1x512x512xbf16>
    %66 = vector.shape_cast %65 : vector<1x512x512xbf16> to vector<512x512xbf16>
    %cst_55 = arith.constant dense<0.000000e+00> : vector<16x512xf32>
    %67 = tpu.matmul %64, %66, %cst_55 {dimension_numbers = #tpu.dot_dimension_numbers<[1], [0], [0], [1], [0, 0, 1, 1], [], []>} : vector<16x512xbf16>, vector<512x512xbf16>, vector<16x512xf32> -> vector<16x512xf32>
    %68 = arith.addf %62, %67 : vector<16x512xf32>
    %c1_56 = arith.constant 1 : index
    %c0_57 = arith.constant 0 : index
    %69 = vector.load %arg13[%c1_56, %c0_57] : memref<18x512xf32, #tpu.memory_space<vmem>>, vector<16x512xf32>
    %70 = arith.truncf %69 : vector<16x512xf32> to vector<16x512xbf16>
    %c1_58 = arith.constant 1 : index
    %c0_59 = arith.constant 0 : index
    %c0_60 = arith.constant 0 : index
    %71 = vector.load %arg6[%c1_58, %c0_59, %c0_60] : memref<3x512x512xbf16, #tpu.memory_space<vmem>>, vector<1x512x512xbf16>
    %72 = vector.shape_cast %71 : vector<1x512x512xbf16> to vector<512x512xbf16>
    %cst_61 = arith.constant dense<0.000000e+00> : vector<16x512xf32>
    %73 = tpu.matmul %70, %72, %cst_61 {dimension_numbers = #tpu.dot_dimension_numbers<[1], [0], [0], [1], [0, 0, 1, 1], [], []>} : vector<16x512xbf16>, vector<512x512xbf16>, vector<16x512xf32> -> vector<16x512xf32>
    %74 = arith.addf %68, %73 : vector<16x512xf32>
    %c2_62 = arith.constant 2 : index
    %c0_63 = arith.constant 0 : index
    %75 = vector.load %arg13[%c2_62, %c0_63] : memref<18x512xf32, #tpu.memory_space<vmem>>, vector<16x512xf32>
    %76 = arith.truncf %75 : vector<16x512xf32> to vector<16x512xbf16>
    %c2_64 = arith.constant 2 : index
    %c0_65 = arith.constant 0 : index
    %c0_66 = arith.constant 0 : index
    %77 = vector.load %arg6[%c2_64, %c0_65, %c0_66] : memref<3x512x512xbf16, #tpu.memory_space<vmem>>, vector<1x512x512xbf16>
    %78 = vector.shape_cast %77 : vector<1x512x512xbf16> to vector<512x512xbf16>
    %cst_67 = arith.constant dense<0.000000e+00> : vector<16x512xf32>
    %79 = tpu.matmul %76, %78, %cst_67 {dimension_numbers = #tpu.dot_dimension_numbers<[1], [0], [0], [1], [0, 0, 1, 1], [], []>} : vector<16x512xbf16>, vector<512x512xbf16>, vector<16x512xf32> -> vector<16x512xf32>
    %80 = arith.addf %74, %79 : vector<16x512xf32>
    %c0_68 = arith.constant 0 : index
    %c0_69 = arith.constant 0 : index
    %81 = vector.load %arg7[%c0_68, %c0_69] : memref<1x512xf32, #tpu.memory_space<vmem>>, vector<1x512xf32>
    %82 = vector.broadcast %81 : vector<1x512xf32> to vector<16x512xf32>
    %83 = arith.addf %80, %82 : vector<16x512xf32>
    %c0_70 = arith.constant 0 : index
    %c0_71 = arith.constant 0 : index
    %84 = vector.load %arg8[%c0_70, %c0_71] : memref<1x512xf32, #tpu.memory_space<vmem>>, vector<1x512xf32>
    %c0_72 = arith.constant 0 : index
    %c0_73 = arith.constant 0 : index
    %85 = vector.load %arg9[%c0_72, %c0_73] : memref<1x512xf32, #tpu.memory_space<vmem>>, vector<1x512xf32>
    %cst_74 = arith.constant dense<0.000000e+00> : vector<512xf32>
    %86 = vector.multi_reduction <add>, %83, %cst_74 [0] : vector<16x512xf32> to vector<512xf32>
    %87 = vector.shape_cast %86 : vector<512xf32> to vector<1x512xf32>
    %cst_75 = arith.constant dense<0.000000e+00> : vector<1x512xf32>
    %88 = tpu.matmul %87, %0, %cst_75 {dimension_numbers = #tpu.dot_dimension_numbers<[1], [0], [0], [1], [0, 0, 1, 1], [], []>} : vector<1x512xf32>, vector<512x512xf32>, vector<1x512xf32> -> vector<1x512xf32>
    %89 = vector.broadcast %88 : vector<1x512xf32> to vector<16x512xf32>
    %90 = arith.subf %83, %89 : vector<16x512xf32>
    %91 = arith.mulf %90, %90 : vector<16x512xf32>
    %cst_76 = arith.constant dense<0.000000e+00> : vector<512xf32>
    %92 = vector.multi_reduction <add>, %91, %cst_76 [0] : vector<16x512xf32> to vector<512xf32>
    %93 = vector.shape_cast %92 : vector<512xf32> to vector<1x512xf32>
    %cst_77 = arith.constant dense<0.000000e+00> : vector<1x512xf32>
    %94 = tpu.matmul %93, %0, %cst_77 {dimension_numbers = #tpu.dot_dimension_numbers<[1], [0], [0], [1], [0, 0, 1, 1], [], []>} : vector<1x512xf32>, vector<512x512xf32>, vector<1x512xf32> -> vector<1x512xf32>
    %cst_78 = arith.constant 9.99999974E-6 : f32
    %95 = vector.broadcast %cst_78 : f32 to vector<1x512xf32>
    %96 = arith.addf %94, %95 : vector<1x512xf32>
    %97 = math.rsqrt %96 : vector<1x512xf32>
    %98 = arith.mulf %97, %84 : vector<1x512xf32>
    %99 = vector.broadcast %98 : vector<1x512xf32> to vector<16x512xf32>
    %100 = arith.mulf %90, %99 : vector<16x512xf32>
    %101 = vector.broadcast %85 : vector<1x512xf32> to vector<16x512xf32>
    %102 = arith.addf %100, %101 : vector<16x512xf32>
    %cst_79 = arith.constant 5.000000e-01 : f32
    %103 = vector.broadcast %cst_79 : f32 to vector<16x512xf32>
    %104 = arith.mulf %103, %102 : vector<16x512xf32>
    %cst_80 = arith.constant 0.707106769 : f32
    %105 = vector.broadcast %cst_80 : f32 to vector<16x512xf32>
    %106 = arith.mulf %102, %105 : vector<16x512xf32>
    %107 = math.erf %106 : vector<16x512xf32>
    %cst_81 = arith.constant 1.000000e+00 : f32
    %108 = vector.broadcast %cst_81 : f32 to vector<16x512xf32>
    %109 = arith.addf %108, %107 : vector<16x512xf32>
    %110 = arith.mulf %104, %109 : vector<16x512xf32>
    %111 = vector.shape_cast %110 : vector<16x512xf32> to vector<1x16x512xf32>
    %c0_82 = arith.constant 0 : index
    %c0_83 = arith.constant 0 : index
    %c0_84 = arith.constant 0 : index
    %112 = vector.load %arg11[%c0_82, %c0_83, %c0_84] : memref<1x16x512xf32, #tpu.memory_space<vmem>>, vector<1x16x512xf32>
    tpu.vector_store %arg11[%c0_82, %c0_83, %c0_84], %111 {strides = array<i32>} : memref<1x16x512xf32, #tpu.memory_space<vmem>>, vector<1x16x512xf32>,
    return
  }
  func.func @transform_0(%arg0: i32) -> (i32, i32, i32) {
    %c0_i32 = arith.constant 0 : i32
    %c0_i32_0 = arith.constant 0 : i32
    %c0_i32_1 = arith.constant 0 : i32
    return %arg0, %c0_i32, %c0_i32_0 : i32, i32, i32
  }
  func.func @transform_1(%arg0: i32) -> (i32, i32, i32) {
    %c0_i32 = arith.constant 0 : i32
    %c0_i32_0 = arith.constant 0 : i32
    %c0_i32_1 = arith.constant 0 : i32
    %c0_i32_2 = arith.constant 0 : i32
    return %c0_i32, %c0_i32_0, %c0_i32_1 : i32, i32, i32
  }
  func.func @transform_2(%arg0: i32) -> (i32, i32) {
    %c0_i32 = arith.constant 0 : i32
    %c0_i32_0 = arith.constant 0 : i32
    %c0_i32_1 = arith.constant 0 : i32
    return %c0_i32, %c0_i32_0 : i32, i32
  }
  func.func @transform_3(%arg0: i32) -> (i32, i32) {
    %c0_i32 = arith.constant 0 : i32
    %c0_i32_0 = arith.constant 0 : i32
    %c0_i32_1 = arith.constant 0 : i32
    return %c0_i32, %c0_i32_0 : i32, i32
  }
  func.func @transform_4(%arg0: i32) -> (i32, i32) {
    %c0_i32 = arith.constant 0 : i32
    %c0_i32_0 = arith.constant 0 : i32
    %c0_i32_1 = arith.constant 0 : i32
    return %c0_i32, %c0_i32_0 : i32, i32
  }
  func.func @transform_5(%arg0: i32) -> (i32, i32, i32) {
    %c0_i32 = arith.constant 0 : i32
    %c0_i32_0 = arith.constant 0 : i32
    %c0_i32_1 = arith.constant 0 : i32
    %c0_i32_2 = arith.constant 0 : i32
    return %c0_i32, %c0_i32_0, %c0_i32_1 : i32, i32, i32
  }
  func.func @transform_6(%arg0: i32) -> (i32, i32) {
    %c0_i32 = arith.constant 0 : i32
    %c0_i32_0 = arith.constant 0 : i32
    %c0_i32_1 = arith.constant 0 : i32
    return %c0_i32, %c0_i32_0 : i32, i32
  }
  func.func @transform_7(%arg0: i32) -> (i32, i32) {
    %c0_i32 = arith.constant 0 : i32
    %c0_i32_0 = arith.constant 0 : i32
    %c0_i32_1 = arith.constant 0 : i32
    return %c0_i32, %c0_i32_0 : i32, i32
  }
  func.func @transform_8(%arg0: i32) -> (i32, i32) {
    %c0_i32 = arith.constant 0 : i32
    %c0_i32_0 = arith.constant 0 : i32
    %c0_i32_1 = arith.constant 0 : i32
    return %c0_i32, %c0_i32_0 : i32, i32
  }
  func.func @transform_9(%arg0: i32) -> (i32, i32) {
    %c0_i32 = arith.constant 0 : i32
    %c0_i32_0 = arith.constant 0 : i32
    %c0_i32_1 = arith.constant 0 : i32
    return %c0_i32, %c0_i32_0 : i32, i32
  }
  func.func @transform_10(%arg0: i32) -> (i32, i32, i32) {
    %c0_i32 = arith.constant 0 : i32
    %c0_i32_0 = arith.constant 0 : i32
    %c0_i32_1 = arith.constant 0 : i32
    return %arg0, %c0_i32, %c0_i32_0 : i32, i32, i32
  }
}

</mosaic_0001>

<llo_original>
// kernel: conv_block_forward.1
$region0: #{conv_block_forward.1}
  #allocation0 [shape = 'u32[]', space=smem, size = 0x4, offset = 0x4, fixed_abs, tag = 'smem constant byte address 0x4 - core index']
  #allocation1 [shape = 'u32[144,128]{1,0:T(1,128)}', space=vmem, size = 0x12000, scoped, tag = 'internal scratch']
  #allocation2 [shape = 'f32[18,64]{1,0:T(8,128)}', space=vmem, size = 0x3000, scoped, tag = 'scratch operand']
  #allocation3 [shape = 'f32[18,512]{1,0:T(8,128)}', space=vmem, size = 0xc000, scoped, tag = 'scratch operand']
  %s0 = inlined_call_operand.vmem [shape: f32[2,16,64], index: 0, kind: input, shape index: {}]
  %s1 = inlined_call_operand.vmem [shape: bf16[3,64,512], index: 1, kind: input, shape index: {}]
  %s2 = inlined_call_operand.vmem [shape: f32[1,512], index: 2, kind: input, shape index: {}]
  %s3 = inlined_call_operand.vmem [shape: f32[1,512], index: 3, kind: input, shape index: {}]
  %s4 = inlined_call_operand.vmem [shape: f32[1,512], index: 4, kind: input, shape index: {}]
  %s5 = inlined_call_operand.vmem [shape: bf16[3,512,512], index: 5, kind: input, shape index: {}]
  %s6 = inlined_call_operand.vmem [shape: f32[1,512], index: 6, kind: input, shape index: {}]
  %s7 = inlined_call_operand.vmem [shape: f32[1,512], index: 7, kind: input, shape index: {}]
  %s8 = inlined_call_operand.vmem [shape: f32[1,512], index: 8, kind: input, shape index: {}]
  %s9 = inlined_call_operand.vmem [shape: f32[512,512], index: 9, kind: input, shape index: {}]
  %s10 = inlined_call_operand.vmem [shape: f32[2,16,512], index: 10, kind: output, shape index: {}]
  %s11 = sld [smem:[#allocation0]]
  $region73: #{conv_block_forward.1} parent=0
    _
  %s13 = ssub.s32 1, %s11
  %s14 = scalar_select 0, %s13, %s11
  loop: start=0, step=1, limit=4
  $region2: #{conv_block_forward.1} parent=0 // loop_pre_header
    _
  $region3: #{conv_block_forward.1} parent=0 // loop_header
    %s16 = sphi 0, %s20
    %p17 = scmp.ge.s32.totalorder %s16, 4
    %s26 = sphi 0, %s28
    %s29 = sphi 0, %s26
    %s30 = sphi 0, %s29
    %s46 = sphi 0, %s30
    %s50 = sphi 0, %s50
    %s52 = sphi 0, %s50
    %s53 = sphi 0, %s52
    %s67 = sphi 0, %s53
    %s71 = sphi 0, %s71
    %s73 = sphi 0, %s71
    %s74 = sphi 0, %s73
    %s88 = sphi 0, %s74
    %s92 = sphi 0, %s92
    %s94 = sphi 0, %s92
    %s95 = sphi 0, %s94
    %s109 = sphi 0, %s95
    %s113 = sphi 0, %s113
    %s115 = sphi 0, %s113
    %s116 = sphi 0, %s115
    %s130 = sphi 0, %s116
    %s134 = sphi 0, %s134
    %s136 = sphi 0, %s134
    %s137 = sphi 0, %s136
    %s151 = sphi 0, %s137
    %s155 = sphi 0, %s155
    %s157 = sphi 0, %s155
    %s158 = sphi 0, %s157
    %s172 = sphi 0, %s158
    %s176 = sphi 0, %s176
    %s178 = sphi 0, %s176
    %s179 = sphi 0, %s178
    %s193 = sphi 0, %s179
    %s197 = sphi 0, %s197
    %s199 = sphi 0, %s197
    %s200 = sphi 0, %s199
    %s214 = sphi 0, %s200
    %s218 = sphi 0, %s218
    %s220 = sphi 0, %s218
    %s221 = sphi 0, %s220
    %s235 = sphi 0, %s221
    %s241 = sphi 0, %s243
    %s244 = sphi 0, %s241
    %s245 = sphi 0, %s244
    %s261 = sphi 0, %s245
  $region4: #{conv_block_forward.1} parent=0 // loop_header_branch
    %19 = sbr.rel (%p17) target = $region8
  $region5: #{conv_block_forward.1} parent=0 // loop_body
    %s21 = ssub.s32 %s16, 1
    %s22 = ssub.s32 %s16, 2
    %s23 = sadd.s32 %s16, 1
    %s24 = ssub.s32 %s16, %s23
    %p25 = scmp.eq.s32.totalorder %s24, 0
    %s27 = sadd.s32 %s26, 1
    %s28 = scalar_select %p25, %s26, %s27
    %p31 = pneg %p25
    %p32 = scmp.eq.s32.totalorder %s16, 1
    %p33 = por %p31, %p32
    %p34 = scmp.ne.s32.totalorder %s26, %s29
    %p35 = scmp.eq.s32.totalorder %s16, 0
    %p36 = por %p34, %p35
    %p37 = scmp.ne.s32.totalorder %s26, %s29
    %p38 = scmp.eq.s32.totalorder %s21, 1
    %p39 = por %p37, %p38
    %p40 = scmp.ne.s32.totalorder %s29, %s30
    %p41 = scmp.eq.s32.totalorder %s21, 0
    %p42 = por %p40, %p41
    %p43 = scmp.ne.s32.totalorder %s29, %s30
    %p44 = scmp.eq.s32.totalorder %s22, 1
    %p45 = por %p43, %p44
    %p47 = scmp.ne.s32.totalorder %s30, %s46
    %p48 = scmp.eq.s32.totalorder %s22, 0
    %p49 = por %p47, %p48
    %s51 = sadd.s32 %s50, 1
    %p54 = scmp.eq.s32.totalorder %s16, 1
    %p55 = scmp.ne.s32.totalorder %s50, %s52
    %p56 = scmp.eq.s32.totalorder %s16, 0
    %p57 = por %p55, %p56
    %p58 = scmp.ne.s32.totalorder %s50, %s52
    %p59 = scmp.eq.s32.totalorder %s21, 1
    %p60 = por %p58, %p59
    %p61 = scmp.ne.s32.totalorder %s52, %s53
    %p62 = scmp.eq.s32.totalorder %s21, 0
    %p63 = por %p61, %p62
    %p64 = scmp.ne.s32.totalorder %s52, %s53
    %p65 = scmp.eq.s32.totalorder %s22, 1
    %p66 = por %p64, %p65
    %p68 = scmp.ne.s32.totalorder %s53, %s67
    %p69 = scmp.eq.s32.totalorder %s22, 0
    %p70 = por %p68, %p69
    %s72 = sadd.s32 %s71, 1
    %p75 = scmp.eq.s32.totalorder %s16, 1
    %p76 = scmp.ne.s32.totalorder %s71, %s73
    %p77 = scmp.eq.s32.totalorder %s16, 0
    %p78 = por %p76, %p77
    %p79 = scmp.ne.s32.totalorder %s71, %s73
    %p80 = scmp.eq.s32.totalorder %s21, 1
    %p81 = por %p79, %p80
    %p82 = scmp.ne.s32.totalorder %s73, %s74
    %p83 = scmp.eq.s32.totalorder %s21, 0
    %p84 = por %p82, %p83
    %p85 = scmp.ne.s32.totalorder %s73, %s74
    %p86 = scmp.eq.s32.totalorder %s22, 1
    %p87 = por %p85, %p86
    %p89 = scmp.ne.s32.totalorder %s74, %s88
    %p90 = scmp.eq.s32.totalorder %s22, 0
    %p91 = por %p89, %p90
    %s93 = sadd.s32 %s92, 1
    %p96 = scmp.eq.s32.totalorder %s16, 1
    %p97 = scmp.ne.s32.totalorder %s92, %s94
    %p98 = scmp.eq.s32.totalorder %s16, 0
    %p99 = por %p97, %p98
    %p100 = scmp.ne.s32.totalorder %s92, %s94
    %p101 = scmp.eq.s32.totalorder %s21, 1
    %p102 = por %p100, %p101
    %p103 = scmp.ne.s32.totalorder %s94, %s95
    %p104 = scmp.eq.s32.totalorder %s21, 0
    %p105 = por %p103, %p104
    %p106 = scmp.ne.s32.totalorder %s94, %s95
    %p107 = scmp.eq.s32.totalorder %s22, 1
    %p108 = por %p106, %p107
    %p110 = scmp.ne.s32.totalorder %s95, %s109
    %p111 = scmp.eq.s32.totalorder %s22, 0
    %p112 = por %p110, %p111
    %s114 = sadd.s32 %s113, 1
    %p117 = scmp.eq.s32.totalorder %s16, 1
    %p118 = scmp.ne.s32.totalorder %s113, %s115
    %p119 = scmp.eq.s32.totalorder %s16, 0
    %p120 = por %p118, %p119
    %p121 = scmp.ne.s32.totalorder %s113, %s115
    %p122 = scmp.eq.s32.totalorder %s21, 1
    %p123 = por %p121, %p122
    %p124 = scmp.ne.s32.totalorder %s115, %s116
    %p125 = scmp.eq.s32.totalorder %s21, 0
    %p126 = por %p124, %p125
    %p127 = scmp.ne.s32.totalorder %s115, %s116
    %p128 = scmp.eq.s32.totalorder %s22, 1
    %p129 = por %p127, %p128
    %p131 = scmp.ne.s32.totalorder %s116, %s130
    %p132 = scmp.eq.s32.totalorder %s22, 0
    %p133 = por %p131, %p132
    %s135 = sadd.s32 %s134, 1
    %p138 = scmp.eq.s32.totalorder %s16, 1
    %p139 = scmp.ne.s32.totalorder %s134, %s136
    %p140 = scmp.eq.s32.totalorder %s16, 0
    %p141 = por %p139, %p140
    %p142 = scmp.ne.s32.totalorder %s134, %s136
    %p143 = scmp.eq.s32.totalorder %s21, 1
    %p144 = por %p142, %p143
    %p145 = scmp.ne.s32.totalorder %s136, %s137
    %p146 = scmp.eq.s32.totalorder %s21, 0
    %p147 = por %p145, %p146
    %p148 = scmp.ne.s32.totalorder %s136, %s137
    %p149 = scmp.eq.s32.totalorder %s22, 1
    %p150 = por %p148, %p149
    %p152 = scmp.ne.s32.totalorder %s137, %s151
    %p153 = scmp.eq.s32.totalorder %s22, 0
    %p154 = por %p152, %p153
    %s156 = sadd.s32 %s155, 1
    %p159 = scmp.eq.s32.totalorder %s16, 1
    %p160 = scmp.ne.s32.totalorder %s155, %s157
    %p161 = scmp.eq.s32.totalorder %s16, 0
    %p162 = por %p160, %p161
    %p163 = scmp.ne.s32.totalorder %s155, %s157
    %p164 = scmp.eq.s32.totalorder %s21, 1
    %p165 = por %p163, %p164
    %p166 = scmp.ne.s32.totalorder %s157, %s158
    %p167 = scmp.eq.s32.totalorder %s21, 0
    %p168 = por %p166, %p167
    %p169 = scmp.ne.s32.totalorder %s157, %s158
    %p170 = scmp.eq.s32.totalorder %s22, 1
    %p171 = por %p169, %p170
    %p173 = scmp.ne.s32.totalorder %s158, %s172
    %p174 = scmp.eq.s32.totalorder %s22, 0
    %p175 = por %p173, %p174
    %s177 = sadd.s32 %s176, 1
    %p180 = scmp.eq.s32.totalorder %s16, 1
    %p181 = scmp.ne.s32.totalorder %s176, %s178
    %p182 = scmp.eq.s32.totalorder %s16, 0
    %p183 = por %p181, %p182
    %p184 = scmp.ne.s32.totalorder %s176, %s178
    %p185 = scmp.eq.s32.totalorder %s21, 1
    %p186 = por %p184, %p185
    %p187 = scmp.ne.s32.totalorder %s178, %s179
    %p188 = scmp.eq.s32.totalorder %s21, 0
    %p189 = por %p187, %p188
    %p190 = scmp.ne.s32.totalorder %s178, %s179
    %p191 = scmp.eq.s32.totalorder %s22, 1
    %p192 = por %p190, %p191
    %p194 = scmp.ne.s32.totalorder %s179, %s193
    %p195 = scmp.eq.s32.totalorder %s22, 0
    %p196 = por %p194, %p195
    %s198 = sadd.s32 %s197, 1
    %p201 = scmp.eq.s32.totalorder %s16, 1
    %p202 = scmp.ne.s32.totalorder %s197, %s199
    %p203 = scmp.eq.s32.totalorder %s16, 0
    %p204 = por %p202, %p203
    %p205 = scmp.ne.s32.totalorder %s197, %s199
    %p206 = scmp.eq.s32.totalorder %s21, 1
    %p207 = por %p205, %p206
    %p208 = scmp.ne.s32.totalorder %s199, %s200
    %p209 = scmp.eq.s32.totalorder %s21, 0
    %p210 = por %p208, %p209
    %p211 = scmp.ne.s32.totalorder %s199, %s200
    %p212 = scmp.eq.s32.totalorder %s22, 1
    %p213 = por %p211, %p212
    %p215 = scmp.ne.s32.totalorder %s200, %s214
    %p216 = scmp.eq.s32.totalorder %s22, 0
    %p217 = por %p215, %p216
    %s219 = sadd.s32 %s218, 1
    %p222 = scmp.eq.s32.totalorder %s16, 1
    %p223 = scmp.ne.s32.totalorder %s218, %s220
    %p224 = scmp.eq.s32.totalorder %s16, 0
    %p225 = por %p223, %p224
    %p226 = scmp.ne.s32.totalorder %s218, %s220
    %p227 = scmp.eq.s32.totalorder %s21, 1
    %p228 = por %p226, %p227
    %p229 = scmp.ne.s32.totalorder %s220, %s221
    %p230 = scmp.eq.s32.totalorder %s21, 0
    %p231 = por %p229, %p230
    %p232 = scmp.ne.s32.totalorder %s220, %s221
    %p233 = scmp.eq.s32.totalorder %s22, 1
    %p234 = por %p232, %p233
    %p236 = scmp.ne.s32.totalorder %s221, %s235
    %p237 = scmp.eq.s32.totalorder %s22, 0
    %p238 = por %p236, %p237
    %s239 = ssub.s32 %s16, %s23
    %p240 = scmp.eq.s32.totalorder %s239, 0
    %s242 = sadd.s32 %s241, 1
    %s243 = scalar_select %p240, %s241, %s242
    %p246 = pneg %p240
    %p247 = scmp.eq.s32.totalorder %s16, 1
    %p248 = por %p246, %p247
    %p249 = scmp.ne.s32.totalorder %s241, %s244
    %p250 = scmp.eq.s32.totalorder %s16, 0
    %p251 = por %p249, %p250
    %p252 = scmp.ne.s32.totalorder %s241, %s244
    %p253 = scmp.eq.s32.totalorder %s21, 1
    %p254 = por %p252, %p253
    %p255 = scmp.ne.s32.totalorder %s244, %s245
    %p256 = scmp.eq.s32.totalorder %s21, 0
    %p257 = por %p255, %p256
    %p258 = scmp.ne.s32.totalorder %s244, %s245
    %p259 = scmp.eq.s32.totalorder %s22, 1
    %p260 = por %p258, %p259
    %p262 = scmp.ne.s32.totalorder %s245, %s261
    %p263 = scmp.eq.s32.totalorder %s22, 0
    %p264 = por %p262, %p263
    %p265 = scmp.le.s32.totalorder 1, %s16
    %p266 = scmp.lt.s32.totalorder %s16, 3
    %p267 = pnand %p265, %p266
    %p268 = pneg %p267
    // Predicated region
    $region9: #{conv_block_forward.1} parent=5 // pred_check
      _
    $region10: #{conv_block_forward.1} parent=5 // pred_check_branch
      %270 = sbr.rel (%p267) target = $region12
    $region11: #{conv_block_forward.1} parent=5 // pred_region
      %s271 = ssub.s32 %s16, 1
      // Predicated region
      $region13: #{conv_block_forward.1} parent=11 // pred_check
        %p272 = pneg %p63
      $region14: #{conv_block_forward.1} parent=11 // pred_check_branch
        %274 = sbr.rel (%p272) target = $region16
      $region15: #{conv_block_forward.1} parent=11 // pred_region
        _
      $region16: #{conv_block_forward.1} parent=11 // pred_fallthru
        _
      // Predicated region
      $region17: #{conv_block_forward.1} parent=11 // pred_check
        %p275 = pneg %p84
      $region18: #{conv_block_forward.1} parent=11 // pred_check_branch
        %277 = sbr.rel (%p275) target = $region20
      $region19: #{conv_block_forward.1} parent=11 // pred_region
        _
      $region20: #{conv_block_forward.1} parent=11 // pred_fallthru
        _
      // Predicated region
      $region21: #{conv_block_forward.1} parent=11 // pred_check
        %p278 = pneg %p105
      $region22: #{conv_block_forward.1} parent=11 // pred_check_branch
        %280 = sbr.rel (%p278) target = $region24
      $region23: #{conv_block_forward.1} parent=11 // pred_region
        _
      $region24: #{conv_block_forward.1} parent=11 // pred_fallthru
        _
      // Predicated region
      $region25: #{conv_block_forward.1} parent=11 // pred_check
        %p281 = pneg %p126
      $region26: #{conv_block_forward.1} parent=11 // pred_check_branch
        %283 = sbr.rel (%p281) target = $region28
      $region27: #{conv_block_forward.1} parent=11 // pred_region
        _
      $region28: #{conv_block_forward.1} parent=11 // pred_fallthru
        _
      // Predicated region
      $region29: #{conv_block_forward.1} parent=11 // pred_check
        %p284 = pneg %p147
      $region30: #{conv_block_forward.1} parent=11 // pred_check_branch
        %286 = sbr.rel (%p284) target = $region32
      $region31: #{conv_block_forward.1} parent=11 // pred_region
        _
      $region32: #{conv_block_forward.1} parent=11 // pred_fallthru
        _
      // Predicated region
      $region33: #{conv_block_forward.1} parent=11 // pred_check
        %p287 = pneg %p168
      $region34: #{conv_block_forward.1} parent=11 // pred_check_branch
        %289 = sbr.rel (%p287) target = $region36
      $region35: #{conv_block_forward.1} parent=11 // pred_region
        _
      $region36: #{conv_block_forward.1} parent=11 // pred_fallthru
        _
      // Predicated region
      $region37: #{conv_block_forward.1} parent=11 // pred_check
        %p290 = pneg %p189
      $region38: #{conv_block_forward.1} parent=11 // pred_check_branch
        %292 = sbr.rel (%p290) target = $region40
      $region39: #{conv_block_forward.1} parent=11 // pred_region
        _
      $region40: #{conv_block_forward.1} parent=11 // pred_fallthru
        _
      // Predicated region
      $region41: #{conv_block_forward.1} parent=11 // pred_check
        %p293 = pneg %p210
      $region42: #{conv_block_forward.1} parent=11 // pred_check_branch
        %295 = sbr.rel (%p293) target = $region44
      $region43: #{conv_block_forward.1} parent=11 // pred_region
        _
      $region44: #{conv_block_forward.1} parent=11 // pred_fallthru
        _
      // Predicated region
      $region45: #{conv_block_forward.1} parent=11 // pred_check
        %p296 = pneg %p231
      $region46: #{conv_block_forward.1} parent=11 // pred_check_branch
        %298 = sbr.rel (%p296) target = $region48
      $region47: #{conv_block_forward.1} parent=11 // pred_region
        _
      $region48: #{conv_block_forward.1} parent=11 // pred_fallthru
        _
    $region12: #{conv_block_forward.1} parent=5 // pred_fallthru
      _
    %p299 = scmp.lt.s32.totalorder %s16, 2
    // Predicated region
    $region49: #{conv_block_forward.1} parent=5 // pred_check
      %p300 = pneg %p299
    $region50: #{conv_block_forward.1} parent=5 // pred_check_branch
      %302 = sbr.rel (%p300) target = $region52
    $region51: #{conv_block_forward.1} parent=5 // pred_region
      // Predicated region
      $region53: #{conv_block_forward.1} parent=51 // pred_check
        %p303 = pneg %p36
      $region54: #{conv_block_forward.1} parent=51 // pred_check_branch
        %305 = sbr.rel (%p303) target = $region56
      $region55: #{conv_block_forward.1} parent=51 // pred_region
        %p306 = scmp.lt.s32.totalorder %s16, 1
        %s307 = scalar_select %p306, %s16, 1
        %s308 = smul.addr %s307, 2
        %s309 = smul.addr %s308, 8
        %s310 = scalar_lea.vmem %s0, %s309
      $region56: #{conv_block_forward.1} parent=51 // pred_fallthru
        _
    $region52: #{conv_block_forward.1} parent=5 // pred_fallthru
      _
    %p311 = scmp.le.s32.totalorder 1, %s16
    %p312 = scmp.lt.s32.totalorder %s16, 3
    %p313 = pnand %p311, %p312
    %p314 = pneg %p313
    // Predicated region
    $region57: #{conv_block_forward.1} parent=5 // pred_check
      _
    $region58: #{conv_block_forward.1} parent=5 // pred_check_branch
      %316 = sbr.rel (%p313) target = $region60
    $region59: #{conv_block_forward.1} parent=5 // pred_region
      %s317 = ssub.s32 %s16, 1
      %p318 = scmp.lt.s32.totalorder %s21, 1
      %s319 = scalar_select %p318, %s21, 1
      %s320 = smul.addr %s319, 2
      %s321 = smul.addr %s320, 8
      %s322 = scalar_lea.vmem %s0, %s321
      %p323 = pneg %p42
      %p324 = pneg %p39
      %p325 = pneg %p63
      %p326 = pneg %p60
      %p327 = pneg %p84
      %p328 = pneg %p81
      %p329 = pneg %p105
      %p330 = pneg %p102
      %p331 = pneg %p126
      %p332 = pneg %p123
      %p333 = pneg %p147
      %p334 = pneg %p144
      %p335 = pneg %p168
      %p336 = pneg %p165
      %p337 = pneg %p189
      %p338 = pneg %p186
      %p339 = pneg %p210
      %p340 = pneg %p207
      %p341 = pneg %p231
      %p342 = pneg %p228
      %p343 = pneg %p257
      %p344 = pneg %p254
      %p345 = scmp.lt.s32.totalorder %s21, 1
      %s346 = scalar_select %p345, %s21, 1
      %s347 = smul.addr %s346, 8
      %s348 = smul.addr %s347, 8
      %s349 = scalar_lea.vmem %s10, %s348
      %p350 = scmp.lt.s32.totalorder %s21, 1
      %s351 = scalar_select %p350, %s21, 1
      %s352 = smul.addr %s351, 2
      %s353 = smul.addr %s352, 8
      %s354 = scalar_lea.vmem %s0, %s353
      %p355 = scmp.lt.s32.totalorder %s21, 1
      %s356 = scalar_select %p355, %s21, 1
      %s357 = smul.addr %s356, 8
      %s358 = smul.addr %s357, 8
      %s359 = scalar_lea.vmem %s10, %s358
      %v361 = vld [vmem:[%s9] sm:$0xff]
      %v362 = vld [vmem:[%s9 + $0x8] sm:$0xff]
      %v363 = vld [vmem:[%s9 + $0x10] sm:$0xff]
      %v364 = vld [vmem:[%s9 + $0x18] sm:$0xff]
      %v365 = vld [vmem:[%s9 + $0x20] sm:$0xff]
      %v366 = vld [vmem:[%s9 + $0x28] sm:$0xff]
      %v367 = vld [vmem:[%s9 + $0x30] sm:$0xff]
      %v368 = vld [vmem:[%s9 + $0x38] sm:$0xff]
      %v369 = vld [vmem:[%s9 + $0x40] sm:$0xff]
      %v370 = vld [vmem:[%s9 + $0x48] sm:$0xff]
      %v371 = vld [vmem:[%s9 + $0x50] sm:$0xff]
      %v372 = vld [vmem:[%s9 + $0x58] sm:$0xff]
      %v373 = vld [vmem:[%s9 + $0x60] sm:$0xff]
      %v374 = vld [vmem:[%s9 + $0x68] sm:$0xff]
      %v375 = vld [vmem:[%s9 + $0x70] sm:$0xff]
      %v376 = vld [vmem:[%s9 + $0x78] sm:$0xff]
      %v377 = vld [vmem:[%s9 + $0x80] sm:$0xff]
      %v378 = vld [vmem:[%s9 + $0x88] sm:$0xff]
      %v379 = vld [vmem:[%s9 + $0x90] sm:$0xff]
      %v380 = vld [vmem:[%s9 + $0x98] sm:$0xff]
      %v381 = vld [vmem:[%s9 + $0xa0] sm:$0xff]
      %v382 = vld [vmem:[%s9 + $0xa8] sm:$0xff]
      %v383 = vld [vmem:[%s9 + $0xb0] sm:$0xff]
      %v384 = vld [vmem:[%s9 + $0xb8] sm:$0xff]
      %v385 = vld [vmem:[%s9 + $0xc0] sm:$0xff]
      %v386 = vld [vmem:[%s9 + $0xc8] sm:$0xff]
      %v387 = vld [vmem:[%s9 + $0xd0] sm:$0xff]
      %v388 = vld [vmem:[%s9 + $0xd8] sm:$0xff]
      %v389 = vld [vmem:[%s9 + $0xe0] sm:$0xff]
      %v390 = vld [vmem:[%s9 + $0xe8] sm:$0xff]
      %v391 = vld [vmem:[%s9 + $0xf0] sm:$0xff]
      %v392 = vld [vmem:[%s9 + $0xf8] sm:$0xff]
      %v393 = vld [vmem:[%s9 + $0x100] sm:$0xff]
      %v394 = vld [vmem:[%s9 + $0x108] sm:$0xff]
      %v395 = vld [vmem:[%s9 + $0x110] sm:$0xff]
      %v396 = vld [vmem:[%s9 + $0x118] sm:$0xff]
      %v397 = vld [vmem:[%s9 + $0x120] sm:$0xff]
      %v398 = vld [vmem:[%s9 + $0x128] sm:$0xff]
      %v399 = vld [vmem:[%s9 + $0x130] sm:$0xff]
      %v400 = vld [vmem:[%s9 + $0x138] sm:$0xff]
      %v401 = vld [vmem:[%s9 + $0x140] sm:$0xff]
      %v402 = vld [vmem:[%s9 + $0x148] sm:$0xff]
      %v403 = vld [vmem:[%s9 + $0x150] sm:$0xff]
      %v404 = vld [vmem:[%s9 + $0x158] sm:$0xff]
      %v405 = vld [vmem:[%s9 + $0x160] sm:$0xff]
      %v406 = vld [vmem:[%s9 + $0x168] sm:$0xff]
      %v407 = vld [vmem:[%s9 + $0x170] sm:$0xff]
      %v408 = vld [vmem:[%s9 + $0x178] sm:$0xff]
      %v409 = vld [vmem:[%s9 + $0x180] sm:$0xff]
      %v410 = vld [vmem:[%s9 + $0x188] sm:$0xff]
      %v411 = vld [vmem:[%s9 + $0x190] sm:$0xff]
      %v412 = vld [vmem:[%s9 + $0x198] sm:$0xff]
      %v413 = vld [vmem:[%s9 + $0x1a0] sm:$0xff]
      %v414 = vld [vmem:[%s9 + $0x1a8] sm:$0xff]
      %v415 = vld [vmem:[%s9 + $0x1b0] sm:$0xff]
      %v416 = vld [vmem:[%s9 + $0x1b8] sm:$0xff]
      %v417 = vld [vmem:[%s9 + $0x1c0] sm:$0xff]
      %v418 = vld [vmem:[%s9 + $0x1c8] sm:$0xff]
      %v419 = vld [vmem:[%s9 + $0x1d0] sm:$0xff]
      %v420 = vld [vmem:[%s9 + $0x1d8] sm:$0xff]
      %v421 = vld [vmem:[%s9 + $0x1e0] sm:$0xff]
      %v422 = vld [vmem:[%s9 + $0x1e8] sm:$0xff]
      %v423 = vld [vmem:[%s9 + $0x1f0] sm:$0xff]
      %v424 = vld [vmem:[%s9 + $0x1f8] sm:$0xff]
      %v425 = vld [vmem:[%s9 + $0x200] sm:$0xff]
      %v426 = vld [vmem:[%s9 + $0x208] sm:$0xff]
      %v427 = vld [vmem:[%s9 + $0x210] sm:$0xff]
      %v428 = vld [vmem:[%s9 + $0x218] sm:$0xff]
      %v429 = vld [vmem:[%s9 + $0x220] sm:$0xff]
      %v430 = vld [vmem:[%s9 + $0x228] sm:$0xff]
      %v431 = vld [vmem:[%s9 + $0x230] sm:$0xff]
      %v432 = vld [vmem:[%s9 + $0x238] sm:$0xff]
      %v433 = vld [vmem:[%s9 + $0x240] sm:$0xff]
      %v434 = vld [vmem:[%s9 + $0x248] sm:$0xff]
      %v435 = vld [vmem:[%s9 + $0x250] sm:$0xff]
      %v436 = vld [vmem:[%s9 + $0x258] sm:$0xff]
      %v437 = vld [vmem:[%s9 + $0x260] sm:$0xff]
      %v438 = vld [vmem:[%s9 + $0x268] sm:$0xff]
      %v439 = vld [vmem:[%s9 + $0x270] sm:$0xff]
      %v440 = vld [vmem:[%s9 + $0x278] sm:$0xff]
      %v441 = vld [vmem:[%s9 + $0x280] sm:$0xff]
      %v442 = vld [vmem:[%s9 + $0x288] sm:$0xff]
      %v443 = vld [vmem:[%s9 + $0x290] sm:$0xff]
      %v444 = vld [vmem:[%s9 + $0x298] sm:$0xff]
      %v445 = vld [vmem:[%s9 + $0x2a0] sm:$0xff]
      %v446 = vld [vmem:[%s9 + $0x2a8] sm:$0xff]
      %v447 = vld [vmem:[%s9 + $0x2b0] sm:$0xff]
      %v448 = vld [vmem:[%s9 + $0x2b8] sm:$0xff]
      %v449 = vld [vmem:[%s9 + $0x2c0] sm:$0xff]
      %v450 = vld [vmem:[%s9 + $0x2c8] sm:$0xff]
      %v451 = vld [vmem:[%s9 + $0x2d0] sm:$0xff]
      %v452 = vld [vmem:[%s9 + $0x2d8] sm:$0xff]
      %v453 = vld [vmem:[%s9 + $0x2e0] sm:$0xff]
      %v454 = vld [vmem:[%s9 + $0x2e8] sm:$0xff]
      %v455 = vld [vmem:[%s9 + $0x2f0] sm:$0xff]
      %v456 = vld [vmem:[%s9 + $0x2f8] sm:$0xff]
      %v457 = vld [vmem:[%s9 + $0x300] sm:$0xff]
      %v458 = vld [vmem:[%s9 + $0x308] sm:$0xff]
      %v459 = vld [vmem:[%s9 + $0x310] sm:$0xff]
      %v460 = vld [vmem:[%s9 + $0x318] sm:$0xff]
      %v461 = vld [vmem:[%s9 + $0x320] sm:$0xff]
      %v462 = vld [vmem:[%s9 + $0x328] sm:$0xff]
      %v463 = vld [vmem:[%s9 + $0x330] sm:$0xff]
      %v464 = vld [vmem:[%s9 + $0x338] sm:$0xff]
      %v465 = vld [vmem:[%s9 + $0x340] sm:$0xff]
      %v466 = vld [vmem:[%s9 + $0x348] sm:$0xff]
      %v467 = vld [vmem:[%s9 + $0x350] sm:$0xff]
      %v468 = vld [vmem:[%s9 + $0x358] sm:$0xff]
      %v469 = vld [vmem:[%s9 + $0x360] sm:$0xff]
      %v470 = vld [vmem:[%s9 + $0x368] sm:$0xff]
      %v471 = vld [vmem:[%s9 + $0x370] sm:$0xff]
      %v472 = vld [vmem:[%s9 + $0x378] sm:$0xff]
      %v473 = vld [vmem:[%s9 + $0x380] sm:$0xff]
      %v474 = vld [vmem:[%s9 + $0x388] sm:$0xff]
      %v475 = vld [vmem:[%s9 + $0x390] sm:$0xff]
      %v476 = vld [vmem:[%s9 + $0x398] sm:$0xff]
      %v477 = vld [vmem:[%s9 + $0x3a0] sm:$0xff]
      %v478 = vld [vmem:[%s9 + $0x3a8] sm:$0xff]
      %v479 = vld [vmem:[%s9 + $0x3b0] sm:$0xff]
      %v480 = vld [vmem:[%s9 + $0x3b8] sm:$0xff]
      %v481 = vld [vmem:[%s9 + $0x3c0] sm:$0xff]
      %v482 = vld [vmem:[%s9 + $0x3c8] sm:$0xff]
      %v483 = vld [vmem:[%s9 + $0x3d0] sm:$0xff]
      %v484 = vld [vmem:[%s9 + $0x3d8] sm:$0xff]
      %v485 = vld [vmem:[%s9 + $0x3e0] sm:$0xff]
      %v486 = vld [vmem:[%s9 + $0x3e8] sm:$0xff]
      %v487 = vld [vmem:[%s9 + $0x3f0] sm:$0xff]
      %v488 = vld [vmem:[%s9 + $0x3f8] sm:$0xff]
      %v489 = vld [vmem:[%s9 + $0x400] sm:$0xff]
      %v490 = vld [vmem:[%s9 + $0x408] sm:$0xff]
      %v491 = vld [vmem:[%s9 + $0x410] sm:$0xff]
      %v492 = vld [vmem:[%s9 + $0x418] sm:$0xff]
      %v493 = vld [vmem:[%s9 + $0x420] sm:$0xff]
      %v494 = vld [vmem:[%s9 + $0x428] sm:$0xff]
      %v495 = vld [vmem:[%s9 + $0x430] sm:$0xff]
      %v496 = vld [vmem:[%s9 + $0x438] sm:$0xff]
      %v497 = vld [vmem:[%s9 + $0x440] sm:$0xff]
      %v498 = vld [vmem:[%s9 + $0x448] sm:$0xff]
      %v499 = vld [vmem:[%s9 + $0x450] sm:$0xff]
      %v500 = vld [vmem:[%s9 + $0x458] sm:$0xff]
      %v501 = vld [vmem:[%s9 + $0x460] sm:$0xff]
      %v502 = vld [vmem:[%s9 + $0x468] sm:$0xff]
      %v503 = vld [vmem:[%s9 + $0x470] sm:$0xff]
      %v504 = vld [vmem:[%s9 + $0x478] sm:$0xff]
      %v505 = vld [vmem:[%s9 + $0x480] sm:$0xff]
      %v506 = vld [vmem:[%s9 + $0x488] sm:$0xff]
      %v507 = vld [vmem:[%s9 + $0x490] sm:$0xff]
      %v508 = vld [vmem:[%s9 + $0x498] sm:$0xff]
      %v509 = vld [vmem:[%s9 + $0x4a0] sm:$0xff]
      %v510 = vld [vmem:[%s9 + $0x4a8] sm:$0xff]
      %v511 = vld [vmem:[%s9 + $0x4b0] sm:$0xff]
      %v512 = vld [vmem:[%s9 + $0x4b8] sm:$0xff]
      %v513 = vld [vmem:[%s9 + $0x4c0] sm:$0xff]
      %v514 = vld [vmem:[%s9 + $0x4c8] sm:$0xff]
      %v515 = vld [vmem:[%s9 + $0x4d0] sm:$0xff]
      %v516 = vld [vmem:[%s9 + $0x4d8] sm:$0xff]
      %v517 = vld [vmem:[%s9 + $0x4e0] sm:$0xff]
      %v518 = vld [vmem:[%s9 + $0x4e8] sm:$0xff]
      %v519 = vld [vmem:[%s9 + $0x4f0] sm:$0xff]
      %v520 = vld [vmem:[%s9 + $0x4f8] sm:$0xff]
      %v521 = vld [vmem:[%s9 + $0x500] sm:$0xff]
      %v522 = vld [vmem:[%s9 + $0x508] sm:$0xff]
      %v523 = vld [vmem:[%s9 + $0x510] sm:$0xff]
      %v524 = vld [vmem:[%s9 + $0x518] sm:$0xff]
      %v525 = vld [vmem:[%s9 + $0x520] sm:$0xff]
      %v526 = vld [vmem:[%s9 + $0x528] sm:$0xff]
      %v527 = vld [vmem:[%s9 + $0x530] sm:$0xff]
      %v528 = vld [vmem:[%s9 + $0x538] sm:$0xff]
      %v529 = vld [vmem:[%s9 + $0x540] sm:$0xff]
      %v530 = vld [vmem:[%s9 + $0x548] sm:$0xff]
      %v531 = vld [vmem:[%s9 + $0x550] sm:$0xff]
      %v532 = vld [vmem:[%s9 + $0x558] sm:$0xff]
      %v533 = vld [vmem:[%s9 + $0x560] sm:$0xff]
      %v534 = vld [vmem:[%s9 + $0x568] sm:$0xff]
      %v535 = vld [vmem:[%s9 + $0x570] sm:$0xff]
      %v536 = vld [vmem:[%s9 + $0x578] sm:$0xff]
      %v537 = vld [vmem:[%s9 + $0x580] sm:$0xff]
      %v538 = vld [vmem:[%s9 + $0x588] sm:$0xff]
      %v539 = vld [vmem:[%s9 + $0x590] sm:$0xff]
      %v540 = vld [vmem:[%s9 + $0x598] sm:$0xff]
      %v541 = vld [vmem:[%s9 + $0x5a0] sm:$0xff]
      %v542 = vld [vmem:[%s9 + $0x5a8] sm:$0xff]
      %v543 = vld [vmem:[%s9 + $0x5b0] sm:$0xff]
      %v544 = vld [vmem:[%s9 + $0x5b8] sm:$0xff]
      %v545 = vld [vmem:[%s9 + $0x5c0] sm:$0xff]
      %v546 = vld [vmem:[%s9 + $0x5c8] sm:$0xff]
      %v547 = vld [vmem:[%s9 + $0x5d0] sm:$0xff]
      %v548 = vld [vmem:[%s9 + $0x5d8] sm:$0xff]
      %v549 = vld [vmem:[%s9 + $0x5e0] sm:$0xff]
      %v550 = vld [vmem:[%s9 + $0x5e8] sm:$0xff]
      %v551 = vld [vmem:[%s9 + $0x5f0] sm:$0xff]
      %v552 = vld [vmem:[%s9 + $0x5f8] sm:$0xff]
      %v553 = vld [vmem:[%s9 + $0x600] sm:$0xff]
      %v554 = vld [vmem:[%s9 + $0x608] sm:$0xff]
      %v555 = vld [vmem:[%s9 + $0x610] sm:$0xff]
      %v556 = vld [vmem:[%s9 + $0x618] sm:$0xff]
      %v557 = vld [vmem:[%s9 + $0x620] sm:$0xff]
      %v558 = vld [vmem:[%s9 + $0x628] sm:$0xff]
      %v559 = vld [vmem:[%s9 + $0x630] sm:$0xff]
      %v560 = vld [vmem:[%s9 + $0x638] sm:$0xff]
      %v561 = vld [vmem:[%s9 + $0x640] sm:$0xff]
      %v562 = vld [vmem:[%s9 + $0x648] sm:$0xff]
      %v563 = vld [vmem:[%s9 + $0x650] sm:$0xff]
      %v564 = vld [vmem:[%s9 + $0x658] sm:$0xff]
      %v565 = vld [vmem:[%s9 + $0x660] sm:$0xff]
      %v566 = vld [vmem:[%s9 + $0x668] sm:$0xff]
      %v567 = vld [vmem:[%s9 + $0x670] sm:$0xff]
      %v568 = vld [vmem:[%s9 + $0x678] sm:$0xff]
      %v569 = vld [vmem:[%s9 + $0x680] sm:$0xff]
      %v570 = vld [vmem:[%s9 + $0x688] sm:$0xff]
      %v571 = vld [vmem:[%s9 + $0x690] sm:$0xff]
      %v572 = vld [vmem:[%s9 + $0x698] sm:$0xff]
      %v573 = vld [vmem:[%s9 + $0x6a0] sm:$0xff]
      %v574 = vld [vmem:[%s9 + $0x6a8] sm:$0xff]
      %v575 = vld [vmem:[%s9 + $0x6b0] sm:$0xff]
      %v576 = vld [vmem:[%s9 + $0x6b8] sm:$0xff]
      %v577 = vld [vmem:[%s9 + $0x6c0] sm:$0xff]
      %v578 = vld [vmem:[%s9 + $0x6c8] sm:$0xff]
      %v579 = vld [vmem:[%s9 + $0x6d0] sm:$0xff]
      %v580 = vld [vmem:[%s9 + $0x6d8] sm:$0xff]
      %v581 = vld [vmem:[%s9 + $0x6e0] sm:$0xff]
      %v582 = vld [vmem:[%s9 + $0x6e8] sm:$0xff]
      %v583 = vld [vmem:[%s9 + $0x6f0] sm:$0xff]
      %v584 = vld [vmem:[%s9 + $0x6f8] sm:$0xff]
      %v585 = vld [vmem:[%s9 + $0x700] sm:$0xff]
      %v586 = vld [vmem:[%s9 + $0x708] sm:$0xff]
      %v587 = vld [vmem:[%s9 + $0x710] sm:$0xff]
      %v588 = vld [vmem:[%s9 + $0x718] sm:$0xff]
      %v589 = vld [vmem:[%s9 + $0x720] sm:$0xff]
      %v590 = vld [vmem:[%s9 + $0x728] sm:$0xff]
      %v591 = vld [vmem:[%s9 + $0x730] sm:$0xff]
      %v592 = vld [vmem:[%s9 + $0x738] sm:$0xff]
      %v593 = vld [vmem:[%s9 + $0x740] sm:$0xff]
      %v594 = vld [vmem:[%s9 + $0x748] sm:$0xff]
      %v595 = vld [vmem:[%s9 + $0x750] sm:$0xff]
      %v596 = vld [vmem:[%s9 + $0x758] sm:$0xff]
      %v597 = vld [vmem:[%s9 + $0x760] sm:$0xff]
      %v598 = vld [vmem:[%s9 + $0x768] sm:$0xff]
      %v599 = vld [vmem:[%s9 + $0x770] sm:$0xff]
      %v600 = vld [vmem:[%s9 + $0x778] sm:$0xff]
      %v601 = vld [vmem:[%s9 + $0x780] sm:$0xff]
      %v602 = vld [vmem:[%s9 + $0x788] sm:$0xff]
      %v603 = vld [vmem:[%s9 + $0x790] sm:$0xff]
      %v604 = vld [vmem:[%s9 + $0x798] sm:$0xff]
      %v605 = vld [vmem:[%s9 + $0x7a0] sm:$0xff]
      %v606 = vld [vmem:[%s9 + $0x7a8] sm:$0xff]
      %v607 = vld [vmem:[%s9 + $0x7b0] sm:$0xff]
      %v608 = vld [vmem:[%s9 + $0x7b8] sm:$0xff]
      %v609 = vld [vmem:[%s9 + $0x7c0] sm:$0xff]
      %v610 = vld [vmem:[%s9 + $0x7c8] sm:$0xff]
      %v611 = vld [vmem:[%s9 + $0x7d0] sm:$0xff]
      %v612 = vld [vmem:[%s9 + $0x7d8] sm:$0xff]
      %v613 = vld [vmem:[%s9 + $0x7e0] sm:$0xff]
      %v614 = vld [vmem:[%s9 + $0x7e8] sm:$0xff]
      %v615 = vld [vmem:[%s9 + $0x7f0] sm:$0xff]
      %v616 = vld [vmem:[%s9 + $0x7f8] sm:$0xff]
      %vm617 = vcmask 516096
      %618 = vst.msk [vmem:[#allocation2] sm:$0x1] %vm617, 0.0
      %619 = vst.msk [vmem:[#allocation2 + $0x11] sm:$0x1] %vm617, 0.0
      %v620 = vld [vmem:[%s354] sm:$0xff]
      %v621 = vld [vmem:[%s354 + $0x8] sm:$0xff]
      %vm622 = vcmask 523264
      %623 = vst.msk [vmem:[#allocation2 + $0x1] sm:$0xff] %vm622, %v620
      %624 = vst.msk [vmem:[#allocation2 + $0x9] sm:$0xff] %vm622, %v621
      %v625 = vld [vmem:[#allocation2] sm:$0xff]
      %v626 = vld [vmem:[#allocation2 + $0x8] sm:$0xff]
      %v627 = vpack.c.bf16 %v626, %v625
      %v628 = vld [vmem:[%s1] sm:$0xff]
      %v629 = vld [vmem:[%s1 + $0x8] sm:$0xff]
      %v630 = vld [vmem:[%s1 + $0x10] sm:$0xff]
      %v631 = vld [vmem:[%s1 + $0x18] sm:$0xff]
      %v632 = vld [vmem:[%s1 + $0x20] sm:$0xff]
      %v633 = vld [vmem:[%s1 + $0x28] sm:$0xff]
      %v634 = vld [vmem:[%s1 + $0x30] sm:$0xff]
      %v635 = vld [vmem:[%s1 + $0x38] sm:$0xff]
      %v636 = vld [vmem:[%s1 + $0x40] sm:$0xff]
      %v637 = vld [vmem:[%s1 + $0x48] sm:$0xff]
      %v638 = vld [vmem:[%s1 + $0x50] sm:$0xff]
      %v639 = vld [vmem:[%s1 + $0x58] sm:$0xff]
      %v640 = vld [vmem:[%s1 + $0x60] sm:$0xff]
      %v641 = vld [vmem:[%s1 + $0x68] sm:$0xff]
      %v642 = vld [vmem:[%s1 + $0x70] sm:$0xff]
      %v643 = vld [vmem:[%s1 + $0x78] sm:$0xff]
      %v644 = vld [vmem:[#allocation2 + $0x1] sm:$0xff]
      %v645 = vld [vmem:[#allocation2 + $0x9] sm:$0xff]
      %v646 = vpack.c.bf16 %v645, %v644
      %s647 = scalar_lea.vmem %s1, 128
      %v648 = vld [vmem:[%s647] sm:$0xff]
      %v649 = vld [vmem:[%s647 + $0x8] sm:$0xff]
      %v650 = vld [vmem:[%s647 + $0x10] sm:$0xff]
      %v651 = vld [vmem:[%s647 + $0x18] sm:$0xff]
      %v652 = vld [vmem:[%s647 + $0x20] sm:$0xff]
      %v653 = vld [vmem:[%s647 + $0x28] sm:$0xff]
      %v654 = vld [vmem:[%s647 + $0x30] sm:$0xff]
      %v655 = vld [vmem:[%s647 + $0x38] sm:$0xff]
      %v656 = vld [vmem:[%s647 + $0x40] sm:$0xff]
      %v657 = vld [vmem:[%s647 + $0x48] sm:$0xff]
      %v658 = vld [vmem:[%s647 + $0x50] sm:$0xff]
      %v659 = vld [vmem:[%s647 + $0x58] sm:$0xff]
      %v660 = vld [vmem:[%s647 + $0x60] sm:$0xff]
      %v661 = vld [vmem:[%s647 + $0x68] sm:$0xff]
      %v662 = vld [vmem:[%s647 + $0x70] sm:$0xff]
      %v663 = vld [vmem:[%s647 + $0x78] sm:$0xff]
      %v680 = vunpack.c.l.b16 %v648
      %v681 = vunpack.c.h.b16 %v648
      %v682 = vunpack.c.l.b16 %v649
      %v683 = vunpack.c.h.b16 %v649
      %v684 = vunpack.c.l.b16 %v650
      %v685 = vunpack.c.h.b16 %v650
      %v686 = vunpack.c.l.b16 %v651
      %v687 = vunpack.c.h.b16 %v651
      %v688 = vunpack.c.l.b16 %v652
      %v689 = vunpack.c.h.b16 %v652
      %v690 = vunpack.c.l.b16 %v653
      %v691 = vunpack.c.h.b16 %v653
      %v692 = vunpack.c.l.b16 %v654
      %v693 = vunpack.c.h.b16 %v654
      %v694 = vunpack.c.l.b16 %v655
      %v695 = vunpack.c.h.b16 %v655
      %v696 = vunpack.c.l.b16 %v656
      %v697 = vunpack.c.h.b16 %v656
      %v698 = vunpack.c.l.b16 %v657
      %v699 = vunpack.c.h.b16 %v657
      %v700 = vunpack.c.l.b16 %v658
      %v701 = vunpack.c.h.b16 %v658
      %v702 = vunpack.c.l.b16 %v659
      %v703 = vunpack.c.h.b16 %v659
      %v704 = vunpack.c.l.b16 %v660
      %v705 = vunpack.c.h.b16 %v660
      %v706 = vunpack.c.l.b16 %v661
      %v707 = vunpack.c.h.b16 %v661
      %v708 = vunpack.c.l.b16 %v662
      %v709 = vunpack.c.h.b16 %v662
      %v710 = vunpack.c.l.b16 %v663
      %v711 = vunpack.c.h.b16 %v663
      %v712 = vpack.c.b16 %v684, %v680
      %v713 = vpack.c.b16 %v685, %v681
      %v714 = vpack.c.b16 %v686, %v682
      %v715 = vpack.c.b16 %v687, %v683
      %v716 = vpack.c.b16 %v692, %v688
      %v717 = vpack.c.b16 %v693, %v689
      %v718 = vpack.c.b16 %v694, %v690
      %v719 = vpack.c.b16 %v695, %v691
      %v720 = vpack.c.b16 %v700, %v696
      %v721 = vpack.c.b16 %v701, %v697
      %v722 = vpack.c.b16 %v702, %v698
      %v723 = vpack.c.b16 %v703, %v699
      %v724 = vpack.c.b16 %v708, %v704
      %v725 = vpack.c.b16 %v709, %v705
      %v726 = vpack.c.b16 %v710, %v706
      %v727 = vpack.c.b16 %v711, %v707
      %v745 = vsel %vm622, %v646, 0
      %747 = vmatprep.subr.bf16.mxu0 0
      %748 = vmatpush1.bf16.msra.mxu0 0
      %749 = vmatprep.subr.bf16.mxu0 0
      %750 = vmatpush1.bf16.msra.mxu0 0
      %751 = vmatprep.subr.bf16.mxu0 0
      %752 = vmatpush1.bf16.msra.mxu0 0
      %753 = vmatprep.subr.bf16.mxu0 0
      %754 = vmatpush1.bf16.msra.mxu0 0
      %755 = vmatprep.subr.bf16.mxu0 %v725
      %756 = vmatpush1.bf16.msra.mxu0 %v724
      %757 = vmatprep.subr.bf16.mxu0 %v721
      %758 = vmatpush1.bf16.msra.mxu0 %v720
      %759 = vmatprep.subr.bf16.mxu0 %v717
      %760 = vmatpush1.bf16.msra.mxu0 %v716
      %761 = vmatprep.subr.bf16.mxu0 %v713
      %762 = vmatpush1.bf16.msra.mxu0 %v712
      %763 = vmatprep.subr.bf16.mxu0 0
      %764 = vmatpush2.bf16.msra.mxu0 0
      %765 = vmatprep.subr.bf16.mxu0 0
      %766 = vmatpush2.bf16.msra.mxu0 0
      %767 = vmatprep.subr.bf16.mxu0 0
      %768 = vmatpush2.bf16.msra.mxu0 0
      %769 = vmatprep.subr.bf16.mxu0 0
      %770 = vmatpush2.bf16.msra.mxu0 0
      %771 = vmatprep.subr.bf16.mxu0 0
      %772 = vmatpush2.bf16.msra.mxu0 0
      %773 = vmatprep.subr.bf16.mxu0 0
      %774 = vmatpush2.bf16.msra.mxu0 0
      %775 = vmatprep.subr.bf16.mxu0 0
      %776 = vmatpush2.bf16.msra.mxu0 0
      %777 = vmatprep.subr.bf16.mxu0 0
      %778 = vmatpush2.bf16.msra.mxu0 0
      %779 = vmatprep.mubr.bf16.mxu0 0
      %780 = vmatmul.mubr.bf16.gmra.mxu0 %v745
      %v781 = vpop.f32.mrf.mxu0
      %v782 = vadd.f32 0.0, %v781
      %v783 = vpop.f32.mrf.mxu0
      %v784 = vadd.f32 0.0, %v783
      %v785 = vpop.f32.mrf.mxu0
      %v786 = vadd.f32 0.0, %v785
      %v787 = vpop.f32.mrf.mxu0
      %v788 = vadd.f32 0.0, %v787
      %789 = vdwg.mxu0
      %790 = vmatprep.subr.bf16.mxu0 0
      %791 = vmatpush1.bf16.msra.mxu0 0
      %792 = vmatprep.subr.bf16.mxu0 0
      %793 = vmatpush1.bf16.msra.mxu0 0
      %794 = vmatprep.subr.bf16.mxu0 0
      %795 = vmatpush1.bf16.msra.mxu0 0
      %796 = vmatprep.subr.bf16.mxu0 0
      %797 = vmatpush1.bf16.msra.mxu0 0
      %798 = vmatprep.subr.bf16.mxu0 %v727
      %799 = vmatpush1.bf16.msra.mxu0 %v726
      %800 = vmatprep.subr.bf16.mxu0 %v723
      %801 = vmatpush1.bf16.msra.mxu0 %v722
      %802 = vmatprep.subr.bf16.mxu0 %v719
      %803 = vmatpush1.bf16.msra.mxu0 %v718
      %804 = vmatprep.subr.bf16.mxu0 %v715
      %805 = vmatpush1.bf16.msra.mxu0 %v714
      %806 = vmatprep.subr.bf16.mxu0 0
      %807 = vmatpush2.bf16.msra.mxu0 0
      %808 = vmatprep.subr.bf16.mxu0 0
      %809 = vmatpush2.bf16.msra.mxu0 0
      %810 = vmatprep.subr.bf16.mxu0 0
      %811 = vmatpush2.bf16.msra.mxu0 0
      %812 = vmatprep.subr.bf16.mxu0 0
      %813 = vmatpush2.bf16.msra.mxu0 0
      %814 = vmatprep.subr.bf16.mxu0 0
      %815 = vmatpush2.bf16.msra.mxu0 0
      %816 = vmatprep.subr.bf16.mxu0 0
      %817 = vmatpush2.bf16.msra.mxu0 0
      %818 = vmatprep.subr.bf16.mxu0 0
      %819 = vmatpush2.bf16.msra.mxu0 0
      %820 = vmatprep.subr.bf16.mxu0 0
      %821 = vmatpush2.bf16.msra.mxu0 0
      %822 = vmatprep.mubr.bf16.mxu0 0
      %823 = vmatmul.mubr.bf16.gmra.mxu0 %v745
      %v824 = vpop.f32.mrf.mxu0
      %v825 = vadd.f32 0.0, %v824
      %v826 = vpop.f32.mrf.mxu0
      %v827 = vadd.f32 0.0, %v826
      %v828 = vpop.f32.mrf.mxu0
      %v829 = vadd.f32 0.0, %v828
      %v830 = vpop.f32.mrf.mxu0
      %v831 = vadd.f32 0.0, %v830
      %832 = vdwg.mxu0
      %v849 = vunpack.c.l.b16 %v628
      %v850 = vunpack.c.h.b16 %v628
      %v851 = vunpack.c.l.b16 %v629
      %v852 = vunpack.c.h.b16 %v629
      %v853 = vunpack.c.l.b16 %v630
      %v854 = vunpack.c.h.b16 %v630
      %v855 = vunpack.c.l.b16 %v631
      %v856 = vunpack.c.h.b16 %v631
      %v857 = vunpack.c.l.b16 %v632
      %v858 = vunpack.c.h.b16 %v632
      %v859 = vunpack.c.l.b16 %v633
      %v860 = vunpack.c.h.b16 %v633
      %v861 = vunpack.c.l.b16 %v634
      %v862 = vunpack.c.h.b16 %v634
      %v863 = vunpack.c.l.b16 %v635
      %v864 = vunpack.c.h.b16 %v635
      %v865 = vunpack.c.l.b16 %v636
      %v866 = vunpack.c.h.b16 %v636
      %v867 = vunpack.c.l.b16 %v637
      %v868 = vunpack.c.h.b16 %v637
      %v869 = vunpack.c.l.b16 %v638
      %v870 = vunpack.c.h.b16 %v638
      %v871 = vunpack.c.l.b16 %v639
      %v872 = vunpack.c.h.b16 %v639
      %v873 = vunpack.c.l.b16 %v640
      %v874 = vunpack.c.h.b16 %v640
      %v875 = vunpack.c.l.b16 %v641
      %v876 = vunpack.c.h.b16 %v641
      %v877 = vunpack.c.l.b16 %v642
      %v878 = vunpack.c.h.b16 %v642
      %v879 = vunpack.c.l.b16 %v643
      %v880 = vunpack.c.h.b16 %v643
      %v881 = vpack.c.b16 %v853, %v849
      %v882 = vpack.c.b16 %v854, %v850
      %v883 = vpack.c.b16 %v855, %v851
      %v884 = vpack.c.b16 %v856, %v852
      %v885 = vpack.c.b16 %v861, %v857
      %v886 = vpack.c.b16 %v862, %v858
      %v887 = vpack.c.b16 %v863, %v859
      %v888 = vpack.c.b16 %v864, %v860
      %v889 = vpack.c.b16 %v869, %v865
      %v890 = vpack.c.b16 %v870, %v866
      %v891 = vpack.c.b16 %v871, %v867
      %v892 = vpack.c.b16 %v872, %v868
      %v893 = vpack.c.b16 %v877, %v873
      %v894 = vpack.c.b16 %v878, %v874
      %v895 = vpack.c.b16 %v879, %v875
      %v896 = vpack.c.b16 %v880, %v876
      %v914 = vsel %vm622, %v627, 0
      %916 = vmatprep.subr.bf16.mxu0 0
      %917 = vmatpush1.bf16.msra.mxu0 0
      %918 = vmatprep.subr.bf16.mxu0 0
      %919 = vmatpush1.bf16.msra.mxu0 0
      %920 = vmatprep.subr.bf16.mxu0 0
      %921 = vmatpush1.bf16.msra.mxu0 0
      %922 = vmatprep.subr.bf16.mxu0 0
      %923 = vmatpush1.bf16.msra.mxu0 0
      %924 = vmatprep.subr.bf16.mxu0 %v894
      %925 = vmatpush1.bf16.msra.mxu0 %v893
      %926 = vmatprep.subr.bf16.mxu0 %v890
      %927 = vmatpush1.bf16.msra.mxu0 %v889
      %928 = vmatprep.subr.bf16.mxu0 %v886
      %929 = vmatpush1.bf16.msra.mxu0 %v885
      %930 = vmatprep.subr.bf16.mxu0 %v882
      %931 = vmatpush1.bf16.msra.mxu0 %v881
      %932 = vmatprep.subr.bf16.mxu0 0
      %933 = vmatpush2.bf16.msra.mxu0 0
      %934 = vmatprep.subr.bf16.mxu0 0
      %935 = vmatpush2.bf16.msra.mxu0 0
      %936 = vmatprep.subr.bf16.mxu0 0
      %937 = vmatpush2.bf16.msra.mxu0 0
      %938 = vmatprep.subr.bf16.mxu0 0
      %939 = vmatpush2.bf16.msra.mxu0 0
      %940 = vmatprep.subr.bf16.mxu0 0
      %941 = vmatpush2.bf16.msra.mxu0 0
      %942 = vmatprep.subr.bf16.mxu0 0
      %943 = vmatpush2.bf16.msra.mxu0 0
      %944 = vmatprep.subr.bf16.mxu0 0
      %945 = vmatpush2.bf16.msra.mxu0 0
      %946 = vmatprep.subr.bf16.mxu0 0
      %947 = vmatpush2.bf16.msra.mxu0 0
      %948 = vmatprep.mubr.bf16.mxu0 0
      %949 = vmatmul.mubr.bf16.gmra.mxu0 %v914
      %v950 = vpop.f32.mrf.mxu0
      %v951 = vadd.f32 %v782, %v950
      %v952 = vpop.f32.mrf.mxu0
      %v953 = vadd.f32 %v784, %v952
      %v954 = vpop.f32.mrf.mxu0
      %v955 = vadd.f32 %v786, %v954
      %v956 = vpop.f32.mrf.mxu0
      %v957 = vadd.f32 %v788, %v956
      %958 = vdwg.mxu0
      %959 = vmatprep.subr.bf16.mxu0 0
      %960 = vmatpush1.bf16.msra.mxu0 0
      %961 = vmatprep.subr.bf16.mxu0 0
      %962 = vmatpush1.bf16.msra.mxu0 0
      %963 = vmatprep.subr.bf16.mxu0 0
      %964 = vmatpush1.bf16.msra.mxu0 0
      %965 = vmatprep.subr.bf16.mxu0 0
      %966 = vmatpush1.bf16.msra.mxu0 0
      %967 = vmatprep.subr.bf16.mxu0 %v896
      %968 = vmatpush1.bf16.msra.mxu0 %v895
      %969 = vmatprep.subr.bf16.mxu0 %v892
      %970 = vmatpush1.bf16.msra.mxu0 %v891
      %971 = vmatprep.subr.bf16.mxu0 %v888
      %972 = vmatpush1.bf16.msra.mxu0 %v887
      %973 = vmatprep.subr.bf16.mxu0 %v884
      %974 = vmatpush1.bf16.msra.mxu0 %v883
      %975 = vmatprep.subr.bf16.mxu0 0
      %976 = vmatpush2.bf16.msra.mxu0 0
      %977 = vmatprep.subr.bf16.mxu0 0
      %978 = vmatpush2.bf16.msra.mxu0 0
      %979 = vmatprep.subr.bf16.mxu0 0
      %980 = vmatpush2.bf16.msra.mxu0 0
      %981 = vmatprep.subr.bf16.mxu0 0
      %982 = vmatpush2.bf16.msra.mxu0 0
      %983 = vmatprep.subr.bf16.mxu0 0
      %984 = vmatpush2.bf16.msra.mxu0 0
      %985 = vmatprep.subr.bf16.mxu0 0
      %986 = vmatpush2.bf16.msra.mxu0 0
      %987 = vmatprep.subr.bf16.mxu0 0
      %988 = vmatpush2.bf16.msra.mxu0 0
      %989 = vmatprep.subr.bf16.mxu0 0
      %990 = vmatpush2.bf16.msra.mxu0 0
      %991 = vmatprep.mubr.bf16.mxu0 0
      %992 = vmatmul.mubr.bf16.gmra.mxu0 %v914
      %v993 = vpop.f32.mrf.mxu0
      %v994 = vadd.f32 %v825, %v993
      %v995 = vpop.f32.mrf.mxu0
      %v996 = vadd.f32 %v827, %v995
      %v997 = vpop.f32.mrf.mxu0
      %v998 = vadd.f32 %v829, %v997
      %v999 = vpop.f32.mrf.mxu0
      %v1000 = vadd.f32 %v831, %v999
      %1001 = vdwg.mxu0
      %v1002 = vld [vmem:[#allocation2 + $0x2] sm:$0xff]
      %v1003 = vld [vmem:[#allocation2 + $0xa] sm:$0xff]
      %v1004 = vpack.c.bf16 %v1003, %v1002
      %s1005 = scalar_lea.vmem %s1, 256
      %v1006 = vld [vmem:[%s1005] sm:$0xff]
      %v1007 = vld [vmem:[%s1005 + $0x8] sm:$0xff]
      %v1008 = vld [vmem:[%s1005 + $0x10] sm:$0xff]
      %v1009 = vld [vmem:[%s1005 + $0x18] sm:$0xff]
      %v1010 = vld [vmem:[%s1005 + $0x20] sm:$0xff]
      %v1011 = vld [vmem:[%s1005 + $0x28] sm:$0xff]
      %v1012 = vld [vmem:[%s1005 + $0x30] sm:$0xff]
      %v1013 = vld [vmem:[%s1005 + $0x38] sm:$0xff]
      %v1014 = vld [vmem:[%s1005 + $0x40] sm:$0xff]
      %v1015 = vld [vmem:[%s1005 + $0x48] sm:$0xff]
      %v1016 = vld [vmem:[%s1005 + $0x50] sm:$0xff]
      %v1017 = vld [vmem:[%s1005 + $0x58] sm:$0xff]
      %v1018 = vld [vmem:[%s1005 + $0x60] sm:$0xff]
      %v1019 = vld [vmem:[%s1005 + $0x68] sm:$0xff]
      %v1020 = vld [vmem:[%s1005 + $0x70] sm:$0xff]
      %v1021 = vld [vmem:[%s1005 + $0x78] sm:$0xff]
      %v1038 = vunpack.c.l.b16 %v1006
      %v1039 = vunpack.c.h.b16 %v1006
      %v1040 = vunpack.c.l.b16 %v1007
      %v1041 = vunpack.c.h.b16 %v1007
      %v1042 = vunpack.c.l.b16 %v1008
      %v1043 = vunpack.c.h.b16 %v1008
      %v1044 = vunpack.c.l.b16 %v1009
      %v1045 = vunpack.c.h.b16 %v1009
      %v1046 = vunpack.c.l.b16 %v1010
      %v1047 = vunpack.c.h.b16 %v1010
      %v1048 = vunpack.c.l.b16 %v1011
      %v1049 = vunpack.c.h.b16 %v1011
      %v1050 = vunpack.c.l.b16 %v1012
      %v1051 = vunpack.c.h.b16 %v1012
      %v1052 = vunpack.c.l.b16 %v1013
      %v1053 = vunpack.c.h.b16 %v1013
      %v1054 = vunpack.c.l.b16 %v1014
      %v1055 = vunpack.c.h.b16 %v1014
      %v1056 = vunpack.c.l.b16 %v1015
      %v1057 = vunpack.c.h.b16 %v1015
      %v1058 = vunpack.c.l.b16 %v1016
      %v1059 = vunpack.c.h.b16 %v1016
      %v1060 = vunpack.c.l.b16 %v1017
      %v1061 = vunpack.c.h.b16 %v1017
      %v1062 = vunpack.c.l.b16 %v1018
      %v1063 = vunpack.c.h.b16 %v1018
      %v1064 = vunpack.c.l.b16 %v1019
      %v1065 = vunpack.c.h.b16 %v1019
      %v1066 = vunpack.c.l.b16 %v1020
      %v1067 = vunpack.c.h.b16 %v1020
      %v1068 = vunpack.c.l.b16 %v1021
      %v1069 = vunpack.c.h.b16 %v1021
      %v1070 = vpack.c.b16 %v1042, %v1038
      %v1071 = vpack.c.b16 %v1043, %v1039
      %v1072 = vpack.c.b16 %v1044, %v1040
      %v1073 = vpack.c.b16 %v1045, %v1041
      %v1074 = vpack.c.b16 %v1050, %v1046
      %v1075 = vpack.c.b16 %v1051, %v1047
      %v1076 = vpack.c.b16 %v1052, %v1048
      %v1077 = vpack.c.b16 %v1053, %v1049
      %v1078 = vpack.c.b16 %v1058, %v1054
      %v1079 = vpack.c.b16 %v1059, %v1055
      %v1080 = vpack.c.b16 %v1060, %v1056
      %v1081 = vpack.c.b16 %v1061, %v1057
      %v1082 = vpack.c.b16 %v1066, %v1062
      %v1083 = vpack.c.b16 %v1067, %v1063
      %v1084 = vpack.c.b16 %v1068, %v1064
      %v1085 = vpack.c.b16 %v1069, %v1065
      %v1103 = vsel %vm622, %v1004, 0
      %1105 = vmatprep.subr.bf16.mxu0 0
      %1106 = vmatpush1.bf16.msra.mxu0 0
      %1107 = vmatprep.subr.bf16.mxu0 0
      %1108 = vmatpush1.bf16.msra.mxu0 0
      %1109 = vmatprep.subr.bf16.mxu0 0
      %1110 = vmatpush1.bf16.msra.mxu0 0
      %1111 = vmatprep.subr.bf16.mxu0 0
      %1112 = vmatpush1.bf16.msra.mxu0 0
      %1113 = vmatprep.subr.bf16.mxu0 %v1083
      %1114 = vmatpush1.bf16.msra.mxu0 %v1082
      %1115 = vmatprep.subr.bf16.mxu0 %v1079
      %1116 = vmatpush1.bf16.msra.mxu0 %v1078
      %1117 = vmatprep.subr.bf16.mxu0 %v1075
      %1118 = vmatpush1.bf16.msra.mxu0 %v1074
      %1119 = vmatprep.subr.bf16.mxu0 %v1071
      %1120 = vmatpush1.bf16.msra.mxu0 %v1070
      %1121 = vmatprep.subr.bf16.mxu0 0
      %1122 = vmatpush2.bf16.msra.mxu0 0
      %1123 = vmatprep.subr.bf16.mxu0 0
      %1124 = vmatpush2.bf16.msra.mxu0 0
      %1125 = vmatprep.subr.bf16.mxu0 0
      %1126 = vmatpush2.bf16.msra.mxu0 0
      %1127 = vmatprep.subr.bf16.mxu0 0
      %1128 = vmatpush2.bf16.msra.mxu0 0
      %1129 = vmatprep.subr.bf16.mxu0 0
      %1130 = vmatpush2.bf16.msra.mxu0 0
      %1131 = vmatprep.subr.bf16.mxu0 0
      %1132 = vmatpush2.bf16.msra.mxu0 0
      %1133 = vmatprep.subr.bf16.mxu0 0
      %1134 = vmatpush2.bf16.msra.mxu0 0
      %1135 = vmatprep.subr.bf16.mxu0 0
      %1136 = vmatpush2.bf16.msra.mxu0 0
      %1137 = vmatprep.mubr.bf16.mxu0 0
      %1138 = vmatmul.mubr.bf16.gmra.mxu0 %v1103
      %v1139 = vpop.f32.mrf.mxu0
      %v1140 = vadd.f32 0.0, %v1139
      %v1141 = vpop.f32.mrf.mxu0
      %v1142 = vadd.f32 0.0, %v1141
      %v1143 = vpop.f32.mrf.mxu0
      %v1144 = vadd.f32 0.0, %v1143
      %v1145 = vpop.f32.mrf.mxu0
      %v1146 = vadd.f32 0.0, %v1145
      %1147 = vdwg.mxu0
      %1148 = vmatprep.subr.bf16.mxu0 0
      %1149 = vmatpush1.bf16.msra.mxu0 0
      %1150 = vmatprep.subr.bf16.mxu0 0
      %1151 = vmatpush1.bf16.msra.mxu0 0
      %1152 = vmatprep.subr.bf16.mxu0 0
      %1153 = vmatpush1.bf16.msra.mxu0 0
      %1154 = vmatprep.subr.bf16.mxu0 0
      %1155 = vmatpush1.bf16.msra.mxu0 0
      %1156 = vmatprep.subr.bf16.mxu0 %v1085
      %1157 = vmatpush1.bf16.msra.mxu0 %v1084
      %1158 = vmatprep.subr.bf16.mxu0 %v1081
      %1159 = vmatpush1.bf16.msra.mxu0 %v1080
      %1160 = vmatprep.subr.bf16.mxu0 %v1077
      %1161 = vmatpush1.bf16.msra.mxu0 %v1076
      %1162 = vmatprep.subr.bf16.mxu0 %v1073
      %1163 = vmatpush1.bf16.msra.mxu0 %v1072
      %1164 = vmatprep.subr.bf16.mxu0 0
      %1165 = vmatpush2.bf16.msra.mxu0 0
      %1166 = vmatprep.subr.bf16.mxu0 0
      %1167 = vmatpush2.bf16.msra.mxu0 0
      %1168 = vmatprep.subr.bf16.mxu0 0
      %1169 = vmatpush2.bf16.msra.mxu0 0
      %1170 = vmatprep.subr.bf16.mxu0 0
      %1171 = vmatpush2.bf16.msra.mxu0 0
      %1172 = vmatprep.subr.bf16.mxu0 0
      %1173 = vmatpush2.bf16.msra.mxu0 0
      %1174 = vmatprep.subr.bf16.mxu0 0
      %1175 = vmatpush2.bf16.msra.mxu0 0
      %1176 = vmatprep.subr.bf16.mxu0 0
      %1177 = vmatpush2.bf16.msra.mxu0 0
      %1178 = vmatprep.subr.bf16.mxu0 0
      %1179 = vmatpush2.bf16.msra.mxu0 0
      %1180 = vmatprep.mubr.bf16.mxu0 0
      %1181 = vmatmul.mubr.bf16.gmra.mxu0 %v1103
      %v1182 = vpop.f32.mrf.mxu0
      %v1183 = vadd.f32 0.0, %v1182
      %v1184 = vpop.f32.mrf.mxu0
      %v1185 = vadd.f32 0.0, %v1184
      %v1186 = vpop.f32.mrf.mxu0
      %v1187 = vadd.f32 0.0, %v1186
      %v1188 = vpop.f32.mrf.mxu0
      %v1189 = vadd.f32 0.0, %v1188
      %1190 = vdwg.mxu0
      %v1191 = vadd.f32 %v951, %v1140
      %v1192 = vadd.f32 %v953, %v1142
      %v1193 = vadd.f32 %v994, %v1183
      %v1194 = vadd.f32 %v996, %v1185
      %v1195 = vadd.f32 %v955, %v1144
      %v1196 = vadd.f32 %v957, %v1146
      %v1197 = vadd.f32 %v998, %v1187
      %v1198 = vadd.f32 %v1000, %v1189
      %v1199 = vld [vmem:[%s2] sm:$0xf]
      %v1201 = vlaneseq
      %v1202 = vshrl.u32 %v1201, 7
      %v1203 = vsub.s32 0, %v1202
      %v1204 = vrot.slane %v1199, %v1203
      %v1205 = vlaneseq
      %v1206 = vshrl.u32 %v1205, 7
      %v1207 = vsub.s32 1, %v1206
      %v1208 = vrot.slane %v1199, %v1207
      %v1209 = vlaneseq
      %v1210 = vshrl.u32 %v1209, 7
      %v1211 = vsub.s32 2, %v1210
      %v1212 = vrot.slane %v1199, %v1211
      %v1213 = vlaneseq
      %v1214 = vshrl.u32 %v1213, 7
      %v1215 = vsub.s32 3, %v1214
      %v1216 = vrot.slane %v1199, %v1215
      %v1221 = vadd.f32 %v1191, %v1204
      %v1222 = vadd.f32 %v1192, %v1208
      %v1223 = vadd.f32 %v1193, %v1212
      %v1224 = vadd.f32 %v1194, %v1216
      %v1225 = vadd.f32 %v1195, %v1204
      %v1226 = vadd.f32 %v1196, %v1208
      %v1227 = vadd.f32 %v1197, %v1212
      %v1228 = vadd.f32 %v1198, %v1216
      %v1229 = vld [vmem:[%s3] sm:$0xf]
      %v1230 = vld [vmem:[%s4] sm:$0xf]
      %v1231 = vadd.f32 %v1221, %v1225
      %v1232 = vrot.slane %v1231, 4
      %v1233 = vadd.f32 %v1231, %v1232
      %v1234 = vrot.slane %v1233, 2
      %v1235 = vadd.f32 %v1233, %v1234
      %v1236 = vrot.slane %v1235, 1
      %v1237 = vadd.f32 %v1235, %v1236
      %v1238 = vadd.f32 %v1222, %v1226
      %v1239 = vrot.slane %v1238, 4
      %v1240 = vadd.f32 %v1238, %v1239
      %v1241 = vrot.slane %v1240, 2
      %v1242 = vadd.f32 %v1240, %v1241
      %v1243 = vrot.slane %v1242, 1
      %v1244 = vadd.f32 %v1242, %v1243
      %v1245 = vadd.f32 %v1223, %v1227
      %v1246 = vrot.slane %v1245, 4
      %v1247 = vadd.f32 %v1245, %v1246
      %v1248 = vrot.slane %v1247, 2
      %v1249 = vadd.f32 %v1247, %v1248
      %v1250 = vrot.slane %v1249, 1
      %v1251 = vadd.f32 %v1249, %v1250
      %v1252 = vadd.f32 %v1224, %v1228
      %v1253 = vrot.slane %v1252, 4
      %v1254 = vadd.f32 %v1252, %v1253
      %v1255 = vrot.slane %v1254, 2
      %v1256 = vadd.f32 %v1254, %v1255
      %v1257 = vrot.slane %v1256, 1
      %v1258 = vadd.f32 %v1256, %v1257
      %1259 = vmatprep.subr.mxu0 %v422
      %1260 = vmatpush1.msra.mxu0 %v421
      %1261 = vmatprep.subr.mxu0 %v418
      %1262 = vmatpush1.msra.mxu0 %v417
      %1263 = vmatprep.subr.mxu0 %v414
      %1264 = vmatpush1.msra.mxu0 %v413
      %1265 = vmatprep.subr.mxu0 %v410
      %1266 = vmatpush1.msra.mxu0 %v409
      %1267 = vmatprep.subr.mxu0 %v406
      %1268 = vmatpush1.msra.mxu0 %v405
      %1269 = vmatprep.subr.mxu0 %v402
      %1270 = vmatpush1.msra.mxu0 %v401
      %1271 = vmatprep.subr.mxu0 %v398
      %1272 = vmatpush1.msra.mxu0 %v397
      %1273 = vmatprep.subr.mxu0 %v394
      %1274 = vmatpush1.msra.mxu0 %v393
      %1275 = vmatprep.subr.mxu0 %v390
      %1276 = vmatpush1.msra.mxu0 %v389
      %1277 = vmatprep.subr.mxu0 %v386
      %1278 = vmatpush1.msra.mxu0 %v385
      %1279 = vmatprep.subr.mxu0 %v382
      %1280 = vmatpush1.msra.mxu0 %v381
      %1281 = vmatprep.subr.mxu0 %v378
      %1282 = vmatpush1.msra.mxu0 %v377
      %1283 = vmatprep.subr.mxu0 %v374
      %1284 = vmatpush1.msra.mxu0 %v373
      %1285 = vmatprep.subr.mxu0 %v370
      %1286 = vmatpush1.msra.mxu0 %v369
      %1287 = vmatprep.subr.mxu0 %v366
      %1288 = vmatpush1.msra.mxu0 %v365
      %1289 = vmatprep.subr.mxu0 %v362
      %1290 = vmatpush1.msra.mxu0 %v361
      %1291 = vmatprep.subr.mxu0 %v486
      %1292 = vmatpush2.msra.mxu0 %v485
      %1293 = vmatprep.subr.mxu0 %v482
      %1294 = vmatpush2.msra.mxu0 %v481
      %1295 = vmatprep.subr.mxu0 %v478
      %1296 = vmatpush2.msra.mxu0 %v477
      %1297 = vmatprep.subr.mxu0 %v474
      %1298 = vmatpush2.msra.mxu0 %v473
      %1299 = vmatprep.subr.mxu0 %v470
      %1300 = vmatpush2.msra.mxu0 %v469
      %1301 = vmatprep.subr.mxu0 %v466
      %1302 = vmatpush2.msra.mxu0 %v465
      %1303 = vmatprep.subr.mxu0 %v462
      %1304 = vmatpush2.msra.mxu0 %v461
      %1305 = vmatprep.subr.mxu0 %v458
      %1306 = vmatpush2.msra.mxu0 %v457
      %1307 = vmatprep.subr.mxu0 %v454
      %1308 = vmatpush2.msra.mxu0 %v453
      %1309 = vmatprep.subr.mxu0 %v450
      %1310 = vmatpush2.msra.mxu0 %v449
      %1311 = vmatprep.subr.mxu0 %v446
      %1312 = vmatpush2.msra.mxu0 %v445
      %1313 = vmatprep.subr.mxu0 %v442
      %1314 = vmatpush2.msra.mxu0 %v441
      %1315 = vmatprep.subr.mxu0 %v438
      %1316 = vmatpush2.msra.mxu0 %v437
      %1317 = vmatprep.subr.mxu0 %v434
      %1318 = vmatpush2.msra.mxu0 %v433
      %1319 = vmatprep.subr.mxu0 %v430
      %1320 = vmatpush2.msra.mxu0 %v429
      %1321 = vmatprep.subr.mxu0 %v426
      %1322 = vmatpush2.msra.mxu0 %v425
      %1323 = vmatprep.mubr.f32.mxu0 %v1244
      %1324 = vmatmul.mubr.f32.gmra.mxu0 %v1237
      %v1325 = vpop.f32.mrf.mxu0
      %v1326 = vadd.f32 0.0, %v1325
      %v1327 = vpop.f32.mrf.mxu0
      %v1328 = vadd.f32 0.0, %v1327
      %1329 = vdwg.mxu0
      %1330 = vmatprep.subr.mxu0 %v550
      %1331 = vmatpush1.msra.mxu0 %v549
      %1332 = vmatprep.subr.mxu0 %v546
      %1333 = vmatpush1.msra.mxu0 %v545
      %1334 = vmatprep.subr.mxu0 %v542
      %1335 = vmatpush1.msra.mxu0 %v541
      %1336 = vmatprep.subr.mxu0 %v538
      %1337 = vmatpush1.msra.mxu0 %v537
      %1338 = vmatprep.subr.mxu0 %v534
      %1339 = vmatpush1.msra.mxu0 %v533
      %1340 = vmatprep.subr.mxu0 %v530
      %1341 = vmatpush1.msra.mxu0 %v529
      %1342 = vmatprep.subr.mxu0 %v526
      %1343 = vmatpush1.msra.mxu0 %v525
      %1344 = vmatprep.subr.mxu0 %v522
      %1345 = vmatpush1.msra.mxu0 %v521
      %1346 = vmatprep.subr.mxu0 %v518
      %1347 = vmatpush1.msra.mxu0 %v517
      %1348 = vmatprep.subr.mxu0 %v514
      %1349 = vmatpush1.msra.mxu0 %v513
      %1350 = vmatprep.subr.mxu0 %v510
      %1351 = vmatpush1.msra.mxu0 %v509
      %1352 = vmatprep.subr.mxu0 %v506
      %1353 = vmatpush1.msra.mxu0 %v505
      %1354 = vmatprep.subr.mxu0 %v502
      %1355 = vmatpush1.msra.mxu0 %v501
      %1356 = vmatprep.subr.mxu0 %v498
      %1357 = vmatpush1.msra.mxu0 %v497
      %1358 = vmatprep.subr.mxu0 %v494
      %1359 = vmatpush1.msra.mxu0 %v493
      %1360 = vmatprep.subr.mxu0 %v490
      %1361 = vmatpush1.msra.mxu0 %v489
      %1362 = vmatprep.subr.mxu0 %v614
      %1363 = vmatpush2.msra.mxu0 %v613
      %1364 = vmatprep.subr.mxu0 %v610
      %1365 = vmatpush2.msra.mxu0 %v609
      %1366 = vmatprep.subr.mxu0 %v606
      %1367 = vmatpush2.msra.mxu0 %v605
      %1368 = vmatprep.subr.mxu0 %v602
      %1369 = vmatpush2.msra.mxu0 %v601
      %1370 = vmatprep.subr.mxu0 %v598
      %1371 = vmatpush2.msra.mxu0 %v597
      %1372 = vmatprep.subr.mxu0 %v594
      %1373 = vmatpush2.msra.mxu0 %v593
      %1374 = vmatprep.subr.mxu0 %v590
      %1375 = vmatpush2.msra.mxu0 %v589
      %1376 = vmatprep.subr.mxu0 %v586
      %1377 = vmatpush2.msra.mxu0 %v585
      %1378 = vmatprep.subr.mxu0 %v582
      %1379 = vmatpush2.msra.mxu0 %v581
      %1380 = vmatprep.subr.mxu0 %v578
      %1381 = vmatpush2.msra.mxu0 %v577
      %1382 = vmatprep.subr.mxu0 %v574
      %1383 = vmatpush2.msra.mxu0 %v573
      %1384 = vmatprep.subr.mxu0 %v570
      %1385 = vmatpush2.msra.mxu0 %v569
      %1386 = vmatprep.subr.mxu0 %v566
      %1387 = vmatpush2.msra.mxu0 %v565
      %1388 = vmatprep.subr.mxu0 %v562
      %1389 = vmatpush2.msra.mxu0 %v561
      %1390 = vmatprep.subr.mxu0 %v558
      %1391 = vmatpush2.msra.mxu0 %v557
      %1392 = vmatprep.subr.mxu0 %v554
      %1393 = vmatpush2.msra.mxu0 %v553
      %1394 = vmatprep.mubr.f32.mxu0 %v1258
      %1395 = vmatmul.mubr.f32.gmra.mxu0 %v1251
      %v1396 = vpop.f32.mrf.mxu0
      %v1397 = vadd.f32 %v1326, %v1396
      %v1398 = vpop.f32.mrf.mxu0
      %v1399 = vadd.f32 %v1328, %v1398
      %1400 = vdwg.mxu0
      %1401 = vmatprep.subr.mxu0 %v424
      %1402 = vmatpush1.msra.mxu0 %v423
      %1403 = vmatprep.subr.mxu0 %v420
      %1404 = vmatpush1.msra.mxu0 %v419
      %1405 = vmatprep.subr.mxu0 %v416
      %1406 = vmatpush1.msra.mxu0 %v415
      %1407 = vmatprep.subr.mxu0 %v412
      %1408 = vmatpush1.msra.mxu0 %v411
      %1409 = vmatprep.subr.mxu0 %v408
      %1410 = vmatpush1.msra.mxu0 %v407
      %1411 = vmatprep.subr.mxu0 %v404
      %1412 = vmatpush1.msra.mxu0 %v403
      %1413 = vmatprep.subr.mxu0 %v400
      %1414 = vmatpush1.msra.mxu0 %v399
      %1415 = vmatprep.subr.mxu0 %v396
      %1416 = vmatpush1.msra.mxu0 %v395
      %1417 = vmatprep.subr.mxu0 %v392
      %1418 = vmatpush1.msra.mxu0 %v391
      %1419 = vmatprep.subr.mxu0 %v388
      %1420 = vmatpush1.msra.mxu0 %v387
      %1421 = vmatprep.subr.mxu0 %v384
      %1422 = vmatpush1.msra.mxu0 %v383
      %1423 = vmatprep.subr.mxu0 %v380
      %1424 = vmatpush1.msra.mxu0 %v379
      %1425 = vmatprep.subr.mxu0 %v376
      %1426 = vmatpush1.msra.mxu0 %v375
      %1427 = vmatprep.subr.mxu0 %v372
      %1428 = vmatpush1.msra.mxu0 %v371
      %1429 = vmatprep.subr.mxu0 %v368
      %1430 = vmatpush1.msra.mxu0 %v367
      %1431 = vmatprep.subr.mxu0 %v364
      %1432 = vmatpush1.msra.mxu0 %v363
      %1433 = vmatprep.subr.mxu0 %v488
      %1434 = vmatpush2.msra.mxu0 %v487
      %1435 = vmatprep.subr.mxu0 %v484
      %1436 = vmatpush2.msra.mxu0 %v483
      %1437 = vmatprep.subr.mxu0 %v480
      %1438 = vmatpush2.msra.mxu0 %v479
      %1439 = vmatprep.subr.mxu0 %v476
      %1440 = vmatpush2.msra.mxu0 %v475
      %1441 = vmatprep.subr.mxu0 %v472
      %1442 = vmatpush2.msra.mxu0 %v471
      %1443 = vmatprep.subr.mxu0 %v468
      %1444 = vmatpush2.msra.mxu0 %v467
      %1445 = vmatprep.subr.mxu0 %v464
      %1446 = vmatpush2.msra.mxu0 %v463
      %1447 = vmatprep.subr.mxu0 %v460
      %1448 = vmatpush2.msra.mxu0 %v459
      %1449 = vmatprep.subr.mxu0 %v456
      %1450 = vmatpush2.msra.mxu0 %v455
      %1451 = vmatprep.subr.mxu0 %v452
      %1452 = vmatpush2.msra.mxu0 %v451
      %1453 = vmatprep.subr.mxu0 %v448
      %1454 = vmatpush2.msra.mxu0 %v447
      %1455 = vmatprep.subr.mxu0 %v444
      %1456 = vmatpush2.msra.mxu0 %v443
      %1457 = vmatprep.subr.mxu0 %v440
      %1458 = vmatpush2.msra.mxu0 %v439
      %1459 = vmatprep.subr.mxu0 %v436
      %1460 = vmatpush2.msra.mxu0 %v435
      %1461 = vmatprep.subr.mxu0 %v432
      %1462 = vmatpush2.msra.mxu0 %v431
      %1463 = vmatprep.subr.mxu0 %v428
      %1464 = vmatpush2.msra.mxu0 %v427
      %1465 = vmatprep.mubr.f32.mxu0 %v1244
      %1466 = vmatmul.mubr.f32.gmra.mxu0 %v1237
      %v1467 = vpop.f32.mrf.mxu0
      %v1468 = vadd.f32 0.0, %v1467
      %v1469 = vpop.f32.mrf.mxu0
      %v1470 = vadd.f32 0.0, %v1469
      %1471 = vdwg.mxu0
      %1472 = vmatprep.subr.mxu0 %v552
      %1473 = vmatpush1.msra.mxu0 %v551
      %1474 = vmatprep.subr.mxu0 %v548
      %1475 = vmatpush1.msra.mxu0 %v547
      %1476 = vmatprep.subr.mxu0 %v544
      %1477 = vmatpush1.msra.mxu0 %v543
      %1478 = vmatprep.subr.mxu0 %v540
      %1479 = vmatpush1.msra.mxu0 %v539
      %1480 = vmatprep.subr.mxu0 %v536
      %1481 = vmatpush1.msra.mxu0 %v535
      %1482 = vmatprep.subr.mxu0 %v532
      %1483 = vmatpush1.msra.mxu0 %v531
      %1484 = vmatprep.subr.mxu0 %v528
      %1485 = vmatpush1.msra.mxu0 %v527
      %1486 = vmatprep.subr.mxu0 %v524
      %1487 = vmatpush1.msra.mxu0 %v523
      %1488 = vmatprep.subr.mxu0 %v520
      %1489 = vmatpush1.msra.mxu0 %v519
      %1490 = vmatprep.subr.mxu0 %v516
      %1491 = vmatpush1.msra.mxu0 %v515
      %1492 = vmatprep.subr.mxu0 %v512
      %1493 = vmatpush1.msra.mxu0 %v511
      %1494 = vmatprep.subr.mxu0 %v508
      %1495 = vmatpush1.msra.mxu0 %v507
      %1496 = vmatprep.subr.mxu0 %v504
      %1497 = vmatpush1.msra.mxu0 %v503
      %1498 = vmatprep.subr.mxu0 %v500
      %1499 = vmatpush1.msra.mxu0 %v499
      %1500 = vmatprep.subr.mxu0 %v496
      %1501 = vmatpush1.msra.mxu0 %v495
      %1502 = vmatprep.subr.mxu0 %v492
      %1503 = vmatpush1.msra.mxu0 %v491
      %1504 = vmatprep.subr.mxu0 %v616
      %1505 = vmatpush2.msra.mxu0 %v615
      %1506 = vmatprep.subr.mxu0 %v612
      %1507 = vmatpush2.msra.mxu0 %v611
      %1508 = vmatprep.subr.mxu0 %v608
      %1509 = vmatpush2.msra.mxu0 %v607
      %1510 = vmatprep.subr.mxu0 %v604
      %1511 = vmatpush2.msra.mxu0 %v603
      %1512 = vmatprep.subr.mxu0 %v600
      %1513 = vmatpush2.msra.mxu0 %v599
      %1514 = vmatprep.subr.mxu0 %v596
      %1515 = vmatpush2.msra.mxu0 %v595
      %1516 = vmatprep.subr.mxu0 %v592
      %1517 = vmatpush2.msra.mxu0 %v591
      %1518 = vmatprep.subr.mxu0 %v588
      %1519 = vmatpush2.msra.mxu0 %v587
      %1520 = vmatprep.subr.mxu0 %v584
      %1521 = vmatpush2.msra.mxu0 %v583
      %1522 = vmatprep.subr.mxu0 %v580
      %1523 = vmatpush2.msra.mxu0 %v579
      %1524 = vmatprep.subr.mxu0 %v576
      %1525 = vmatpush2.msra.mxu0 %v575
      %1526 = vmatprep.subr.mxu0 %v572
      %1527 = vmatpush2.msra.mxu0 %v571
      %1528 = vmatprep.subr.mxu0 %v568
      %1529 = vmatpush2.msra.mxu0 %v567
      %1530 = vmatprep.subr.mxu0 %v564
      %1531 = vmatpush2.msra.mxu0 %v563
      %1532 = vmatprep.subr.mxu0 %v560
      %1533 = vmatpush2.msra.mxu0 %v559
      %1534 = vmatprep.subr.mxu0 %v556
      %1535 = vmatpush2.msra.mxu0 %v555
      %1536 = vmatprep.mubr.f32.mxu0 %v1258
      %1537 = vmatmul.mubr.f32.gmra.mxu0 %v1251
      %v1538 = vpop.f32.mrf.mxu0
      %v1539 = vadd.f32 %v1468, %v1538
      %v1540 = vpop.f32.mrf.mxu0
      %v1541 = vadd.f32 %v1470, %v1540
      %1542 = vdwg.mxu0
      %v1543 = vlaneseq
      %v1544 = vshrl.u32 %v1543, 7
      %v1545 = vsub.s32 0, %v1544
      %v1546 = vrot.slane %v1397, %v1545
      %v1547 = vlaneseq
      %v1548 = vshrl.u32 %v1547, 7
      %v1549 = vsub.s32 0, %v1548
      %v1550 = vrot.slane %v1399, %v1549
      %v1551 = vlaneseq
      %v1552 = vshrl.u32 %v1551, 7
      %v1553 = vsub.s32 0, %v1552
      %v1554 = vrot.slane %v1539, %v1553
      %v1555 = vlaneseq
      %v1556 = vshrl.u32 %v1555, 7
      %v1557 = vsub.s32 0, %v1556
      %v1558 = vrot.slane %v1541, %v1557
      %v1559 = vsub.f32 %v1221, %v1546
      %v1560 = vsub.f32 %v1222, %v1550
      %v1561 = vsub.f32 %v1223, %v1554
      %v1562 = vsub.f32 %v1224, %v1558
      %v1563 = vsub.f32 %v1225, %v1546
      %v1564 = vsub.f32 %v1226, %v1550
      %v1565 = vsub.f32 %v1227, %v1554
      %v1566 = vsub.f32 %v1228, %v1558
      %v1567 = vmul.f32 %v1559, %v1559
      %v1568 = vmul.f32 %v1560, %v1560
      %v1569 = vmul.f32 %v1561, %v1561
      %v1570 = vmul.f32 %v1562, %v1562
      %v1571 = vmul.f32 %v1563, %v1563
      %v1572 = vmul.f32 %v1564, %v1564
      %v1573 = vmul.f32 %v1565, %v1565
      %v1574 = vmul.f32 %v1566, %v1566
      %v1575 = vadd.f32 %v1567, %v1571
      %v1576 = vrot.slane %v1575, 4
      %v1577 = vadd.f32 %v1575, %v1576
      %v1578 = vrot.slane %v1577, 2
      %v1579 = vadd.f32 %v1577, %v1578
      %v1580 = vrot.slane %v1579, 1
      %v1581 = vadd.f32 %v1579, %v1580
      %v1582 = vadd.f32 %v1568, %v1572
      %v1583 = vrot.slane %v1582, 4
      %v1584 = vadd.f32 %v1582, %v1583
      %v1585 = vrot.slane %v1584, 2
      %v1586 = vadd.f32 %v1584, %v1585
      %v1587 = vrot.slane %v1586, 1
      %v1588 = vadd.f32 %v1586, %v1587
      %v1589 = vadd.f32 %v1569, %v1573
      %v1590 = vrot.slane %v1589, 4
      %v1591 = vadd.f32 %v1589, %v1590
      %v1592 = vrot.slane %v1591, 2
      %v1593 = vadd.f32 %v1591, %v1592
      %v1594 = vrot.slane %v1593, 1
      %v1595 = vadd.f32 %v1593, %v1594
      %v1596 = vadd.f32 %v1570, %v1574
      %v1597 = vrot.slane %v1596, 4
      %v1598 = vadd.f32 %v1596, %v1597
      %v1599 = vrot.slane %v1598, 2
      %v1600 = vadd.f32 %v1598, %v1599
      %v1601 = vrot.slane %v1600, 1
      %v1602 = vadd.f32 %v1600, %v1601
      %1603 = vmatprep.subr.mxu0 %v422
      %1604 = vmatpush1.msra.mxu0 %v421
      %1605 = vmatprep.subr.mxu0 %v418
      %1606 = vmatpush1.msra.mxu0 %v417
      %1607 = vmatprep.subr.mxu0 %v414
      %1608 = vmatpush1.msra.mxu0 %v413
      %1609 = vmatprep.subr.mxu0 %v410
      %1610 = vmatpush1.msra.mxu0 %v409
      %1611 = vmatprep.subr.mxu0 %v406
      %1612 = vmatpush1.msra.mxu0 %v405
      %1613 = vmatprep.subr.mxu0 %v402
      %1614 = vmatpush1.msra.mxu0 %v401
      %1615 = vmatprep.subr.mxu0 %v398
      %1616 = vmatpush1.msra.mxu0 %v397
      %1617 = vmatprep.subr.mxu0 %v394
      %1618 = vmatpush1.msra.mxu0 %v393
      %1619 = vmatprep.subr.mxu0 %v390
      %1620 = vmatpush1.msra.mxu0 %v389
      %1621 = vmatprep.subr.mxu0 %v386
      %1622 = vmatpush1.msra.mxu0 %v385
      %1623 = vmatprep.subr.mxu0 %v382
      %1624 = vmatpush1.msra.mxu0 %v381
      %1625 = vmatprep.subr.mxu0 %v378
      %1626 = vmatpush1.msra.mxu0 %v377
      %1627 = vmatprep.subr.mxu0 %v374
      %1628 = vmatpush1.msra.mxu0 %v373
      %1629 = vmatprep.subr.mxu0 %v370
      %1630 = vmatpush1.msra.mxu0 %v369
      %1631 = vmatprep.subr.mxu0 %v366
      %1632 = vmatpush1.msra.mxu0 %v365
      %1633 = vmatprep.subr.mxu0 %v362
      %1634 = vmatpush1.msra.mxu0 %v361
      %1635 = vmatprep.subr.mxu0 %v486
      %1636 = vmatpush2.msra.mxu0 %v485
      %1637 = vmatprep.subr.mxu0 %v482
      %1638 = vmatpush2.msra.mxu0 %v481
      %1639 = vmatprep.subr.mxu0 %v478
      %1640 = vmatpush2.msra.mxu0 %v477
      %1641 = vmatprep.subr.mxu0 %v474
      %1642 = vmatpush2.msra.mxu0 %v473
      %1643 = vmatprep.subr.mxu0 %v470
      %1644 = vmatpush2.msra.mxu0 %v469
      %1645 = vmatprep.subr.mxu0 %v466
      %1646 = vmatpush2.msra.mxu0 %v465
      %1647 = vmatprep.subr.mxu0 %v462
      %1648 = vmatpush2.msra.mxu0 %v461
      %1649 = vmatprep.subr.mxu0 %v458
      %1650 = vmatpush2.msra.mxu0 %v457
      %1651 = vmatprep.subr.mxu0 %v454
      %1652 = vmatpush2.msra.mxu0 %v453
      %1653 = vmatprep.subr.mxu0 %v450
      %1654 = vmatpush2.msra.mxu0 %v449
      %1655 = vmatprep.subr.mxu0 %v446
      %1656 = vmatpush2.msra.mxu0 %v445
      %1657 = vmatprep.subr.mxu0 %v442
      %1658 = vmatpush2.msra.mxu0 %v441
      %1659 = vmatprep.subr.mxu0 %v438
      %1660 = vmatpush2.msra.mxu0 %v437
      %1661 = vmatprep.subr.mxu0 %v434
      %1662 = vmatpush2.msra.mxu0 %v433
      %1663 = vmatprep.subr.mxu0 %v430
      %1664 = vmatpush2.msra.mxu0 %v429
      %1665 = vmatprep.subr.mxu0 %v426
      %1666 = vmatpush2.msra.mxu0 %v425
      %1667 = vmatprep.mubr.f32.mxu0 %v1588
      %1668 = vmatmul.mubr.f32.gmra.mxu0 %v1581
      %v1669 = vpop.f32.mrf.mxu0
      %v1670 = vadd.f32 1e-05, %v1669
      %v1671 = vpop.f32.mrf.mxu0
      %v1672 = vadd.f32 1e-05, %v1671
      %1673 = vdwg.mxu0
      %1674 = vmatprep.subr.mxu0 %v550
      %1675 = vmatpush1.msra.mxu0 %v549
      %1676 = vmatprep.subr.mxu0 %v546
      %1677 = vmatpush1.msra.mxu0 %v545
      %1678 = vmatprep.subr.mxu0 %v542
      %1679 = vmatpush1.msra.mxu0 %v541
      %1680 = vmatprep.subr.mxu0 %v538
      %1681 = vmatpush1.msra.mxu0 %v537
      %1682 = vmatprep.subr.mxu0 %v534
      %1683 = vmatpush1.msra.mxu0 %v533
      %1684 = vmatprep.subr.mxu0 %v530
      %1685 = vmatpush1.msra.mxu0 %v529
      %1686 = vmatprep.subr.mxu0 %v526
      %1687 = vmatpush1.msra.mxu0 %v525
      %1688 = vmatprep.subr.mxu0 %v522
      %1689 = vmatpush1.msra.mxu0 %v521
      %1690 = vmatprep.subr.mxu0 %v518
      %1691 = vmatpush1.msra.mxu0 %v517
      %1692 = vmatprep.subr.mxu0 %v514
      %1693 = vmatpush1.msra.mxu0 %v513
      %1694 = vmatprep.subr.mxu0 %v510
      %1695 = vmatpush1.msra.mxu0 %v509
      %1696 = vmatprep.subr.mxu0 %v506
      %1697 = vmatpush1.msra.mxu0 %v505
      %1698 = vmatprep.subr.mxu0 %v502
      %1699 = vmatpush1.msra.mxu0 %v501
      %1700 = vmatprep.subr.mxu0 %v498
      %1701 = vmatpush1.msra.mxu0 %v497
      %1702 = vmatprep.subr.mxu0 %v494
      %1703 = vmatpush1.msra.mxu0 %v493
      %1704 = vmatprep.subr.mxu0 %v490
      %1705 = vmatpush1.msra.mxu0 %v489
      %1706 = vmatprep.subr.mxu0 %v614
      %1707 = vmatpush2.msra.mxu0 %v613
      %1708 = vmatprep.subr.mxu0 %v610
      %1709 = vmatpush2.msra.mxu0 %v609
      %1710 = vmatprep.subr.mxu0 %v606
      %1711 = vmatpush2.msra.mxu0 %v605
      %1712 = vmatprep.subr.mxu0 %v602
      %1713 = vmatpush2.msra.mxu0 %v601
      %1714 = vmatprep.subr.mxu0 %v598
      %1715 = vmatpush2.msra.mxu0 %v597
      %1716 = vmatprep.subr.mxu0 %v594
      %1717 = vmatpush2.msra.mxu0 %v593
      %1718 = vmatprep.subr.mxu0 %v590
      %1719 = vmatpush2.msra.mxu0 %v589
      %1720 = vmatprep.subr.mxu0 %v586
      %1721 = vmatpush2.msra.mxu0 %v585
      %1722 = vmatprep.subr.mxu0 %v582
      %1723 = vmatpush2.msra.mxu0 %v581
      %1724 = vmatprep.subr.mxu0 %v578
      %1725 = vmatpush2.msra.mxu0 %v577
      %1726 = vmatprep.subr.mxu0 %v574
      %1727 = vmatpush2.msra.mxu0 %v573
      %1728 = vmatprep.subr.mxu0 %v570
      %1729 = vmatpush2.msra.mxu0 %v569
      %1730 = vmatprep.subr.mxu0 %v566
      %1731 = vmatpush2.msra.mxu0 %v565
      %1732 = vmatprep.subr.mxu0 %v562
      %1733 = vmatpush2.msra.mxu0 %v561
      %1734 = vmatprep.subr.mxu0 %v558
      %1735 = vmatpush2.msra.mxu0 %v557
      %1736 = vmatprep.subr.mxu0 %v554
      %1737 = vmatpush2.msra.mxu0 %v553
      %1738 = vmatprep.mubr.f32.mxu0 %v1602
      %1739 = vmatmul.mubr.f32.gmra.mxu0 %v1595
      %v1740 = vpop.f32.mrf.mxu0
      %v1741 = vadd.f32 %v1670, %v1740
      %v1742 = vpop.f32.mrf.mxu0
      %v1743 = vadd.f32 %v1672, %v1742
      %1744 = vdwg.mxu0
      %1745 = vmatprep.subr.mxu0 %v424
      %1746 = vmatpush1.msra.mxu0 %v423
      %1747 = vmatprep.subr.mxu0 %v420
      %1748 = vmatpush1.msra.mxu0 %v419
      %1749 = vmatprep.subr.mxu0 %v416
      %1750 = vmatpush1.msra.mxu0 %v415
      %1751 = vmatprep.subr.mxu0 %v412
      %1752 = vmatpush1.msra.mxu0 %v411
      %1753 = vmatprep.subr.mxu0 %v408
      %1754 = vmatpush1.msra.mxu0 %v407
      %1755 = vmatprep.subr.mxu0 %v404
      %1756 = vmatpush1.msra.mxu0 %v403
      %1757 = vmatprep.subr.mxu0 %v400
      %1758 = vmatpush1.msra.mxu0 %v399
      %1759 = vmatprep.subr.mxu0 %v396
      %1760 = vmatpush1.msra.mxu0 %v395
      %1761 = vmatprep.subr.mxu0 %v392
      %1762 = vmatpush1.msra.mxu0 %v391
      %1763 = vmatprep.subr.mxu0 %v388
      %1764 = vmatpush1.msra.mxu0 %v387
      %1765 = vmatprep.subr.mxu0 %v384
      %1766 = vmatpush1.msra.mxu0 %v383
      %1767 = vmatprep.subr.mxu0 %v380
      %1768 = vmatpush1.msra.mxu0 %v379
      %1769 = vmatprep.subr.mxu0 %v376
      %1770 = vmatpush1.msra.mxu0 %v375
      %1771 = vmatprep.subr.mxu0 %v372
      %1772 = vmatpush1.msra.mxu0 %v371
      %1773 = vmatprep.subr.mxu0 %v368
      %1774 = vmatpush1.msra.mxu0 %v367
      %1775 = vmatprep.subr.mxu0 %v364
      %1776 = vmatpush1.msra.mxu0 %v363
      %1777 = vmatprep.subr.mxu0 %v488
      %1778 = vmatpush2.msra.mxu0 %v487
      %1779 = vmatprep.subr.mxu0 %v484
      %1780 = vmatpush2.msra.mxu0 %v483
      %1781 = vmatprep.subr.mxu0 %v480
      %1782 = vmatpush2.msra.mxu0 %v479
      %1783 = vmatprep.subr.mxu0 %v476
      %1784 = vmatpush2.msra.mxu0 %v475
      %1785 = vmatprep.subr.mxu0 %v472
      %1786 = vmatpush2.msra.mxu0 %v471
      %1787 = vmatprep.subr.mxu0 %v468
      %1788 = vmatpush2.msra.mxu0 %v467
      %1789 = vmatprep.subr.mxu0 %v464
      %1790 = vmatpush2.msra.mxu0 %v463
      %1791 = vmatprep.subr.mxu0 %v460
      %1792 = vmatpush2.msra.mxu0 %v459
      %1793 = vmatprep.subr.mxu0 %v456
      %1794 = vmatpush2.msra.mxu0 %v455
      %1795 = vmatprep.subr.mxu0 %v452
      %1796 = vmatpush2.msra.mxu0 %v451
      %1797 = vmatprep.subr.mxu0 %v448
      %1798 = vmatpush2.msra.mxu0 %v447
      %1799 = vmatprep.subr.mxu0 %v444
      %1800 = vmatpush2.msra.mxu0 %v443
      %1801 = vmatprep.subr.mxu0 %v440
      %1802 = vmatpush2.msra.mxu0 %v439
      %1803 = vmatprep.subr.mxu0 %v436
      %1804 = vmatpush2.msra.mxu0 %v435
      %1805 = vmatprep.subr.mxu0 %v432
      %1806 = vmatpush2.msra.mxu0 %v431
      %1807 = vmatprep.subr.mxu0 %v428
      %1808 = vmatpush2.msra.mxu0 %v427
      %1809 = vmatprep.mubr.f32.mxu0 %v1588
      %1810 = vmatmul.mubr.f32.gmra.mxu0 %v1581
      %v1811 = vpop.f32.mrf.mxu0
      %v1812 = vadd.f32 1e-05, %v1811
      %v1813 = vpop.f32.mrf.mxu0
      %v1814 = vadd.f32 1e-05, %v1813
      %1815 = vdwg.mxu0
      %1816 = vmatprep.subr.mxu0 %v552
      %1817 = vmatpush1.msra.mxu0 %v551
      %1818 = vmatprep.subr.mxu0 %v548
      %1819 = vmatpush1.msra.mxu0 %v547
      %1820 = vmatprep.subr.mxu0 %v544
      %1821 = vmatpush1.msra.mxu0 %v543
      %1822 = vmatprep.subr.mxu0 %v540
      %1823 = vmatpush1.msra.mxu0 %v539
      %1824 = vmatprep.subr.mxu0 %v536
      %1825 = vmatpush1.msra.mxu0 %v535
      %1826 = vmatprep.subr.mxu0 %v532
      %1827 = vmatpush1.msra.mxu0 %v531
      %1828 = vmatprep.subr.mxu0 %v528
      %1829 = vmatpush1.msra.mxu0 %v527
      %1830 = vmatprep.subr.mxu0 %v524
      %1831 = vmatpush1.msra.mxu0 %v523
      %1832 = vmatprep.subr.mxu0 %v520
      %1833 = vmatpush1.msra.mxu0 %v519
      %1834 = vmatprep.subr.mxu0 %v516
      %1835 = vmatpush1.msra.mxu0 %v515
      %1836 = vmatprep.subr.mxu0 %v512
      %1837 = vmatpush1.msra.mxu0 %v511
      %1838 = vmatprep.subr.mxu0 %v508
      %1839 = vmatpush1.msra.mxu0 %v507
      %1840 = vmatprep.subr.mxu0 %v504
      %1841 = vmatpush1.msra.mxu0 %v503
      %1842 = vmatprep.subr.mxu0 %v500
      %1843 = vmatpush1.msra.mxu0 %v499
      %1844 = vmatprep.subr.mxu0 %v496
      %1845 = vmatpush1.msra.mxu0 %v495
      %1846 = vmatprep.subr.mxu0 %v492
      %1847 = vmatpush1.msra.mxu0 %v491
      %1848 = vmatprep.subr.mxu0 %v616
      %1849 = vmatpush2.msra.mxu0 %v615
      %1850 = vmatprep.subr.mxu0 %v612
      %1851 = vmatpush2.msra.mxu0 %v611
      %1852 = vmatprep.subr.mxu0 %v608
      %1853 = vmatpush2.msra.mxu0 %v607
      %1854 = vmatprep.subr.mxu0 %v604
      %1855 = vmatpush2.msra.mxu0 %v603
      %1856 = vmatprep.subr.mxu0 %v600
      %1857 = vmatpush2.msra.mxu0 %v599
      %1858 = vmatprep.subr.mxu0 %v596
      %1859 = vmatpush2.msra.mxu0 %v595
      %1860 = vmatprep.subr.mxu0 %v592
      %1861 = vmatpush2.msra.mxu0 %v591
      %1862 = vmatprep.subr.mxu0 %v588
      %1863 = vmatpush2.msra.mxu0 %v587
      %1864 = vmatprep.subr.mxu0 %v584
      %1865 = vmatpush2.msra.mxu0 %v583
      %1866 = vmatprep.subr.mxu0 %v580
      %1867 = vmatpush2.msra.mxu0 %v579
      %1868 = vmatprep.subr.mxu0 %v576
      %1869 = vmatpush2.msra.mxu0 %v575
      %1870 = vmatprep.subr.mxu0 %v572
      %1871 = vmatpush2.msra.mxu0 %v571
      %1872 = vmatprep.subr.mxu0 %v568
      %1873 = vmatpush2.msra.mxu0 %v567
      %1874 = vmatprep.subr.mxu0 %v564
      %1875 = vmatpush2.msra.mxu0 %v563
      %1876 = vmatprep.subr.mxu0 %v560
      %1877 = vmatpush2.msra.mxu0 %v559
      %1878 = vmatprep.subr.mxu0 %v556
      %1879 = vmatpush2.msra.mxu0 %v555
      %1880 = vmatprep.mubr.f32.mxu0 %v1602
      %1881 = vmatmul.mubr.f32.gmra.mxu0 %v1595
      %v1882 = vpop.f32.mrf.mxu0
      %v1883 = vadd.f32 %v1812, %v1882
      %v1884 = vpop.f32.mrf.mxu0
      %v1885 = vadd.f32 %v1814, %v1884
      %1886 = vdwg.mxu0
      %v1887 = vrsqrt.pop %v1741
      %v1888 = vrsqrt.pop %v1743
      %v1889 = vrsqrt.pop %v1883
      %v1890 = vrsqrt.pop %v1885
      %v1892 = vlaneseq
      %v1893 = vshrl.u32 %v1892, 7
      %v1894 = vsub.s32 0, %v1893
      %v1895 = vrot.slane %v1229, %v1894
      %v1896 = vlaneseq
      %v1897 = vshrl.u32 %v1896, 7
      %v1898 = vsub.s32 1, %v1897
      %v1899 = vrot.slane %v1229, %v1898
      %v1900 = vlaneseq
      %v1901 = vshrl.u32 %v1900, 7
      %v1902 = vsub.s32 2, %v1901
      %v1903 = vrot.slane %v1229, %v1902
      %v1904 = vlaneseq
      %v1905 = vshrl.u32 %v1904, 7
      %v1906 = vsub.s32 3, %v1905
      %v1907 = vrot.slane %v1229, %v1906
      %v1912 = vmul.f32 %v1887, %v1895
      %v1913 = vmul.f32 %v1888, %v1899
      %v1914 = vmul.f32 %v1889, %v1903
      %v1915 = vmul.f32 %v1890, %v1907
      %v1916 = vlaneseq
      %v1917 = vshrl.u32 %v1916, 7
      %v1918 = vsub.s32 0, %v1917
      %v1919 = vrot.slane %v1912, %v1918
      %v1920 = vlaneseq
      %v1921 = vshrl.u32 %v1920, 7
      %v1922 = vsub.s32 0, %v1921
      %v1923 = vrot.slane %v1913, %v1922
      %v1924 = vlaneseq
      %v1925 = vshrl.u32 %v1924, 7
      %v1926 = vsub.s32 0, %v1925
      %v1927 = vrot.slane %v1914, %v1926
      %v1928 = vlaneseq
      %v1929 = vshrl.u32 %v1928, 7
      %v1930 = vsub.s32 0, %v1929
      %v1931 = vrot.slane %v1915, %v1930
      %v1932 = vmul.f32 %v1559, %v1919
      %v1933 = vmul.f32 %v1560, %v1923
      %v1934 = vmul.f32 %v1561, %v1927
      %v1935 = vmul.f32 %v1562, %v1931
      %v1936 = vmul.f32 %v1563, %v1919
      %v1937 = vmul.f32 %v1564, %v1923
      %v1938 = vmul.f32 %v1565, %v1927
      %v1939 = vmul.f32 %v1566, %v1931
      %v1941 = vlaneseq
      %v1942 = vshrl.u32 %v1941, 7
      %v1943 = vsub.s32 0, %v1942
      %v1944 = vrot.slane %v1230, %v1943
      %v1945 = vlaneseq
      %v1946 = vshrl.u32 %v1945, 7
      %v1947 = vsub.s32 1, %v1946
      %v1948 = vrot.slane %v1230, %v1947
      %v1949 = vlaneseq
      %v1950 = vshrl.u32 %v1949, 7
      %v1951 = vsub.s32 2, %v1950
      %v1952 = vrot.slane %v1230, %v1951
      %v1953 = vlaneseq
      %v1954 = vshrl.u32 %v1953, 7
      %v1955 = vsub.s32 3, %v1954
      %v1956 = vrot.slane %v1230, %v1955
      %v1961 = vadd.f32 %v1932, %v1944
      %v1962 = vadd.f32 %v1933, %v1948
      %v1963 = vadd.f32 %v1934, %v1952
      %v1964 = vadd.f32 %v1935, %v1956
      %v1965 = vadd.f32 %v1936, %v1944
      %v1966 = vadd.f32 %v1937, %v1948
      %v1967 = vadd.f32 %v1938, %v1952
      %v1968 = vadd.f32 %v1939, %v1956
      %v1969 = vmul.f32 %v1961, 0.5
      %v1970 = vmul.f32 %v1962, 0.5
      %v1971 = vmul.f32 %v1963, 0.5
      %v1972 = vmul.f32 %v1964, 0.5
      %v1973 = vmul.f32 %v1965, 0.5
      %v1974 = vmul.f32 %v1966, 0.5
      %v1975 = vmul.f32 %v1967, 0.5
      %v1976 = vmul.f32 %v1968, 0.5
      %v1977 = vmul.f32 %v1961, 0.70710677
      %v1978 = vmul.f32 %v1962, 0.70710677
      %v1979 = vmul.f32 %v1963, 0.70710677
      %v1980 = vmul.f32 %v1964, 0.70710677
      %v1981 = vmul.f32 %v1965, 0.70710677
      %v1982 = vmul.f32 %v1966, 0.70710677
      %v1983 = vmul.f32 %v1967, 0.70710677
      %v1984 = vmul.f32 %v1968, 0.70710677
      %v1985 = verf.f32.pop %v1977
      %v1986 = verf.f32.pop %v1978
      %v1987 = verf.f32.pop %v1979
      %v1988 = verf.f32.pop %v1980
      %v1989 = verf.f32.pop %v1981
      %v1990 = verf.f32.pop %v1982
      %v1991 = verf.f32.pop %v1983
      %v1992 = verf.f32.pop %v1984
      %v1993 = vadd.f32 %v1985, 1.0
      %v1994 = vadd.f32 %v1986, 1.0
      %v1995 = vadd.f32 %v1987, 1.0
      %v1996 = vadd.f32 %v1988, 1.0
      %v1997 = vadd.f32 %v1989, 1.0
      %v1998 = vadd.f32 %v1990, 1.0
      %v1999 = vadd.f32 %v1991, 1.0
      %v2000 = vadd.f32 %v1992, 1.0
      %v2001 = vmul.f32 %v1969, %v1993
      %v2002 = vmul.f32 %v1970, %v1994
      %v2003 = vmul.f32 %v1971, %v1995
      %v2004 = vmul.f32 %v1972, %v1996
      %v2005 = vmul.f32 %v1973, %v1997
      %v2006 = vmul.f32 %v1974, %v1998
      %v2007 = vmul.f32 %v1975, %v1999
      %v2008 = vmul.f32 %v1976, %v2000
      %v2009 = vlaneseq
      %vm2010 = vcmp.ge.s32.totalorder %v2009, 0
      %vm2011 = vcmp.lt.s32.totalorder %v2009, 512
      %vm2012 = vmand %vm2010, %vm2011
      %2013 = vst.msk [vmem:[#allocation3] ss:$8 sm:$0xf] %vm2012, 0.0
      %2014 = vst.msk [vmem:[#allocation3] ss:$8 sm:$0x0] %vm2012, 0.0
      %s2015 = scalar_lea.vmem [#allocation3], 65
      %2016 = vst.msk [vmem:[%s2015] ss:$8 sm:$0xf] %vm2012, 0.0
      %2017 = vst.msk [vmem:[%s2015] ss:$8 sm:$0x0] %vm2012, 0.0
      %vm2026 = vcmask 1040384
      %v2027 = vrot.slane %v2001, 7
      %v2028 = vrot.slane %v2002, 7
      %v2029 = vrot.slane %v2003, 7
      %v2030 = vrot.slane %v2004, 7
      %v2031 = vrot.slane %v2005, 7
      %v2032 = vsel %vm2026, %v2027, %v2031
      %v2033 = vrot.slane %v2006, 7
      %v2034 = vsel %vm2026, %v2028, %v2033
      %v2035 = vrot.slane %v2007, 7
      %v2036 = vsel %vm2026, %v2029, %v2035
      %v2037 = vrot.slane %v2008, 7
      %v2038 = vsel %vm2026, %v2030, %v2037
      %2051 = vst [vmem:[#allocation3] sm:$0xfe] %v2027
      %2052 = vst [vmem:[#allocation3 + $0x8] sm:$0xfe] %v2028
      %2053 = vst [vmem:[#allocation3 + $0x10] sm:$0xfe] %v2029
      %2054 = vst [vmem:[#allocation3 + $0x18] sm:$0xfe] %v2030
      %2055 = vst [vmem:[#allocation3 + $0x20] sm:$0xff] %v2032
      %2056 = vst [vmem:[#allocation3 + $0x28] sm:$0xff] %v2034
      %2057 = vst [vmem:[#allocation3 + $0x30] sm:$0xff] %v2036
      %2058 = vst [vmem:[#allocation3 + $0x38] sm:$0xff] %v2038
      %2059 = vst [vmem:[#allocation3 + $0x40] sm:$0x1] %v2031
      %2060 = vst [vmem:[#allocation3 + $0x48] sm:$0x1] %v2033
      %2061 = vst [vmem:[#allocation3 + $0x50] sm:$0x1] %v2035
      %2062 = vst [vmem:[#allocation3 + $0x58] sm:$0x1] %v2037
      %v2063 = vld [vmem:[#allocation3] sm:$0xff]
      %v2064 = vld [vmem:[#allocation3 + $0x8] sm:$0xff]
      %v2065 = vld [vmem:[#allocation3 + $0x10] sm:$0xff]
      %v2066 = vld [vmem:[#allocation3 + $0x18] sm:$0xff]
      %v2067 = vld [vmem:[#allocation3 + $0x20] sm:$0xff]
      %v2068 = vld [vmem:[#allocation3 + $0x28] sm:$0xff]
      %v2069 = vld [vmem:[#allocation3 + $0x30] sm:$0xff]
      %v2070 = vld [vmem:[#allocation3 + $0x38] sm:$0xff]
      %v2071 = vpack.c.bf16 %v2067, %v2063
      %v2072 = vpack.c.bf16 %v2068, %v2064
      %v2073 = vpack.c.bf16 %v2069, %v2065
      %v2074 = vpack.c.bf16 %v2070, %v2066
      %v2075 = vld [vmem:[%s5] sm:$0xff]
      %v2076 = vld [vmem:[%s5 + $0x8] sm:$0xff]
      %v2077 = vld [vmem:[%s5 + $0x10] sm:$0xff]
      %v2078 = vld [vmem:[%s5 + $0x18] sm:$0xff]
      %v2079 = vld [vmem:[%s5 + $0x20] sm:$0xff]
      %v2080 = vld [vmem:[%s5 + $0x28] sm:$0xff]
      %v2081 = vld [vmem:[%s5 + $0x30] sm:$0xff]
      %v2082 = vld [vmem:[%s5 + $0x38] sm:$0xff]
      %v2083 = vld [vmem:[%s5 + $0x40] sm:$0xff]
      %v2084 = vld [vmem:[%s5 + $0x48] sm:$0xff]
      %v2085 = vld [vmem:[%s5 + $0x50] sm:$0xff]
      %v2086 = vld [vmem:[%s5 + $0x58] sm:$0xff]
      %v2087 = vld [vmem:[%s5 + $0x60] sm:$0xff]
      %v2088 = vld [vmem:[%s5 + $0x68] sm:$0xff]
      %v2089 = vld [vmem:[%s5 + $0x70] sm:$0xff]
      %v2090 = vld [vmem:[%s5 + $0x78] sm:$0xff]
      %v2091 = vld [vmem:[%s5 + $0x80] sm:$0xff]
      %v2092 = vld [vmem:[%s5 + $0x88] sm:$0xff]
      %v2093 = vld [vmem:[%s5 + $0x90] sm:$0xff]
      %v2094 = vld [vmem:[%s5 + $0x98] sm:$0xff]
      %v2095 = vld [vmem:[%s5 + $0xa0] sm:$0xff]
      %v2096 = vld [vmem:[%s5 + $0xa8] sm:$0xff]
      %v2097 = vld [vmem:[%s5 + $0xb0] sm:$0xff]
      %v2098 = vld [vmem:[%s5 + $0xb8] sm:$0xff]
      %v2099 = vld [vmem:[%s5 + $0xc0] sm:$0xff]
      %v2100 = vld [vmem:[%s5 + $0xc8] sm:$0xff]
      %v2101 = vld [vmem:[%s5 + $0xd0] sm:$0xff]
      %v2102 = vld [vmem:[%s5 + $0xd8] sm:$0xff]
      %v2103 = vld [vmem:[%s5 + $0xe0] sm:$0xff]
      %v2104 = vld [vmem:[%s5 + $0xe8] sm:$0xff]
      %v2105 = vld [vmem:[%s5 + $0xf0] sm:$0xff]
      %v2106 = vld [vmem:[%s5 + $0xf8] sm:$0xff]
      %v2107 = vld [vmem:[%s5 + $0x100] sm:$0xff]
      %v2108 = vld [vmem:[%s5 + $0x108] sm:$0xff]
      %v2109 = vld [vmem:[%s5 + $0x110] sm:$0xff]
      %v2110 = vld [vmem:[%s5 + $0x118] sm:$0xff]
      %v2111 = vld [vmem:[%s5 + $0x120] sm:$0xff]
      %v2112 = vld [vmem:[%s5 + $0x128] sm:$0xff]
      %v2113 = vld [vmem:[%s5 + $0x130] sm:$0xff]
      %v2114 = vld [vmem:[%s5 + $0x138] sm:$0xff]
      %v2115 = vld [vmem:[%s5 + $0x140] sm:$0xff]
      %v2116 = vld [vmem:[%s5 + $0x148] sm:$0xff]
      %v2117 = vld [vmem:[%s5 + $0x150] sm:$0xff]
      %v2118 = vld [vmem:[%s5 + $0x158] sm:$0xff]
      %v2119 = vld [vmem:[%s5 + $0x160] sm:$0xff]
      %v2120 = vld [vmem:[%s5 + $0x168] sm:$0xff]
      %v2121 = vld [vmem:[%s5 + $0x170] sm:$0xff]
      %v2122 = vld [vmem:[%s5 + $0x178] sm:$0xff]
      %v2123 = vld [vmem:[%s5 + $0x180] sm:$0xff]
      %v2124 = vld [vmem:[%s5 + $0x188] sm:$0xff]
      %v2125 = vld [vmem:[%s5 + $0x190] sm:$0xff]
      %v2126 = vld [vmem:[%s5 + $0x198] sm:$0xff]
      %v2127 = vld [vmem:[%s5 + $0x1a0] sm:$0xff]
      %v2128 = vld [vmem:[%s5 + $0x1a8] sm:$0xff]
      %v2129 = vld [vmem:[%s5 + $0x1b0] sm:$0xff]
      %v2130 = vld [vmem:[%s5 + $0x1b8] sm:$0xff]
      %v2131 = vld [vmem:[%s5 + $0x1c0] sm:$0xff]
      %v2132 = vld [vmem:[%s5 + $0x1c8] sm:$0xff]
      %v2133 = vld [vmem:[%s5 + $0x1d0] sm:$0xff]
      %v2134 = vld [vmem:[%s5 + $0x1d8] sm:$0xff]
      %v2135 = vld [vmem:[%s5 + $0x1e0] sm:$0xff]
      %v2136 = vld [vmem:[%s5 + $0x1e8] sm:$0xff]
      %v2137 = vld [vmem:[%s5 + $0x1f0] sm:$0xff]
      %v2138 = vld [vmem:[%s5 + $0x1f8] sm:$0xff]
      %v2139 = vld [vmem:[%s5 + $0x200] sm:$0xff]
      %v2140 = vld [vmem:[%s5 + $0x208] sm:$0xff]
      %v2141 = vld [vmem:[%s5 + $0x210] sm:$0xff]
      %v2142 = vld [vmem:[%s5 + $0x218] sm:$0xff]
      %v2143 = vld [vmem:[%s5 + $0x220] sm:$0xff]
      %v2144 = vld [vmem:[%s5 + $0x228] sm:$0xff]
      %v2145 = vld [vmem:[%s5 + $0x230] sm:$0xff]
      %v2146 = vld [vmem:[%s5 + $0x238] sm:$0xff]
      %v2147 = vld [vmem:[%s5 + $0x240] sm:$0xff]
      %v2148 = vld [vmem:[%s5 + $0x248] sm:$0xff]
      %v2149 = vld [vmem:[%s5 + $0x250] sm:$0xff]
      %v2150 = vld [vmem:[%s5 + $0x258] sm:$0xff]
      %v2151 = vld [vmem:[%s5 + $0x260] sm:$0xff]
      %v2152 = vld [vmem:[%s5 + $0x268] sm:$0xff]
      %v2153 = vld [vmem:[%s5 + $0x270] sm:$0xff]
      %v2154 = vld [vmem:[%s5 + $0x278] sm:$0xff]
      %v2155 = vld [vmem:[%s5 + $0x280] sm:$0xff]
      %v2156 = vld [vmem:[%s5 + $0x288] sm:$0xff]
      %v2157 = vld [vmem:[%s5 + $0x290] sm:$0xff]
      %v2158 = vld [vmem:[%s5 + $0x298] sm:$0xff]
      %v2159 = vld [vmem:[%s5 + $0x2a0] sm:$0xff]
      %v2160 = vld [vmem:[%s5 + $0x2a8] sm:$0xff]
      %v2161 = vld [vmem:[%s5 + $0x2b0] sm:$0xff]
      %v2162 = vld [vmem:[%s5 + $0x2b8] sm:$0xff]
      %v2163 = vld [vmem:[%s5 + $0x2c0] sm:$0xff]
      %v2164 = vld [vmem:[%s5 + $0x2c8] sm:$0xff]
      %v2165 = vld [vmem:[%s5 + $0x2d0] sm:$0xff]
      %v2166 = vld [vmem:[%s5 + $0x2d8] sm:$0xff]
      %v2167 = vld [vmem:[%s5 + $0x2e0] sm:$0xff]
      %v2168 = vld [vmem:[%s5 + $0x2e8] sm:$0xff]
      %v2169 = vld [vmem:[%s5 + $0x2f0] sm:$0xff]
      %v2170 = vld [vmem:[%s5 + $0x2f8] sm:$0xff]
      %v2171 = vld [vmem:[%s5 + $0x300] sm:$0xff]
      %v2172 = vld [vmem:[%s5 + $0x308] sm:$0xff]
      %v2173 = vld [vmem:[%s5 + $0x310] sm:$0xff]
      %v2174 = vld [vmem:[%s5 + $0x318] sm:$0xff]
      %v2175 = vld [vmem:[%s5 + $0x320] sm:$0xff]
      %v2176 = vld [vmem:[%s5 + $0x328] sm:$0xff]
      %v2177 = vld [vmem:[%s5 + $0x330] sm:$0xff]
      %v2178 = vld [vmem:[%s5 + $0x338] sm:$0xff]
      %v2179 = vld [vmem:[%s5 + $0x340] sm:$0xff]
      %v2180 = vld [vmem:[%s5 + $0x348] sm:$0xff]
      %v2181 = vld [vmem:[%s5 + $0x350] sm:$0xff]
      %v2182 = vld [vmem:[%s5 + $0x358] sm:$0xff]
      %v2183 = vld [vmem:[%s5 + $0x360] sm:$0xff]
      %v2184 = vld [vmem:[%s5 + $0x368] sm:$0xff]
      %v2185 = vld [vmem:[%s5 + $0x370] sm:$0xff]
      %v2186 = vld [vmem:[%s5 + $0x378] sm:$0xff]
      %v2187 = vld [vmem:[%s5 + $0x380] sm:$0xff]
      %v2188 = vld [vmem:[%s5 + $0x388] sm:$0xff]
      %v2189 = vld [vmem:[%s5 + $0x390] sm:$0xff]
      %v2190 = vld [vmem:[%s5 + $0x398] sm:$0xff]
      %v2191 = vld [vmem:[%s5 + $0x3a0] sm:$0xff]
      %v2192 = vld [vmem:[%s5 + $0x3a8] sm:$0xff]
      %v2193 = vld [vmem:[%s5 + $0x3b0] sm:$0xff]
      %v2194 = vld [vmem:[%s5 + $0x3b8] sm:$0xff]
      %v2195 = vld [vmem:[%s5 + $0x3c0] sm:$0xff]
      %v2196 = vld [vmem:[%s5 + $0x3c8] sm:$0xff]
      %v2197 = vld [vmem:[%s5 + $0x3d0] sm:$0xff]
      %v2198 = vld [vmem:[%s5 + $0x3d8] sm:$0xff]
      %v2199 = vld [vmem:[%s5 + $0x3e0] sm:$0xff]
      %v2200 = vld [vmem:[%s5 + $0x3e8] sm:$0xff]
      %v2201 = vld [vmem:[%s5 + $0x3f0] sm:$0xff]
      %v2202 = vld [vmem:[%s5 + $0x3f8] sm:$0xff]
      %v2203 = vld [vmem:[#allocation3] sm:$0xfe]
      %v2204 = vld [vmem:[#allocation3 + $0x8] sm:$0xfe]
      %v2205 = vld [vmem:[#allocation3 + $0x10] sm:$0xfe]
      %v2206 = vld [vmem:[#allocation3 + $0x18] sm:$0xfe]
      %v2207 = vld [vmem:[#allocation3 + $0x40] sm:$0x1]
      %v2208 = vld [vmem:[#allocation3 + $0x48] sm:$0x1]
      %v2209 = vld [vmem:[#allocation3 + $0x50] sm:$0x1]
      %v2210 = vld [vmem:[#allocation3 + $0x58] sm:$0x1]
      %v2211 = vpack.c.bf16 %v2067, %v2203
      %v2212 = vpack.c.bf16 %v2068, %v2204
      %v2213 = vpack.c.bf16 %v2069, %v2205
      %v2214 = vpack.c.bf16 %v2070, %v2206
      %v2215 = vpack.c.bf16 %v2207, %v2207
      %v2216 = vpack.c.bf16 %v2208, %v2208
      %v2217 = vpack.c.bf16 %v2209, %v2209
      %v2218 = vpack.c.bf16 %v2210, %v2210
      %s2219 = scalar_lea.vmem %s5, 1024
      %v2220 = vld [vmem:[%s2219] sm:$0xff]
      %v2221 = vld [vmem:[%s2219 + $0x8] sm:$0xff]
      %v2222 = vld [vmem:[%s2219 + $0x10] sm:$0xff]
      %v2223 = vld [vmem:[%s2219 + $0x18] sm:$0xff]
      %v2224 = vld [vmem:[%s2219 + $0x20] sm:$0xff]
      %v2225 = vld [vmem:[%s2219 + $0x28] sm:$0xff]
      %v2226 = vld [vmem:[%s2219 + $0x30] sm:$0xff]
      %v2227 = vld [vmem:[%s2219 + $0x38] sm:$0xff]
      %v2228 = vld [vmem:[%s2219 + $0x40] sm:$0xff]
      %v2229 = vld [vmem:[%s2219 + $0x48] sm:$0xff]
      %v2230 = vld [vmem:[%s2219 + $0x50] sm:$0xff]
      %v2231 = vld [vmem:[%s2219 + $0x58] sm:$0xff]
      %v2232 = vld [vmem:[%s2219 + $0x60] sm:$0xff]
      %v2233 = vld [vmem:[%s2219 + $0x68] sm:$0xff]
      %v2234 = vld [vmem:[%s2219 + $0x70] sm:$0xff]
      %v2235 = vld [vmem:[%s2219 + $0x78] sm:$0xff]
      %v2236 = vld [vmem:[%s2219 + $0x80] sm:$0xff]
      %v2237 = vld [vmem:[%s2219 + $0x88] sm:$0xff]
      %v2238 = vld [vmem:[%s2219 + $0x90] sm:$0xff]
      %v2239 = vld [vmem:[%s2219 + $0x98] sm:$0xff]
      %v2240 = vld [vmem:[%s2219 + $0xa0] sm:$0xff]
      %v2241 = vld [vmem:[%s2219 + $0xa8] sm:$0xff]
      %v2242 = vld [vmem:[%s2219 + $0xb0] sm:$0xff]
      %v2243 = vld [vmem:[%s2219 + $0xb8] sm:$0xff]
      %v2244 = vld [vmem:[%s2219 + $0xc0] sm:$0xff]
      %v2245 = vld [vmem:[%s2219 + $0xc8] sm:$0xff]
      %v2246 = vld [vmem:[%s2219 + $0xd0] sm:$0xff]
      %v2247 = vld [vmem:[%s2219 + $0xd8] sm:$0xff]
      %v2248 = vld [vmem:[%s2219 + $0xe0] sm:$0xff]
      %v2249 = vld [vmem:[%s2219 + $0xe8] sm:$0xff]
      %v2250 = vld [vmem:[%s2219 + $0xf0] sm:$0xff]
      %v2251 = vld [vmem:[%s2219 + $0xf8] sm:$0xff]
      %v2252 = vld [vmem:[%s2219 + $0x100] sm:$0xff]
      %v2253 = vld [vmem:[%s2219 + $0x108] sm:$0xff]
      %v2254 = vld [vmem:[%s2219 + $0x110] sm:$0xff]
      %v2255 = vld [vmem:[%s2219 + $0x118] sm:$0xff]
      %v2256 = vld [vmem:[%s2219 + $0x120] sm:$0xff]
      %v2257 = vld [vmem:[%s2219 + $0x128] sm:$0xff]
      %v2258 = vld [vmem:[%s2219 + $0x130] sm:$0xff]
      %v2259 = vld [vmem:[%s2219 + $0x138] sm:$0xff]
      %v2260 = vld [vmem:[%s2219 + $0x140] sm:$0xff]
      %v2261 = vld [vmem:[%s2219 + $0x148] sm:$0xff]
      %v2262 = vld [vmem:[%s2219 + $0x150] sm:$0xff]
      %v2263 = vld [vmem:[%s2219 + $0x158] sm:$0xff]
      %v2264 = vld [vmem:[%s2219 + $0x160] sm:$0xff]
      %v2265 = vld [vmem:[%s2219 + $0x168] sm:$0xff]
      %v2266 = vld [vmem:[%s2219 + $0x170] sm:$0xff]
      %v2267 = vld [vmem:[%s2219 + $0x178] sm:$0xff]
      %v2268 = vld [vmem:[%s2219 + $0x180] sm:$0xff]
      %v2269 = vld [vmem:[%s2219 + $0x188] sm:$0xff]
      %v2270 = vld [vmem:[%s2219 + $0x190] sm:$0xff]
      %v2271 = vld [vmem:[%s2219 + $0x198] sm:$0xff]
      %v2272 = vld [vmem:[%s2219 + $0x1a0] sm:$0xff]
      %v2273 = vld [vmem:[%s2219 + $0x1a8] sm:$0xff]
      %v2274 = vld [vmem:[%s2219 + $0x1b0] sm:$0xff]
      %v2275 = vld [vmem:[%s2219 + $0x1b8] sm:$0xff]
      %v2276 = vld [vmem:[%s2219 + $0x1c0] sm:$0xff]
      %v2277 = vld [vmem:[%s2219 + $0x1c8] sm:$0xff]
      %v2278 = vld [vmem:[%s2219 + $0x1d0] sm:$0xff]
      %v2279 = vld [vmem:[%s2219 + $0x1d8] sm:$0xff]
      %v2280 = vld [vmem:[%s2219 + $0x1e0] sm:$0xff]
      %v2281 = vld [vmem:[%s2219 + $0x1e8] sm:$0xff]
      %v2282 = vld [vmem:[%s2219 + $0x1f0] sm:$0xff]
      %v2283 = vld [vmem:[%s2219 + $0x1f8] sm:$0xff]
      %v2284 = vld [vmem:[%s2219 + $0x200] sm:$0xff]
      %v2285 = vld [vmem:[%s2219 + $0x208] sm:$0xff]
      %v2286 = vld [vmem:[%s2219 + $0x210] sm:$0xff]
      %v2287 = vld [vmem:[%s2219 + $0x218] sm:$0xff]
      %v2288 = vld [vmem:[%s2219 + $0x220] sm:$0xff]
      %v2289 = vld [vmem:[%s2219 + $0x228] sm:$0xff]
      %v2290 = vld [vmem:[%s2219 + $0x230] sm:$0xff]
      %v2291 = vld [vmem:[%s2219 + $0x238] sm:$0xff]
      %v2292 = vld [vmem:[%s2219 + $0x240] sm:$0xff]
      %v2293 = vld [vmem:[%s2219 + $0x248] sm:$0xff]
      %v2294 = vld [vmem:[%s2219 + $0x250] sm:$0xff]
      %v2295 = vld [vmem:[%s2219 + $0x258] sm:$0xff]
      %v2296 = vld [vmem:[%s2219 + $0x260] sm:$0xff]
      %v2297 = vld [vmem:[%s2219 + $0x268] sm:$0xff]
      %v2298 = vld [vmem:[%s2219 + $0x270] sm:$0xff]
      %v2299 = vld [vmem:[%s2219 + $0x278] sm:$0xff]
      %v2300 = vld [vmem:[%s2219 + $0x280] sm:$0xff]
      %v2301 = vld [vmem:[%s2219 + $0x288] sm:$0xff]
      %v2302 = vld [vmem:[%s2219 + $0x290] sm:$0xff]
      %v2303 = vld [vmem:[%s2219 + $0x298] sm:$0xff]
      %v2304 = vld [vmem:[%s2219 + $0x2a0] sm:$0xff]
      %v2305 = vld [vmem:[%s2219 + $0x2a8] sm:$0xff]
      %v2306 = vld [vmem:[%s2219 + $0x2b0] sm:$0xff]
      %v2307 = vld [vmem:[%s2219 + $0x2b8] sm:$0xff]
      %v2308 = vld [vmem:[%s2219 + $0x2c0] sm:$0xff]
      %v2309 = vld [vmem:[%s2219 + $0x2c8] sm:$0xff]
      %v2310 = vld [vmem:[%s2219 + $0x2d0] sm:$0xff]
      %v2311 = vld [vmem:[%s2219 + $0x2d8] sm:$0xff]
      %v2312 = vld [vmem:[%s2219 + $0x2e0] sm:$0xff]
      %v2313 = vld [vmem:[%s2219 + $0x2e8] sm:$0xff]
      %v2314 = vld [vmem:[%s2219 + $0x2f0] sm:$0xff]
      %v2315 = vld [vmem:[%s2219 + $0x2f8] sm:$0xff]
      %v2316 = vld [vmem:[%s2219 + $0x300] sm:$0xff]
      %v2317 = vld [vmem:[%s2219 + $0x308] sm:$0xff]
      %v2318 = vld [vmem:[%s2219 + $0x310] sm:$0xff]
      %v2319 = vld [vmem:[%s2219 + $0x318] sm:$0xff]
      %v2320 = vld [vmem:[%s2219 + $0x320] sm:$0xff]
      %v2321 = vld [vmem:[%s2219 + $0x328] sm:$0xff]
      %v2322 = vld [vmem:[%s2219 + $0x330] sm:$0xff]
      %v2323 = vld [vmem:[%s2219 + $0x338] sm:$0xff]
      %v2324 = vld [vmem:[%s2219 + $0x340] sm:$0xff]
      %v2325 = vld [vmem:[%s2219 + $0x348] sm:$0xff]
      %v2326 = vld [vmem:[%s2219 + $0x350] sm:$0xff]
      %v2327 = vld [vmem:[%s2219 + $0x358] sm:$0xff]
      %v2328 = vld [vmem:[%s2219 + $0x360] sm:$0xff]
      %v2329 = vld [vmem:[%s2219 + $0x368] sm:$0xff]
      %v2330 = vld [vmem:[%s2219 + $0x370] sm:$0xff]
      %v2331 = vld [vmem:[%s2219 + $0x378] sm:$0xff]
      %v2332 = vld [vmem:[%s2219 + $0x380] sm:$0xff]
      %v2333 = vld [vmem:[%s2219 + $0x388] sm:$0xff]
      %v2334 = vld [vmem:[%s2219 + $0x390] sm:$0xff]
      %v2335 = vld [vmem:[%s2219 + $0x398] sm:$0xff]
      %v2336 = vld [vmem:[%s2219 + $0x3a0] sm:$0xff]
      %v2337 = vld [vmem:[%s2219 + $0x3a8] sm:$0xff]
      %v2338 = vld [vmem:[%s2219 + $0x3b0] sm:$0xff]
      %v2339 = vld [vmem:[%s2219 + $0x3b8] sm:$0xff]
      %v2340 = vld [vmem:[%s2219 + $0x3c0] sm:$0xff]
      %v2341 = vld [vmem:[%s2219 + $0x3c8] sm:$0xff]
      %v2342 = vld [vmem:[%s2219 + $0x3d0] sm:$0xff]
      %v2343 = vld [vmem:[%s2219 + $0x3d8] sm:$0xff]
      %v2344 = vld [vmem:[%s2219 + $0x3e0] sm:$0xff]
      %v2345 = vld [vmem:[%s2219 + $0x3e8] sm:$0xff]
      %v2346 = vld [vmem:[%s2219 + $0x3f0] sm:$0xff]
      %v2347 = vld [vmem:[%s2219 + $0x3f8] sm:$0xff]
      %vm2348 = vsmask.f32 7424
      %v2350 = vshrl.u32 %v2211, 16
      %v2352 = vshll.u32 %v2211, 16
      %v2354 = vrot.slane %v2352, 1
      %v2355 = vor.u32 %v2350, %v2354
      %v2357 = vshll.u32 %v2215, 16
      %v2359 = vrot.slane %v2357, 1
      %v2360 = vsel %vm2348, %v2355, %v2359
      %v2362 = vshrl.u32 %v2212, 16
      %v2364 = vshll.u32 %v2212, 16
      %v2366 = vrot.slane %v2364, 1
      %v2367 = vor.u32 %v2362, %v2366
      %v2369 = vshll.u32 %v2216, 16
      %v2371 = vrot.slane %v2369, 1
      %v2372 = vsel %vm2348, %v2367, %v2371
      %v2374 = vshrl.u32 %v2213, 16
      %v2376 = vshll.u32 %v2213, 16
      %v2378 = vrot.slane %v2376, 1
      %v2379 = vor.u32 %v2374, %v2378
      %v2381 = vshll.u32 %v2217, 16
      %v2383 = vrot.slane %v2381, 1
      %v2384 = vsel %vm2348, %v2379, %v2383
      %v2386 = vshrl.u32 %v2214, 16
      %v2388 = vshll.u32 %v2214, 16
      %v2390 = vrot.slane %v2388, 1
      %v2391 = vor.u32 %v2386, %v2390
      %v2393 = vshll.u32 %v2218, 16
      %v2395 = vrot.slane %v2393, 1
      %v2396 = vsel %vm2348, %v2391, %v2395
      %v2529 = vunpack.c.l.b16 %v2220
      %v2530 = vunpack.c.h.b16 %v2220
      %v2531 = vunpack.c.l.b16 %v2221
      %v2532 = vunpack.c.h.b16 %v2221
      %v2533 = vunpack.c.l.b16 %v2222
      %v2534 = vunpack.c.h.b16 %v2222
      %v2535 = vunpack.c.l.b16 %v2223
      %v2536 = vunpack.c.h.b16 %v2223
      %v2537 = vunpack.c.l.b16 %v2224
      %v2538 = vunpack.c.h.b16 %v2224
      %v2539 = vunpack.c.l.b16 %v2225
      %v2540 = vunpack.c.h.b16 %v2225
      %v2541 = vunpack.c.l.b16 %v2226
      %v2542 = vunpack.c.h.b16 %v2226
      %v2543 = vunpack.c.l.b16 %v2227
      %v2544 = vunpack.c.h.b16 %v2227
      %v2545 = vunpack.c.l.b16 %v2228
      %v2546 = vunpack.c.h.b16 %v2228
      %v2547 = vunpack.c.l.b16 %v2229
      %v2548 = vunpack.c.h.b16 %v2229
      %v2549 = vunpack.c.l.b16 %v2230
      %v2550 = vunpack.c.h.b16 %v2230
      %v2551 = vunpack.c.l.b16 %v2231
      %v2552 = vunpack.c.h.b16 %v2231
      %v2553 = vunpack.c.l.b16 %v2232
      %v2554 = vunpack.c.h.b16 %v2232
      %v2555 = vunpack.c.l.b16 %v2233
      %v2556 = vunpack.c.h.b16 %v2233
      %v2557 = vunpack.c.l.b16 %v2234
      %v2558 = vunpack.c.h.b16 %v2234
      %v2559 = vunpack.c.l.b16 %v2235
      %v2560 = vunpack.c.h.b16 %v2235
      %v2561 = vunpack.c.l.b16 %v2236
      %v2562 = vunpack.c.h.b16 %v2236
      %v2563 = vunpack.c.l.b16 %v2237
      %v2564 = vunpack.c.h.b16 %v2237
      %v2565 = vunpack.c.l.b16 %v2238
      %v2566 = vunpack.c.h.b16 %v2238
      %v2567 = vunpack.c.l.b16 %v2239
      %v2568 = vunpack.c.h.b16 %v2239
      %v2569 = vunpack.c.l.b16 %v2240
      %v2570 = vunpack.c.h.b16 %v2240
      %v2571 = vunpack.c.l.b16 %v2241
      %v2572 = vunpack.c.h.b16 %v2241
      %v2573 = vunpack.c.l.b16 %v2242
      %v2574 = vunpack.c.h.b16 %v2242
      %v2575 = vunpack.c.l.b16 %v2243
      %v2576 = vunpack.c.h.b16 %v2243
      %v2577 = vunpack.c.l.b16 %v2244
      %v2578 = vunpack.c.h.b16 %v2244
      %v2579 = vunpack.c.l.b16 %v2245
      %v2580 = vunpack.c.h.b16 %v2245
      %v2581 = vunpack.c.l.b16 %v2246
      %v2582 = vunpack.c.h.b16 %v2246
      %v2583 = vunpack.c.l.b16 %v2247
      %v2584 = vunpack.c.h.b16 %v2247
      %v2585 = vunpack.c.l.b16 %v2248
      %v2586 = vunpack.c.h.b16 %v2248
      %v2587 = vunpack.c.l.b16 %v2249
      %v2588 = vunpack.c.h.b16 %v2249
      %v2589 = vunpack.c.l.b16 %v2250
      %v2590 = vunpack.c.h.b16 %v2250
      %v2591 = vunpack.c.l.b16 %v2251
      %v2592 = vunpack.c.h.b16 %v2251
      %v2593 = vunpack.c.l.b16 %v2252
      %v2594 = vunpack.c.h.b16 %v2252
      %v2595 = vunpack.c.l.b16 %v2253
      %v2596 = vunpack.c.h.b16 %v2253
      %v2597 = vunpack.c.l.b16 %v2254
      %v2598 = vunpack.c.h.b16 %v2254
      %v2599 = vunpack.c.l.b16 %v2255
      %v2600 = vunpack.c.h.b16 %v2255
      %v2601 = vunpack.c.l.b16 %v2256
      %v2602 = vunpack.c.h.b16 %v2256
      %v2603 = vunpack.c.l.b16 %v2257
      %v2604 = vunpack.c.h.b16 %v2257
      %v2605 = vunpack.c.l.b16 %v2258
      %v2606 = vunpack.c.h.b16 %v2258
      %v2607 = vunpack.c.l.b16 %v2259
      %v2608 = vunpack.c.h.b16 %v2259
      %v2609 = vunpack.c.l.b16 %v2260
      %v2610 = vunpack.c.h.b16 %v2260
      %v2611 = vunpack.c.l.b16 %v2261
      %v2612 = vunpack.c.h.b16 %v2261
      %v2613 = vunpack.c.l.b16 %v2262
      %v2614 = vunpack.c.h.b16 %v2262
      %v2615 = vunpack.c.l.b16 %v2263
      %v2616 = vunpack.c.h.b16 %v2263
      %v2617 = vunpack.c.l.b16 %v2264
      %v2618 = vunpack.c.h.b16 %v2264
      %v2619 = vunpack.c.l.b16 %v2265
      %v2620 = vunpack.c.h.b16 %v2265
      %v2621 = vunpack.c.l.b16 %v2266
      %v2622 = vunpack.c.h.b16 %v2266
      %v2623 = vunpack.c.l.b16 %v2267
      %v2624 = vunpack.c.h.b16 %v2267
      %v2625 = vunpack.c.l.b16 %v2268
      %v2626 = vunpack.c.h.b16 %v2268
      %v2627 = vunpack.c.l.b16 %v2269
      %v2628 = vunpack.c.h.b16 %v2269
      %v2629 = vunpack.c.l.b16 %v2270
      %v2630 = vunpack.c.h.b16 %v2270
      %v2631 = vunpack.c.l.b16 %v2271
      %v2632 = vunpack.c.h.b16 %v2271
      %v2633 = vunpack.c.l.b16 %v2272
      %v2634 = vunpack.c.h.b16 %v2272
      %v2635 = vunpack.c.l.b16 %v2273
      %v2636 = vunpack.c.h.b16 %v2273
      %v2637 = vunpack.c.l.b16 %v2274
      %v2638 = vunpack.c.h.b16 %v2274
      %v2639 = vunpack.c.l.b16 %v2275
      %v2640 = vunpack.c.h.b16 %v2275
      %v2641 = vunpack.c.l.b16 %v2276
      %v2642 = vunpack.c.h.b16 %v2276
      %v2643 = vunpack.c.l.b16 %v2277
      %v2644 = vunpack.c.h.b16 %v2277
      %v2645 = vunpack.c.l.b16 %v2278
      %v2646 = vunpack.c.h.b16 %v2278
      %v2647 = vunpack.c.l.b16 %v2279
      %v2648 = vunpack.c.h.b16 %v2279
      %v2649 = vunpack.c.l.b16 %v2280
      %v2650 = vunpack.c.h.b16 %v2280
      %v2651 = vunpack.c.l.b16 %v2281
      %v2652 = vunpack.c.h.b16 %v2281
      %v2653 = vunpack.c.l.b16 %v2282
      %v2654 = vunpack.c.h.b16 %v2282
      %v2655 = vunpack.c.l.b16 %v2283
      %v2656 = vunpack.c.h.b16 %v2283
      %v2657 = vunpack.c.l.b16 %v2284
      %v2658 = vunpack.c.h.b16 %v2284
      %v2659 = vunpack.c.l.b16 %v2285
      %v2660 = vunpack.c.h.b16 %v2285
      %v2661 = vunpack.c.l.b16 %v2286
      %v2662 = vunpack.c.h.b16 %v2286
      %v2663 = vunpack.c.l.b16 %v2287
      %v2664 = vunpack.c.h.b16 %v2287
      %v2665 = vunpack.c.l.b16 %v2288
      %v2666 = vunpack.c.h.b16 %v2288
      %v2667 = vunpack.c.l.b16 %v2289
      %v2668 = vunpack.c.h.b16 %v2289
      %v2669 = vunpack.c.l.b16 %v2290
      %v2670 = vunpack.c.h.b16 %v2290
      %v2671 = vunpack.c.l.b16 %v2291
      %v2672 = vunpack.c.h.b16 %v2291
      %v2673 = vunpack.c.l.b16 %v2292
      %v2674 = vunpack.c.h.b16 %v2292
      %v2675 = vunpack.c.l.b16 %v2293
      %v2676 = vunpack.c.h.b16 %v2293
      %v2677 = vunpack.c.l.b16 %v2294
      %v2678 = vunpack.c.h.b16 %v2294
      %v2679 = vunpack.c.l.b16 %v2295
      %v2680 = vunpack.c.h.b16 %v2295
      %v2681 = vunpack.c.l.b16 %v2296
      %v2682 = vunpack.c.h.b16 %v2296
      %v2683 = vunpack.c.l.b16 %v2297
      %v2684 = vunpack.c.h.b16 %v2297
      %v2685 = vunpack.c.l.b16 %v2298
      %v2686 = vunpack.c.h.b16 %v2298
      %v2687 = vunpack.c.l.b16 %v2299
      %v2688 = vunpack.c.h.b16 %v2299
      %v2689 = vunpack.c.l.b16 %v2300
      %v2690 = vunpack.c.h.b16 %v2300
      %v2691 = vunpack.c.l.b16 %v2301
      %v2692 = vunpack.c.h.b16 %v2301
      %v2693 = vunpack.c.l.b16 %v2302
      %v2694 = vunpack.c.h.b16 %v2302
      %v2695 = vunpack.c.l.b16 %v2303
      %v2696 = vunpack.c.h.b16 %v2303
      %v2697 = vunpack.c.l.b16 %v2304
      %v2698 = vunpack.c.h.b16 %v2304
      %v2699 = vunpack.c.l.b16 %v2305
      %v2700 = vunpack.c.h.b16 %v2305
      %v2701 = vunpack.c.l.b16 %v2306
      %v2702 = vunpack.c.h.b16 %v2306
      %v2703 = vunpack.c.l.b16 %v2307
      %v2704 = vunpack.c.h.b16 %v2307
      %v2705 = vunpack.c.l.b16 %v2308
      %v2706 = vunpack.c.h.b16 %v2308
      %v2707 = vunpack.c.l.b16 %v2309
      %v2708 = vunpack.c.h.b16 %v2309
      %v2709 = vunpack.c.l.b16 %v2310
      %v2710 = vunpack.c.h.b16 %v2310
      %v2711 = vunpack.c.l.b16 %v2311
      %v2712 = vunpack.c.h.b16 %v2311
      %v2713 = vunpack.c.l.b16 %v2312
      %v2714 = vunpack.c.h.b16 %v2312
      %v2715 = vunpack.c.l.b16 %v2313
      %v2716 = vunpack.c.h.b16 %v2313
      %v2717 = vunpack.c.l.b16 %v2314
      %v2718 = vunpack.c.h.b16 %v2314
      %v2719 = vunpack.c.l.b16 %v2315
      %v2720 = vunpack.c.h.b16 %v2315
      %v2721 = vunpack.c.l.b16 %v2316
      %v2722 = vunpack.c.h.b16 %v2316
      %v2723 = vunpack.c.l.b16 %v2317
      %v2724 = vunpack.c.h.b16 %v2317
      %v2725 = vunpack.c.l.b16 %v2318
      %v2726 = vunpack.c.h.b16 %v2318
      %v2727 = vunpack.c.l.b16 %v2319
      %v2728 = vunpack.c.h.b16 %v2319
      %v2729 = vunpack.c.l.b16 %v2320
      %v2730 = vunpack.c.h.b16 %v2320
      %v2731 = vunpack.c.l.b16 %v2321
      %v2732 = vunpack.c.h.b16 %v2321
      %v2733 = vunpack.c.l.b16 %v2322
      %v2734 = vunpack.c.h.b16 %v2322
      %v2735 = vunpack.c.l.b16 %v2323
      %v2736 = vunpack.c.h.b16 %v2323
      %v2737 = vunpack.c.l.b16 %v2324
      %v2738 = vunpack.c.h.b16 %v2324
      %v2739 = vunpack.c.l.b16 %v2325
      %v2740 = vunpack.c.h.b16 %v2325
      %v2741 = vunpack.c.l.b16 %v2326
      %v2742 = vunpack.c.h.b16 %v2326
      %v2743 = vunpack.c.l.b16 %v2327
      %v2744 = vunpack.c.h.b16 %v2327
      %v2745 = vunpack.c.l.b16 %v2328
      %v2746 = vunpack.c.h.b16 %v2328
      %v2747 = vunpack.c.l.b16 %v2329
      %v2748 = vunpack.c.h.b16 %v2329
      %v2749 = vunpack.c.l.b16 %v2330
      %v2750 = vunpack.c.h.b16 %v2330
      %v2751 = vunpack.c.l.b16 %v2331
      %v2752 = vunpack.c.h.b16 %v2331
      %v2753 = vunpack.c.l.b16 %v2332
      %v2754 = vunpack.c.h.b16 %v2332
      %v2755 = vunpack.c.l.b16 %v2333
      %v2756 = vunpack.c.h.b16 %v2333
      %v2757 = vunpack.c.l.b16 %v2334
      %v2758 = vunpack.c.h.b16 %v2334
      %v2759 = vunpack.c.l.b16 %v2335
      %v2760 = vunpack.c.h.b16 %v2335
      %v2761 = vunpack.c.l.b16 %v2336
      %v2762 = vunpack.c.h.b16 %v2336
      %v2763 = vunpack.c.l.b16 %v2337
      %v2764 = vunpack.c.h.b16 %v2337
      %v2765 = vunpack.c.l.b16 %v2338
      %v2766 = vunpack.c.h.b16 %v2338
      %v2767 = vunpack.c.l.b16 %v2339
      %v2768 = vunpack.c.h.b16 %v2339
      %v2769 = vunpack.c.l.b16 %v2340
      %v2770 = vunpack.c.h.b16 %v2340
      %v2771 = vunpack.c.l.b16 %v2341
      %v2772 = vunpack.c.h.b16 %v2341
      %v2773 = vunpack.c.l.b16 %v2342
      %v2774 = vunpack.c.h.b16 %v2342
      %v2775 = vunpack.c.l.b16 %v2343
      %v2776 = vunpack.c.h.b16 %v2343
      %v2777 = vunpack.c.l.b16 %v2344
      %v2778 = vunpack.c.h.b16 %v2344
      %v2779 = vunpack.c.l.b16 %v2345
      %v2780 = vunpack.c.h.b16 %v2345
      %v2781 = vunpack.c.l.b16 %v2346
      %v2782 = vunpack.c.h.b16 %v2346
      %v2783 = vunpack.c.l.b16 %v2347
      %v2784 = vunpack.c.h.b16 %v2347
      %v2785 = vpack.c.b16 %v2533, %v2529
      %v2786 = vpack.c.b16 %v2534, %v2530
      %v2787 = vpack.c.b16 %v2535, %v2531
      %v2788 = vpack.c.b16 %v2536, %v2532
      %v2789 = vpack.c.b16 %v2541, %v2537
      %v2790 = vpack.c.b16 %v2542, %v2538
      %v2791 = vpack.c.b16 %v2543, %v2539
      %v2792 = vpack.c.b16 %v2544, %v2540
      %v2793 = vpack.c.b16 %v2549, %v2545
      %v2794 = vpack.c.b16 %v2550, %v2546
      %v2795 = vpack.c.b16 %v2551, %v2547
      %v2796 = vpack.c.b16 %v2552, %v2548
      %v2797 = vpack.c.b16 %v2557, %v2553
      %v2798 = vpack.c.b16 %v2558, %v2554
      %v2799 = vpack.c.b16 %v2559, %v2555
      %v2800 = vpack.c.b16 %v2560, %v2556
      %v2801 = vpack.c.b16 %v2565, %v2561
      %v2802 = vpack.c.b16 %v2566, %v2562
      %v2803 = vpack.c.b16 %v2567, %v2563
      %v2804 = vpack.c.b16 %v2568, %v2564
      %v2805 = vpack.c.b16 %v2573, %v2569
      %v2806 = vpack.c.b16 %v2574, %v2570
      %v2807 = vpack.c.b16 %v2575, %v2571
      %v2808 = vpack.c.b16 %v2576, %v2572
      %v2809 = vpack.c.b16 %v2581, %v2577
      %v2810 = vpack.c.b16 %v2582, %v2578
      %v2811 = vpack.c.b16 %v2583, %v2579
      %v2812 = vpack.c.b16 %v2584, %v2580
      %v2813 = vpack.c.b16 %v2589, %v2585
      %v2814 = vpack.c.b16 %v2590, %v2586
      %v2815 = vpack.c.b16 %v2591, %v2587
      %v2816 = vpack.c.b16 %v2592, %v2588
      %v2817 = vpack.c.b16 %v2597, %v2593
      %v2818 = vpack.c.b16 %v2598, %v2594
      %v2819 = vpack.c.b16 %v2599, %v2595
      %v2820 = vpack.c.b16 %v2600, %v2596
      %v2821 = vpack.c.b16 %v2605, %v2601
      %v2822 = vpack.c.b16 %v2606, %v2602
      %v2823 = vpack.c.b16 %v2607, %v2603
      %v2824 = vpack.c.b16 %v2608, %v2604
      %v2825 = vpack.c.b16 %v2613, %v2609
      %v2826 = vpack.c.b16 %v2614, %v2610
      %v2827 = vpack.c.b16 %v2615, %v2611
      %v2828 = vpack.c.b16 %v2616, %v2612
      %v2829 = vpack.c.b16 %v2621, %v2617
      %v2830 = vpack.c.b16 %v2622, %v2618
      %v2831 = vpack.c.b16 %v2623, %v2619
      %v2832 = vpack.c.b16 %v2624, %v2620
      %v2833 = vpack.c.b16 %v2629, %v2625
      %v2834 = vpack.c.b16 %v2630, %v2626
      %v2835 = vpack.c.b16 %v2631, %v2627
      %v2836 = vpack.c.b16 %v2632, %v2628
      %v2837 = vpack.c.b16 %v2637, %v2633
      %v2838 = vpack.c.b16 %v2638, %v2634
      %v2839 = vpack.c.b16 %v2639, %v2635
      %v2840 = vpack.c.b16 %v2640, %v2636
      %v2841 = vpack.c.b16 %v2645, %v2641
      %v2842 = vpack.c.b16 %v2646, %v2642
      %v2843 = vpack.c.b16 %v2647, %v2643
      %v2844 = vpack.c.b16 %v2648, %v2644
      %v2845 = vpack.c.b16 %v2653, %v2649
      %v2846 = vpack.c.b16 %v2654, %v2650
      %v2847 = vpack.c.b16 %v2655, %v2651
      %v2848 = vpack.c.b16 %v2656, %v2652
      %v2849 = vpack.c.b16 %v2661, %v2657
      %v2850 = vpack.c.b16 %v2662, %v2658
      %v2851 = vpack.c.b16 %v2663, %v2659
      %v2852 = vpack.c.b16 %v2664, %v2660
      %v2853 = vpack.c.b16 %v2669, %v2665
      %v2854 = vpack.c.b16 %v2670, %v2666
      %v2855 = vpack.c.b16 %v2671, %v2667
      %v2856 = vpack.c.b16 %v2672, %v2668
      %v2857 = vpack.c.b16 %v2677, %v2673
      %v2858 = vpack.c.b16 %v2678, %v2674
      %v2859 = vpack.c.b16 %v2679, %v2675
      %v2860 = vpack.c.b16 %v2680, %v2676
      %v2861 = vpack.c.b16 %v2685, %v2681
      %v2862 = vpack.c.b16 %v2686, %v2682
      %v2863 = vpack.c.b16 %v2687, %v2683
      %v2864 = vpack.c.b16 %v2688, %v2684
      %v2865 = vpack.c.b16 %v2693, %v2689
      %v2866 = vpack.c.b16 %v2694, %v2690
      %v2867 = vpack.c.b16 %v2695, %v2691
      %v2868 = vpack.c.b16 %v2696, %v2692
      %v2869 = vpack.c.b16 %v2701, %v2697
      %v2870 = vpack.c.b16 %v2702, %v2698
      %v2871 = vpack.c.b16 %v2703, %v2699
      %v2872 = vpack.c.b16 %v2704, %v2700
      %v2873 = vpack.c.b16 %v2709, %v2705
      %v2874 = vpack.c.b16 %v2710, %v2706
      %v2875 = vpack.c.b16 %v2711, %v2707
      %v2876 = vpack.c.b16 %v2712, %v2708
      %v2877 = vpack.c.b16 %v2717, %v2713
      %v2878 = vpack.c.b16 %v2718, %v2714
      %v2879 = vpack.c.b16 %v2719, %v2715
      %v2880 = vpack.c.b16 %v2720, %v2716
      %v2881 = vpack.c.b16 %v2725, %v2721
      %v2882 = vpack.c.b16 %v2726, %v2722
      %v2883 = vpack.c.b16 %v2727, %v2723
      %v2884 = vpack.c.b16 %v2728, %v2724
      %v2885 = vpack.c.b16 %v2733, %v2729
      %v2886 = vpack.c.b16 %v2734, %v2730
      %v2887 = vpack.c.b16 %v2735, %v2731
      %v2888 = vpack.c.b16 %v2736, %v2732
      %v2889 = vpack.c.b16 %v2741, %v2737
      %v2890 = vpack.c.b16 %v2742, %v2738
      %v2891 = vpack.c.b16 %v2743, %v2739
      %v2892 = vpack.c.b16 %v2744, %v2740
      %v2893 = vpack.c.b16 %v2749, %v2745
      %v2894 = vpack.c.b16 %v2750, %v2746
      %v2895 = vpack.c.b16 %v2751, %v2747
      %v2896 = vpack.c.b16 %v2752, %v2748
      %v2897 = vpack.c.b16 %v2757, %v2753
      %v2898 = vpack.c.b16 %v2758, %v2754
      %v2899 = vpack.c.b16 %v2759, %v2755
      %v2900 = vpack.c.b16 %v2760, %v2756
      %v2901 = vpack.c.b16 %v2765, %v2761
      %v2902 = vpack.c.b16 %v2766, %v2762
      %v2903 = vpack.c.b16 %v2767, %v2763
      %v2904 = vpack.c.b16 %v2768, %v2764
      %v2905 = vpack.c.b16 %v2773, %v2769
      %v2906 = vpack.c.b16 %v2774, %v2770
      %v2907 = vpack.c.b16 %v2775, %v2771
      %v2908 = vpack.c.b16 %v2776, %v2772
      %v2909 = vpack.c.b16 %v2781, %v2777
      %v2910 = vpack.c.b16 %v2782, %v2778
      %v2911 = vpack.c.b16 %v2783, %v2779
      %v2912 = vpack.c.b16 %v2784, %v2780
      %3041 = vmatprep.subr.bf16.mxu0 %v2814
      %3042 = vmatpush1.bf16.msra.mxu0 %v2813
      %3043 = vmatprep.subr.bf16.mxu0 %v2810
      %3044 = vmatpush1.bf16.msra.mxu0 %v2809
      %3045 = vmatprep.subr.bf16.mxu0 %v2806
      %3046 = vmatpush1.bf16.msra.mxu0 %v2805
      %3047 = vmatprep.subr.bf16.mxu0 %v2802
      %3048 = vmatpush1.bf16.msra.mxu0 %v2801
      %3049 = vmatprep.subr.bf16.mxu0 %v2798
      %3050 = vmatpush1.bf16.msra.mxu0 %v2797
      %3051 = vmatprep.subr.bf16.mxu0 %v2794
      %3052 = vmatpush1.bf16.msra.mxu0 %v2793
      %3053 = vmatprep.subr.bf16.mxu0 %v2790
      %3054 = vmatpush1.bf16.msra.mxu0 %v2789
      %3055 = vmatprep.subr.bf16.mxu0 %v2786
      %3056 = vmatpush1.bf16.msra.mxu0 %v2785
      %3057 = vmatprep.subr.bf16.mxu0 %v2846
      %3058 = vmatpush2.bf16.msra.mxu0 %v2845
      %3059 = vmatprep.subr.bf16.mxu0 %v2842
      %3060 = vmatpush2.bf16.msra.mxu0 %v2841
      %3061 = vmatprep.subr.bf16.mxu0 %v2838
      %3062 = vmatpush2.bf16.msra.mxu0 %v2837
      %3063 = vmatprep.subr.bf16.mxu0 %v2834
      %3064 = vmatpush2.bf16.msra.mxu0 %v2833
      %3065 = vmatprep.subr.bf16.mxu0 %v2830
      %3066 = vmatpush2.bf16.msra.mxu0 %v2829
      %3067 = vmatprep.subr.bf16.mxu0 %v2826
      %3068 = vmatpush2.bf16.msra.mxu0 %v2825
      %3069 = vmatprep.subr.bf16.mxu0 %v2822
      %3070 = vmatpush2.bf16.msra.mxu0 %v2821
      %3071 = vmatprep.subr.bf16.mxu0 %v2818
      %3072 = vmatpush2.bf16.msra.mxu0 %v2817
      %3073 = vmatprep.mubr.bf16.mxu0 %v2372
      %3074 = vmatmul.mubr.bf16.gmra.mxu0 %v2360
      %v3075 = vpop.f32.mrf.mxu0
      %v3076 = vadd.f32 0.0, %v3075
      %v3077 = vpop.f32.mrf.mxu0
      %v3078 = vadd.f32 0.0, %v3077
      %v3079 = vpop.f32.mrf.mxu0
      %v3080 = vadd.f32 0.0, %v3079
      %v3081 = vpop.f32.mrf.mxu0
      %v3082 = vadd.f32 0.0, %v3081
      %3083 = vdwg.mxu0
      %3084 = vmatprep.subr.bf16.mxu0 %v2878
      %3085 = vmatpush1.bf16.msra.mxu0 %v2877
      %3086 = vmatprep.subr.bf16.mxu0 %v2874
      %3087 = vmatpush1.bf16.msra.mxu0 %v2873
      %3088 = vmatprep.subr.bf16.mxu0 %v2870
      %3089 = vmatpush1.bf16.msra.mxu0 %v2869
      %3090 = vmatprep.subr.bf16.mxu0 %v2866
      %3091 = vmatpush1.bf16.msra.mxu0 %v2865
      %3092 = vmatprep.subr.bf16.mxu0 %v2862
      %3093 = vmatpush1.bf16.msra.mxu0 %v2861
      %3094 = vmatprep.subr.bf16.mxu0 %v2858
      %3095 = vmatpush1.bf16.msra.mxu0 %v2857
      %3096 = vmatprep.subr.bf16.mxu0 %v2854
      %3097 = vmatpush1.bf16.msra.mxu0 %v2853
      %3098 = vmatprep.subr.bf16.mxu0 %v2850
      %3099 = vmatpush1.bf16.msra.mxu0 %v2849
      %3100 = vmatprep.subr.bf16.mxu0 %v2910
      %3101 = vmatpush2.bf16.msra.mxu0 %v2909
      %3102 = vmatprep.subr.bf16.mxu0 %v2906
      %3103 = vmatpush2.bf16.msra.mxu0 %v2905
      %3104 = vmatprep.subr.bf16.mxu0 %v2902
      %3105 = vmatpush2.bf16.msra.mxu0 %v2901
      %3106 = vmatprep.subr.bf16.mxu0 %v2898
      %3107 = vmatpush2.bf16.msra.mxu0 %v2897
      %3108 = vmatprep.subr.bf16.mxu0 %v2894
      %3109 = vmatpush2.bf16.msra.mxu0 %v2893
      %3110 = vmatprep.subr.bf16.mxu0 %v2890
      %3111 = vmatpush2.bf16.msra.mxu0 %v2889
      %3112 = vmatprep.subr.bf16.mxu0 %v2886
      %3113 = vmatpush2.bf16.msra.mxu0 %v2885
      %3114 = vmatprep.subr.bf16.mxu0 %v2882
      %3115 = vmatpush2.bf16.msra.mxu0 %v2881
      %3116 = vmatprep.mubr.bf16.mxu0 %v2396
      %3117 = vmatmul.mubr.bf16.gmra.mxu0 %v2384
      %v3118 = vpop.f32.mrf.mxu0
      %v3119 = vadd.f32 %v3076, %v3118
      %v3120 = vpop.f32.mrf.mxu0
      %v3121 = vadd.f32 %v3078, %v3120
      %v3122 = vpop.f32.mrf.mxu0
      %v3123 = vadd.f32 %v3080, %v3122
      %v3124 = vpop.f32.mrf.mxu0
      %v3125 = vadd.f32 %v3082, %v3124
      %3126 = vdwg.mxu0
      %3127 = vmatprep.subr.bf16.mxu0 %v2816
      %3128 = vmatpush1.bf16.msra.mxu0 %v2815
      %3129 = vmatprep.subr.bf16.mxu0 %v2812
      %3130 = vmatpush1.bf16.msra.mxu0 %v2811
      %3131 = vmatprep.subr.bf16.mxu0 %v2808
      %3132 = vmatpush1.bf16.msra.mxu0 %v2807
      %3133 = vmatprep.subr.bf16.mxu0 %v2804
      %3134 = vmatpush1.bf16.msra.mxu0 %v2803
      %3135 = vmatprep.subr.bf16.mxu0 %v2800
      %3136 = vmatpush1.bf16.msra.mxu0 %v2799
      %3137 = vmatprep.subr.bf16.mxu0 %v2796
      %3138 = vmatpush1.bf16.msra.mxu0 %v2795
      %3139 = vmatprep.subr.bf16.mxu0 %v2792
      %3140 = vmatpush1.bf16.msra.mxu0 %v2791
      %3141 = vmatprep.subr.bf16.mxu0 %v2788
      %3142 = vmatpush1.bf16.msra.mxu0 %v2787
      %3143 = vmatprep.subr.bf16.mxu0 %v2848
      %3144 = vmatpush2.bf16.msra.mxu0 %v2847
      %3145 = vmatprep.subr.bf16.mxu0 %v2844
      %3146 = vmatpush2.bf16.msra.mxu0 %v2843
      %3147 = vmatprep.subr.bf16.mxu0 %v2840
      %3148 = vmatpush2.bf16.msra.mxu0 %v2839
      %3149 = vmatprep.subr.bf16.mxu0 %v2836
      %3150 = vmatpush2.bf16.msra.mxu0 %v2835
      %3151 = vmatprep.subr.bf16.mxu0 %v2832
      %3152 = vmatpush2.bf16.msra.mxu0 %v2831
      %3153 = vmatprep.subr.bf16.mxu0 %v2828
      %3154 = vmatpush2.bf16.msra.mxu0 %v2827
      %3155 = vmatprep.subr.bf16.mxu0 %v2824
      %3156 = vmatpush2.bf16.msra.mxu0 %v2823
      %3157 = vmatprep.subr.bf16.mxu0 %v2820
      %3158 = vmatpush2.bf16.msra.mxu0 %v2819
      %3159 = vmatprep.mubr.bf16.mxu0 %v2372
      %3160 = vmatmul.mubr.bf16.gmra.mxu0 %v2360
      %v3161 = vpop.f32.mrf.mxu0
      %v3162 = vadd.f32 0.0, %v3161
      %v3163 = vpop.f32.mrf.mxu0
      %v3164 = vadd.f32 0.0, %v3163
      %v3165 = vpop.f32.mrf.mxu0
      %v3166 = vadd.f32 0.0, %v3165
      %v3167 = vpop.f32.mrf.mxu0
      %v3168 = vadd.f32 0.0, %v3167
      %3169 = vdwg.mxu0
      %3170 = vmatprep.subr.bf16.mxu0 %v2880
      %3171 = vmatpush1.bf16.msra.mxu0 %v2879
      %3172 = vmatprep.subr.bf16.mxu0 %v2876
      %3173 = vmatpush1.bf16.msra.mxu0 %v2875
      %3174 = vmatprep.subr.bf16.mxu0 %v2872
      %3175 = vmatpush1.bf16.msra.mxu0 %v2871
      %3176 = vmatprep.subr.bf16.mxu0 %v2868
      %3177 = vmatpush1.bf16.msra.mxu0 %v2867
      %3178 = vmatprep.subr.bf16.mxu0 %v2864
      %3179 = vmatpush1.bf16.msra.mxu0 %v2863
      %3180 = vmatprep.subr.bf16.mxu0 %v2860
      %3181 = vmatpush1.bf16.msra.mxu0 %v2859
      %3182 = vmatprep.subr.bf16.mxu0 %v2856
      %3183 = vmatpush1.bf16.msra.mxu0 %v2855
      %3184 = vmatprep.subr.bf16.mxu0 %v2852
      %3185 = vmatpush1.bf16.msra.mxu0 %v2851
      %3186 = vmatprep.subr.bf16.mxu0 %v2912
      %3187 = vmatpush2.bf16.msra.mxu0 %v2911
      %3188 = vmatprep.subr.bf16.mxu0 %v2908
      %3189 = vmatpush2.bf16.msra.mxu0 %v2907
      %3190 = vmatprep.subr.bf16.mxu0 %v2904
      %3191 = vmatpush2.bf16.msra.mxu0 %v2903
      %3192 = vmatprep.subr.bf16.mxu0 %v2900
      %3193 = vmatpush2.bf16.msra.mxu0 %v2899
      %3194 = vmatprep.subr.bf16.mxu0 %v2896
      %3195 = vmatpush2.bf16.msra.mxu0 %v2895
      %3196 = vmatprep.subr.bf16.mxu0 %v2892
      %3197 = vmatpush2.bf16.msra.mxu0 %v2891
      %3198 = vmatprep.subr.bf16.mxu0 %v2888
      %3199 = vmatpush2.bf16.msra.mxu0 %v2887
      %3200 = vmatprep.subr.bf16.mxu0 %v2884
      %3201 = vmatpush2.bf16.msra.mxu0 %v2883
      %3202 = vmatprep.mubr.bf16.mxu0 %v2396
      %3203 = vmatmul.mubr.bf16.gmra.mxu0 %v2384
      %v3204 = vpop.f32.mrf.mxu0
      %v3205 = vadd.f32 %v3162, %v3204
      %v3206 = vpop.f32.mrf.mxu0
      %v3207 = vadd.f32 %v3164, %v3206
      %v3208 = vpop.f32.mrf.mxu0
      %v3209 = vadd.f32 %v3166, %v3208
      %v3210 = vpop.f32.mrf.mxu0
      %v3211 = vadd.f32 %v3168, %v3210
      %3212 = vdwg.mxu0
      %v3341 = vunpack.c.l.b16 %v2075
      %v3342 = vunpack.c.h.b16 %v2075
      %v3343 = vunpack.c.l.b16 %v2076
      %v3344 = vunpack.c.h.b16 %v2076
      %v3345 = vunpack.c.l.b16 %v2077
      %v3346 = vunpack.c.h.b16 %v2077
      %v3347 = vunpack.c.l.b16 %v2078
      %v3348 = vunpack.c.h.b16 %v2078
      %v3349 = vunpack.c.l.b16 %v2079
      %v3350 = vunpack.c.h.b16 %v2079
      %v3351 = vunpack.c.l.b16 %v2080
      %v3352 = vunpack.c.h.b16 %v2080
      %v3353 = vunpack.c.l.b16 %v2081
      %v3354 = vunpack.c.h.b16 %v2081
      %v3355 = vunpack.c.l.b16 %v2082
      %v3356 = vunpack.c.h.b16 %v2082
      %v3357 = vunpack.c.l.b16 %v2083
      %v3358 = vunpack.c.h.b16 %v2083
      %v3359 = vunpack.c.l.b16 %v2084
      %v3360 = vunpack.c.h.b16 %v2084
      %v3361 = vunpack.c.l.b16 %v2085
      %v3362 = vunpack.c.h.b16 %v2085
      %v3363 = vunpack.c.l.b16 %v2086
      %v3364 = vunpack.c.h.b16 %v2086
      %v3365 = vunpack.c.l.b16 %v2087
      %v3366 = vunpack.c.h.b16 %v2087
      %v3367 = vunpack.c.l.b16 %v2088
      %v3368 = vunpack.c.h.b16 %v2088
      %v3369 = vunpack.c.l.b16 %v2089
      %v3370 = vunpack.c.h.b16 %v2089
      %v3371 = vunpack.c.l.b16 %v2090
      %v3372 = vunpack.c.h.b16 %v2090
      %v3373 = vunpack.c.l.b16 %v2091
      %v3374 = vunpack.c.h.b16 %v2091
      %v3375 = vunpack.c.l.b16 %v2092
      %v3376 = vunpack.c.h.b16 %v2092
      %v3377 = vunpack.c.l.b16 %v2093
      %v3378 = vunpack.c.h.b16 %v2093
      %v3379 = vunpack.c.l.b16 %v2094
      %v3380 = vunpack.c.h.b16 %v2094
      %v3381 = vunpack.c.l.b16 %v2095
      %v3382 = vunpack.c.h.b16 %v2095
      %v3383 = vunpack.c.l.b16 %v2096
      %v3384 = vunpack.c.h.b16 %v2096
      %v3385 = vunpack.c.l.b16 %v2097
      %v3386 = vunpack.c.h.b16 %v2097
      %v3387 = vunpack.c.l.b16 %v2098
      %v3388 = vunpack.c.h.b16 %v2098
      %v3389 = vunpack.c.l.b16 %v2099
      %v3390 = vunpack.c.h.b16 %v2099
      %v3391 = vunpack.c.l.b16 %v2100
      %v3392 = vunpack.c.h.b16 %v2100
      %v3393 = vunpack.c.l.b16 %v2101
      %v3394 = vunpack.c.h.b16 %v2101
      %v3395 = vunpack.c.l.b16 %v2102
      %v3396 = vunpack.c.h.b16 %v2102
      %v3397 = vunpack.c.l.b16 %v2103
      %v3398 = vunpack.c.h.b16 %v2103
      %v3399 = vunpack.c.l.b16 %v2104
      %v3400 = vunpack.c.h.b16 %v2104
      %v3401 = vunpack.c.l.b16 %v2105
      %v3402 = vunpack.c.h.b16 %v2105
      %v3403 = vunpack.c.l.b16 %v2106
      %v3404 = vunpack.c.h.b16 %v2106
      %v3405 = vunpack.c.l.b16 %v2107
      %v3406 = vunpack.c.h.b16 %v2107
      %v3407 = vunpack.c.l.b16 %v2108
      %v3408 = vunpack.c.h.b16 %v2108
      %v3409 = vunpack.c.l.b16 %v2109
      %v3410 = vunpack.c.h.b16 %v2109
      %v3411 = vunpack.c.l.b16 %v2110
      %v3412 = vunpack.c.h.b16 %v2110
      %v3413 = vunpack.c.l.b16 %v2111
      %v3414 = vunpack.c.h.b16 %v2111
      %v3415 = vunpack.c.l.b16 %v2112
      %v3416 = vunpack.c.h.b16 %v2112
      %v3417 = vunpack.c.l.b16 %v2113
      %v3418 = vunpack.c.h.b16 %v2113
      %v3419 = vunpack.c.l.b16 %v2114
      %v3420 = vunpack.c.h.b16 %v2114
      %v3421 = vunpack.c.l.b16 %v2115
      %v3422 = vunpack.c.h.b16 %v2115
      %v3423 = vunpack.c.l.b16 %v2116
      %v3424 = vunpack.c.h.b16 %v2116
      %v3425 = vunpack.c.l.b16 %v2117
      %v3426 = vunpack.c.h.b16 %v2117
      %v3427 = vunpack.c.l.b16 %v2118
      %v3428 = vunpack.c.h.b16 %v2118
      %v3429 = vunpack.c.l.b16 %v2119
      %v3430 = vunpack.c.h.b16 %v2119
      %v3431 = vunpack.c.l.b16 %v2120
      %v3432 = vunpack.c.h.b16 %v2120
      %v3433 = vunpack.c.l.b16 %v2121
      %v3434 = vunpack.c.h.b16 %v2121
      %v3435 = vunpack.c.l.b16 %v2122
      %v3436 = vunpack.c.h.b16 %v2122
      %v3437 = vunpack.c.l.b16 %v2123
      %v3438 = vunpack.c.h.b16 %v2123
      %v3439 = vunpack.c.l.b16 %v2124
      %v3440 = vunpack.c.h.b16 %v2124
      %v3441 = vunpack.c.l.b16 %v2125
      %v3442 = vunpack.c.h.b16 %v2125
      %v3443 = vunpack.c.l.b16 %v2126
      %v3444 = vunpack.c.h.b16 %v2126
      %v3445 = vunpack.c.l.b16 %v2127
      %v3446 = vunpack.c.h.b16 %v2127
      %v3447 = vunpack.c.l.b16 %v2128
      %v3448 = vunpack.c.h.b16 %v2128
      %v3449 = vunpack.c.l.b16 %v2129
      %v3450 = vunpack.c.h.b16 %v2129
      %v3451 = vunpack.c.l.b16 %v2130
      %v3452 = vunpack.c.h.b16 %v2130
      %v3453 = vunpack.c.l.b16 %v2131
      %v3454 = vunpack.c.h.b16 %v2131
      %v3455 = vunpack.c.l.b16 %v2132
      %v3456 = vunpack.c.h.b16 %v2132
      %v3457 = vunpack.c.l.b16 %v2133
      %v3458 = vunpack.c.h.b16 %v2133
      %v3459 = vunpack.c.l.b16 %v2134
      %v3460 = vunpack.c.h.b16 %v2134
      %v3461 = vunpack.c.l.b16 %v2135
      %v3462 = vunpack.c.h.b16 %v2135
      %v3463 = vunpack.c.l.b16 %v2136
      %v3464 = vunpack.c.h.b16 %v2136
      %v3465 = vunpack.c.l.b16 %v2137
      %v3466 = vunpack.c.h.b16 %v2137
      %v3467 = vunpack.c.l.b16 %v2138
      %v3468 = vunpack.c.h.b16 %v2138
      %v3469 = vunpack.c.l.b16 %v2139
      %v3470 = vunpack.c.h.b16 %v2139
      %v3471 = vunpack.c.l.b16 %v2140
      %v3472 = vunpack.c.h.b16 %v2140
      %v3473 = vunpack.c.l.b16 %v2141
      %v3474 = vunpack.c.h.b16 %v2141
      %v3475 = vunpack.c.l.b16 %v2142
      %v3476 = vunpack.c.h.b16 %v2142
      %v3477 = vunpack.c.l.b16 %v2143
      %v3478 = vunpack.c.h.b16 %v2143
      %v3479 = vunpack.c.l.b16 %v2144
      %v3480 = vunpack.c.h.b16 %v2144
      %v3481 = vunpack.c.l.b16 %v2145
      %v3482 = vunpack.c.h.b16 %v2145
      %v3483 = vunpack.c.l.b16 %v2146
      %v3484 = vunpack.c.h.b16 %v2146
      %v3485 = vunpack.c.l.b16 %v2147
      %v3486 = vunpack.c.h.b16 %v2147
      %v3487 = vunpack.c.l.b16 %v2148
      %v3488 = vunpack.c.h.b16 %v2148
      %v3489 = vunpack.c.l.b16 %v2149
      %v3490 = vunpack.c.h.b16 %v2149
      %v3491 = vunpack.c.l.b16 %v2150
      %v3492 = vunpack.c.h.b16 %v2150
      %v3493 = vunpack.c.l.b16 %v2151
      %v3494 = vunpack.c.h.b16 %v2151
      %v3495 = vunpack.c.l.b16 %v2152
      %v3496 = vunpack.c.h.b16 %v2152
      %v3497 = vunpack.c.l.b16 %v2153
      %v3498 = vunpack.c.h.b16 %v2153
      %v3499 = vunpack.c.l.b16 %v2154
      %v3500 = vunpack.c.h.b16 %v2154
      %v3501 = vunpack.c.l.b16 %v2155
      %v3502 = vunpack.c.h.b16 %v2155
      %v3503 = vunpack.c.l.b16 %v2156
      %v3504 = vunpack.c.h.b16 %v2156
      %v3505 = vunpack.c.l.b16 %v2157
      %v3506 = vunpack.c.h.b16 %v2157
      %v3507 = vunpack.c.l.b16 %v2158
      %v3508 = vunpack.c.h.b16 %v2158
      %v3509 = vunpack.c.l.b16 %v2159
      %v3510 = vunpack.c.h.b16 %v2159
      %v3511 = vunpack.c.l.b16 %v2160
      %v3512 = vunpack.c.h.b16 %v2160
      %v3513 = vunpack.c.l.b16 %v2161
      %v3514 = vunpack.c.h.b16 %v2161
      %v3515 = vunpack.c.l.b16 %v2162
      %v3516 = vunpack.c.h.b16 %v2162
      %v3517 = vunpack.c.l.b16 %v2163
      %v3518 = vunpack.c.h.b16 %v2163
      %v3519 = vunpack.c.l.b16 %v2164
      %v3520 = vunpack.c.h.b16 %v2164
      %v3521 = vunpack.c.l.b16 %v2165
      %v3522 = vunpack.c.h.b16 %v2165
      %v3523 = vunpack.c.l.b16 %v2166
      %v3524 = vunpack.c.h.b16 %v2166
      %v3525 = vunpack.c.l.b16 %v2167
      %v3526 = vunpack.c.h.b16 %v2167
      %v3527 = vunpack.c.l.b16 %v2168
      %v3528 = vunpack.c.h.b16 %v2168
      %v3529 = vunpack.c.l.b16 %v2169
      %v3530 = vunpack.c.h.b16 %v2169
      %v3531 = vunpack.c.l.b16 %v2170
      %v3532 = vunpack.c.h.b16 %v2170
      %v3533 = vunpack.c.l.b16 %v2171
      %v3534 = vunpack.c.h.b16 %v2171
      %v3535 = vunpack.c.l.b16 %v2172
      %v3536 = vunpack.c.h.b16 %v2172
      %v3537 = vunpack.c.l.b16 %v2173
      %v3538 = vunpack.c.h.b16 %v2173
      %v3539 = vunpack.c.l.b16 %v2174
      %v3540 = vunpack.c.h.b16 %v2174
      %v3541 = vunpack.c.l.b16 %v2175
      %v3542 = vunpack.c.h.b16 %v2175
      %v3543 = vunpack.c.l.b16 %v2176
      %v3544 = vunpack.c.h.b16 %v2176
      %v3545 = vunpack.c.l.b16 %v2177
      %v3546 = vunpack.c.h.b16 %v2177
      %v3547 = vunpack.c.l.b16 %v2178
      %v3548 = vunpack.c.h.b16 %v2178
      %v3549 = vunpack.c.l.b16 %v2179
      %v3550 = vunpack.c.h.b16 %v2179
      %v3551 = vunpack.c.l.b16 %v2180
      %v3552 = vunpack.c.h.b16 %v2180
      %v3553 = vunpack.c.l.b16 %v2181
      %v3554 = vunpack.c.h.b16 %v2181
      %v3555 = vunpack.c.l.b16 %v2182
      %v3556 = vunpack.c.h.b16 %v2182
      %v3557 = vunpack.c.l.b16 %v2183
      %v3558 = vunpack.c.h.b16 %v2183
      %v3559 = vunpack.c.l.b16 %v2184
      %v3560 = vunpack.c.h.b16 %v2184
      %v3561 = vunpack.c.l.b16 %v2185
      %v3562 = vunpack.c.h.b16 %v2185
      %v3563 = vunpack.c.l.b16 %v2186
      %v3564 = vunpack.c.h.b16 %v2186
      %v3565 = vunpack.c.l.b16 %v2187
      %v3566 = vunpack.c.h.b16 %v2187
      %v3567 = vunpack.c.l.b16 %v2188
      %v3568 = vunpack.c.h.b16 %v2188
      %v3569 = vunpack.c.l.b16 %v2189
      %v3570 = vunpack.c.h.b16 %v2189
      %v3571 = vunpack.c.l.b16 %v2190
      %v3572 = vunpack.c.h.b16 %v2190
      %v3573 = vunpack.c.l.b16 %v2191
      %v3574 = vunpack.c.h.b16 %v2191
      %v3575 = vunpack.c.l.b16 %v2192
      %v3576 = vunpack.c.h.b16 %v2192
      %v3577 = vunpack.c.l.b16 %v2193
      %v3578 = vunpack.c.h.b16 %v2193
      %v3579 = vunpack.c.l.b16 %v2194
      %v3580 = vunpack.c.h.b16 %v2194
      %v3581 = vunpack.c.l.b16 %v2195
      %v3582 = vunpack.c.h.b16 %v2195
      %v3583 = vunpack.c.l.b16 %v2196
      %v3584 = vunpack.c.h.b16 %v2196
      %v3585 = vunpack.c.l.b16 %v2197
      %v3586 = vunpack.c.h.b16 %v2197
      %v3587 = vunpack.c.l.b16 %v2198
      %v3588 = vunpack.c.h.b16 %v2198
      %v3589 = vunpack.c.l.b16 %v2199
      %v3590 = vunpack.c.h.b16 %v2199
      %v3591 = vunpack.c.l.b16 %v2200
      %v3592 = vunpack.c.h.b16 %v2200
      %v3593 = vunpack.c.l.b16 %v2201
      %v3594 = vunpack.c.h.b16 %v2201
      %v3595 = vunpack.c.l.b16 %v2202
      %v3596 = vunpack.c.h.b16 %v2202
      %v3597 = vpack.c.b16 %v3345, %v3341
      %v3598 = vpack.c.b16 %v3346, %v3342
      %v3599 = vpack.c.b16 %v3347, %v3343
      %v3600 = vpack.c.b16 %v3348, %v3344
      %v3601 = vpack.c.b16 %v3353, %v3349
      %v3602 = vpack.c.b16 %v3354, %v3350
      %v3603 = vpack.c.b16 %v3355, %v3351
      %v3604 = vpack.c.b16 %v3356, %v3352
      %v3605 = vpack.c.b16 %v3361, %v3357
      %v3606 = vpack.c.b16 %v3362, %v3358
      %v3607 = vpack.c.b16 %v3363, %v3359
      %v3608 = vpack.c.b16 %v3364, %v3360
      %v3609 = vpack.c.b16 %v3369, %v3365
      %v3610 = vpack.c.b16 %v3370, %v3366
      %v3611 = vpack.c.b16 %v3371, %v3367
      %v3612 = vpack.c.b16 %v3372, %v3368
      %v3613 = vpack.c.b16 %v3377, %v3373
      %v3614 = vpack.c.b16 %v3378, %v3374
      %v3615 = vpack.c.b16 %v3379, %v3375
      %v3616 = vpack.c.b16 %v3380, %v3376
      %v3617 = vpack.c.b16 %v3385, %v3381
      %v3618 = vpack.c.b16 %v3386, %v3382
      %v3619 = vpack.c.b16 %v3387, %v3383
      %v3620 = vpack.c.b16 %v3388, %v3384
      %v3621 = vpack.c.b16 %v3393, %v3389
      %v3622 = vpack.c.b16 %v3394, %v3390
      %v3623 = vpack.c.b16 %v3395, %v3391
      %v3624 = vpack.c.b16 %v3396, %v3392
      %v3625 = vpack.c.b16 %v3401, %v3397
      %v3626 = vpack.c.b16 %v3402, %v3398
      %v3627 = vpack.c.b16 %v3403, %v3399
      %v3628 = vpack.c.b16 %v3404, %v3400
      %v3629 = vpack.c.b16 %v3409, %v3405
      %v3630 = vpack.c.b16 %v3410, %v3406
      %v3631 = vpack.c.b16 %v3411, %v3407
      %v3632 = vpack.c.b16 %v3412, %v3408
      %v3633 = vpack.c.b16 %v3417, %v3413
      %v3634 = vpack.c.b16 %v3418, %v3414
      %v3635 = vpack.c.b16 %v3419, %v3415
      %v3636 = vpack.c.b16 %v3420, %v3416
      %v3637 = vpack.c.b16 %v3425, %v3421
      %v3638 = vpack.c.b16 %v3426, %v3422
      %v3639 = vpack.c.b16 %v3427, %v3423
      %v3640 = vpack.c.b16 %v3428, %v3424
      %v3641 = vpack.c.b16 %v3433, %v3429
      %v3642 = vpack.c.b16 %v3434, %v3430
      %v3643 = vpack.c.b16 %v3435, %v3431
      %v3644 = vpack.c.b16 %v3436, %v3432
      %v3645 = vpack.c.b16 %v3441, %v3437
      %v3646 = vpack.c.b16 %v3442, %v3438
      %v3647 = vpack.c.b16 %v3443, %v3439
      %v3648 = vpack.c.b16 %v3444, %v3440
      %v3649 = vpack.c.b16 %v3449, %v3445
      %v3650 = vpack.c.b16 %v3450, %v3446
      %v3651 = vpack.c.b16 %v3451, %v3447
      %v3652 = vpack.c.b16 %v3452, %v3448
      %v3653 = vpack.c.b16 %v3457, %v3453
      %v3654 = vpack.c.b16 %v3458, %v3454
      %v3655 = vpack.c.b16 %v3459, %v3455
      %v3656 = vpack.c.b16 %v3460, %v3456
      %v3657 = vpack.c.b16 %v3465, %v3461
      %v3658 = vpack.c.b16 %v3466, %v3462
      %v3659 = vpack.c.b16 %v3467, %v3463
      %v3660 = vpack.c.b16 %v3468, %v3464
      %v3661 = vpack.c.b16 %v3473, %v3469
      %v3662 = vpack.c.b16 %v3474, %v3470
      %v3663 = vpack.c.b16 %v3475, %v3471
      %v3664 = vpack.c.b16 %v3476, %v3472
      %v3665 = vpack.c.b16 %v3481, %v3477
      %v3666 = vpack.c.b16 %v3482, %v3478
      %v3667 = vpack.c.b16 %v3483, %v3479
      %v3668 = vpack.c.b16 %v3484, %v3480
      %v3669 = vpack.c.b16 %v3489, %v3485
      %v3670 = vpack.c.b16 %v3490, %v3486
      %v3671 = vpack.c.b16 %v3491, %v3487
      %v3672 = vpack.c.b16 %v3492, %v3488
      %v3673 = vpack.c.b16 %v3497, %v3493
      %v3674 = vpack.c.b16 %v3498, %v3494
      %v3675 = vpack.c.b16 %v3499, %v3495
      %v3676 = vpack.c.b16 %v3500, %v3496
      %v3677 = vpack.c.b16 %v3505, %v3501
      %v3678 = vpack.c.b16 %v3506, %v3502
      %v3679 = vpack.c.b16 %v3507, %v3503
      %v3680 = vpack.c.b16 %v3508, %v3504
      %v3681 = vpack.c.b16 %v3513, %v3509
      %v3682 = vpack.c.b16 %v3514, %v3510
      %v3683 = vpack.c.b16 %v3515, %v3511
      %v3684 = vpack.c.b16 %v3516, %v3512
      %v3685 = vpack.c.b16 %v3521, %v3517
      %v3686 = vpack.c.b16 %v3522, %v3518
      %v3687 = vpack.c.b16 %v3523, %v3519
      %v3688 = vpack.c.b16 %v3524, %v3520
      %v3689 = vpack.c.b16 %v3529, %v3525
      %v3690 = vpack.c.b16 %v3530, %v3526
      %v3691 = vpack.c.b16 %v3531, %v3527
      %v3692 = vpack.c.b16 %v3532, %v3528
      %v3693 = vpack.c.b16 %v3537, %v3533
      %v3694 = vpack.c.b16 %v3538, %v3534
      %v3695 = vpack.c.b16 %v3539, %v3535
      %v3696 = vpack.c.b16 %v3540, %v3536
      %v3697 = vpack.c.b16 %v3545, %v3541
      %v3698 = vpack.c.b16 %v3546, %v3542
      %v3699 = vpack.c.b16 %v3547, %v3543
      %v3700 = vpack.c.b16 %v3548, %v3544
      %v3701 = vpack.c.b16 %v3553, %v3549
      %v3702 = vpack.c.b16 %v3554, %v3550
      %v3703 = vpack.c.b16 %v3555, %v3551
      %v3704 = vpack.c.b16 %v3556, %v3552
      %v3705 = vpack.c.b16 %v3561, %v3557
      %v3706 = vpack.c.b16 %v3562, %v3558
      %v3707 = vpack.c.b16 %v3563, %v3559
      %v3708 = vpack.c.b16 %v3564, %v3560
      %v3709 = vpack.c.b16 %v3569, %v3565
      %v3710 = vpack.c.b16 %v3570, %v3566
      %v3711 = vpack.c.b16 %v3571, %v3567
      %v3712 = vpack.c.b16 %v3572, %v3568
      %v3713 = vpack.c.b16 %v3577, %v3573
      %v3714 = vpack.c.b16 %v3578, %v3574
      %v3715 = vpack.c.b16 %v3579, %v3575
      %v3716 = vpack.c.b16 %v3580, %v3576
      %v3717 = vpack.c.b16 %v3585, %v3581
      %v3718 = vpack.c.b16 %v3586, %v3582
      %v3719 = vpack.c.b16 %v3587, %v3583
      %v3720 = vpack.c.b16 %v3588, %v3584
      %v3721 = vpack.c.b16 %v3593, %v3589
      %v3722 = vpack.c.b16 %v3594, %v3590
      %v3723 = vpack.c.b16 %v3595, %v3591
      %v3724 = vpack.c.b16 %v3596, %v3592
      %3853 = vmatprep.subr.bf16.mxu0 %v3626
      %3854 = vmatpush1.bf16.msra.mxu0 %v3625
      %3855 = vmatprep.subr.bf16.mxu0 %v3622
      %3856 = vmatpush1.bf16.msra.mxu0 %v3621
      %3857 = vmatprep.subr.bf16.mxu0 %v3618
      %3858 = vmatpush1.bf16.msra.mxu0 %v3617
      %3859 = vmatprep.subr.bf16.mxu0 %v3614
      %3860 = vmatpush1.bf16.msra.mxu0 %v3613
      %3861 = vmatprep.subr.bf16.mxu0 %v3610
      %3862 = vmatpush1.bf16.msra.mxu0 %v3609
      %3863 = vmatprep.subr.bf16.mxu0 %v3606
      %3864 = vmatpush1.bf16.msra.mxu0 %v3605
      %3865 = vmatprep.subr.bf16.mxu0 %v3602
      %3866 = vmatpush1.bf16.msra.mxu0 %v3601
      %3867 = vmatprep.subr.bf16.mxu0 %v3598
      %3868 = vmatpush1.bf16.msra.mxu0 %v3597
      %3869 = vmatprep.subr.bf16.mxu0 %v3658
      %3870 = vmatpush2.bf16.msra.mxu0 %v3657
      %3871 = vmatprep.subr.bf16.mxu0 %v3654
      %3872 = vmatpush2.bf16.msra.mxu0 %v3653
      %3873 = vmatprep.subr.bf16.mxu0 %v3650
      %3874 = vmatpush2.bf16.msra.mxu0 %v3649
      %3875 = vmatprep.subr.bf16.mxu0 %v3646
      %3876 = vmatpush2.bf16.msra.mxu0 %v3645
      %3877 = vmatprep.subr.bf16.mxu0 %v3642
      %3878 = vmatpush2.bf16.msra.mxu0 %v3641
      %3879 = vmatprep.subr.bf16.mxu0 %v3638
      %3880 = vmatpush2.bf16.msra.mxu0 %v3637
      %3881 = vmatprep.subr.bf16.mxu0 %v3634
      %3882 = vmatpush2.bf16.msra.mxu0 %v3633
      %3883 = vmatprep.subr.bf16.mxu0 %v3630
      %3884 = vmatpush2.bf16.msra.mxu0 %v3629
      %3885 = vmatprep.mubr.bf16.mxu0 %v2072
      %3886 = vmatmul.mubr.bf16.gmra.mxu0 %v2071
      %v3887 = vpop.f32.mrf.mxu0
      %v3888 = vadd.f32 %v3119, %v3887
      %v3889 = vpop.f32.mrf.mxu0
      %v3890 = vadd.f32 %v3121, %v3889
      %v3891 = vpop.f32.mrf.mxu0
      %v3892 = vadd.f32 %v3123, %v3891
      %v3893 = vpop.f32.mrf.mxu0
      %v3894 = vadd.f32 %v3125, %v3893
      %3895 = vdwg.mxu0
      %3896 = vmatprep.subr.bf16.mxu0 %v3690
      %3897 = vmatpush1.bf16.msra.mxu0 %v3689
      %3898 = vmatprep.subr.bf16.mxu0 %v3686
      %3899 = vmatpush1.bf16.msra.mxu0 %v3685
      %3900 = vmatprep.subr.bf16.mxu0 %v3682
      %3901 = vmatpush1.bf16.msra.mxu0 %v3681
      %3902 = vmatprep.subr.bf16.mxu0 %v3678
      %3903 = vmatpush1.bf16.msra.mxu0 %v3677
      %3904 = vmatprep.subr.bf16.mxu0 %v3674
      %3905 = vmatpush1.bf16.msra.mxu0 %v3673
      %3906 = vmatprep.subr.bf16.mxu0 %v3670
      %3907 = vmatpush1.bf16.msra.mxu0 %v3669
      %3908 = vmatprep.subr.bf16.mxu0 %v3666
      %3909 = vmatpush1.bf16.msra.mxu0 %v3665
      %3910 = vmatprep.subr.bf16.mxu0 %v3662
      %3911 = vmatpush1.bf16.msra.mxu0 %v3661
      %3912 = vmatprep.subr.bf16.mxu0 %v3722
      %3913 = vmatpush2.bf16.msra.mxu0 %v3721
      %3914 = vmatprep.subr.bf16.mxu0 %v3718
      %3915 = vmatpush2.bf16.msra.mxu0 %v3717
      %3916 = vmatprep.subr.bf16.mxu0 %v3714
      %3917 = vmatpush2.bf16.msra.mxu0 %v3713
      %3918 = vmatprep.subr.bf16.mxu0 %v3710
      %3919 = vmatpush2.bf16.msra.mxu0 %v3709
      %3920 = vmatprep.subr.bf16.mxu0 %v3706
      %3921 = vmatpush2.bf16.msra.mxu0 %v3705
      %3922 = vmatprep.subr.bf16.mxu0 %v3702
      %3923 = vmatpush2.bf16.msra.mxu0 %v3701
      %3924 = vmatprep.subr.bf16.mxu0 %v3698
      %3925 = vmatpush2.bf16.msra.mxu0 %v3697
      %3926 = vmatprep.subr.bf16.mxu0 %v3694
      %3927 = vmatpush2.bf16.msra.mxu0 %v3693
      %3928 = vmatprep.mubr.bf16.mxu0 %v2074
      %3929 = vmatmul.mubr.bf16.gmra.mxu0 %v2073
      %v3930 = vpop.f32.mrf.mxu0
      %v3931 = vadd.f32 %v3888, %v3930
      %v3932 = vpop.f32.mrf.mxu0
      %v3933 = vadd.f32 %v3890, %v3932
      %v3934 = vpop.f32.mrf.mxu0
      %v3935 = vadd.f32 %v3892, %v3934
      %v3936 = vpop.f32.mrf.mxu0
      %v3937 = vadd.f32 %v3894, %v3936
      %3938 = vdwg.mxu0
      %3939 = vmatprep.subr.bf16.mxu0 %v3628
      %3940 = vmatpush1.bf16.msra.mxu0 %v3627
      %3941 = vmatprep.subr.bf16.mxu0 %v3624
      %3942 = vmatpush1.bf16.msra.mxu0 %v3623
      %3943 = vmatprep.subr.bf16.mxu0 %v3620
      %3944 = vmatpush1.bf16.msra.mxu0 %v3619
      %3945 = vmatprep.subr.bf16.mxu0 %v3616
      %3946 = vmatpush1.bf16.msra.mxu0 %v3615
      %3947 = vmatprep.subr.bf16.mxu0 %v3612
      %3948 = vmatpush1.bf16.msra.mxu0 %v3611
      %3949 = vmatprep.subr.bf16.mxu0 %v3608
      %3950 = vmatpush1.bf16.msra.mxu0 %v3607
      %3951 = vmatprep.subr.bf16.mxu0 %v3604
      %3952 = vmatpush1.bf16.msra.mxu0 %v3603
      %3953 = vmatprep.subr.bf16.mxu0 %v3600
      %3954 = vmatpush1.bf16.msra.mxu0 %v3599
      %3955 = vmatprep.subr.bf16.mxu0 %v3660
      %3956 = vmatpush2.bf16.msra.mxu0 %v3659
      %3957 = vmatprep.subr.bf16.mxu0 %v3656
      %3958 = vmatpush2.bf16.msra.mxu0 %v3655
      %3959 = vmatprep.subr.bf16.mxu0 %v3652
      %3960 = vmatpush2.bf16.msra.mxu0 %v3651
      %3961 = vmatprep.subr.bf16.mxu0 %v3648
      %3962 = vmatpush2.bf16.msra.mxu0 %v3647
      %3963 = vmatprep.subr.bf16.mxu0 %v3644
      %3964 = vmatpush2.bf16.msra.mxu0 %v3643
      %3965 = vmatprep.subr.bf16.mxu0 %v3640
      %3966 = vmatpush2.bf16.msra.mxu0 %v3639
      %3967 = vmatprep.subr.bf16.mxu0 %v3636
      %3968 = vmatpush2.bf16.msra.mxu0 %v3635
      %3969 = vmatprep.subr.bf16.mxu0 %v3632
      %3970 = vmatpush2.bf16.msra.mxu0 %v3631
      %3971 = vmatprep.mubr.bf16.mxu0 %v2072
      %3972 = vmatmul.mubr.bf16.gmra.mxu0 %v2071
      %v3973 = vpop.f32.mrf.mxu0
      %v3974 = vadd.f32 %v3205, %v3973
      %v3975 = vpop.f32.mrf.mxu0
      %v3976 = vadd.f32 %v3207, %v3975
      %v3977 = vpop.f32.mrf.mxu0
      %v3978 = vadd.f32 %v3209, %v3977
      %v3979 = vpop.f32.mrf.mxu0
      %v3980 = vadd.f32 %v3211, %v3979
      %3981 = vdwg.mxu0
      %3982 = vmatprep.subr.bf16.mxu0 %v3692
      %3983 = vmatpush1.bf16.msra.mxu0 %v3691
      %3984 = vmatprep.subr.bf16.mxu0 %v3688
      %3985 = vmatpush1.bf16.msra.mxu0 %v3687
      %3986 = vmatprep.subr.bf16.mxu0 %v3684
      %3987 = vmatpush1.bf16.msra.mxu0 %v3683
      %3988 = vmatprep.subr.bf16.mxu0 %v3680
      %3989 = vmatpush1.bf16.msra.mxu0 %v3679
      %3990 = vmatprep.subr.bf16.mxu0 %v3676
      %3991 = vmatpush1.bf16.msra.mxu0 %v3675
      %3992 = vmatprep.subr.bf16.mxu0 %v3672
      %3993 = vmatpush1.bf16.msra.mxu0 %v3671
      %3994 = vmatprep.subr.bf16.mxu0 %v3668
      %3995 = vmatpush1.bf16.msra.mxu0 %v3667
      %3996 = vmatprep.subr.bf16.mxu0 %v3664
      %3997 = vmatpush1.bf16.msra.mxu0 %v3663
      %3998 = vmatprep.subr.bf16.mxu0 %v3724
      %3999 = vmatpush2.bf16.msra.mxu0 %v3723
      %4000 = vmatprep.subr.bf16.mxu0 %v3720
      %4001 = vmatpush2.bf16.msra.mxu0 %v3719
      %4002 = vmatprep.subr.bf16.mxu0 %v3716
      %4003 = vmatpush2.bf16.msra.mxu0 %v3715
      %4004 = vmatprep.subr.bf16.mxu0 %v3712
      %4005 = vmatpush2.bf16.msra.mxu0 %v3711
      %4006 = vmatprep.subr.bf16.mxu0 %v3708
      %4007 = vmatpush2.bf16.msra.mxu0 %v3707
      %4008 = vmatprep.subr.bf16.mxu0 %v3704
      %4009 = vmatpush2.bf16.msra.mxu0 %v3703
      %4010 = vmatprep.subr.bf16.mxu0 %v3700
      %4011 = vmatpush2.bf16.msra.mxu0 %v3699
      %4012 = vmatprep.subr.bf16.mxu0 %v3696
      %4013 = vmatpush2.bf16.msra.mxu0 %v3695
      %4014 = vmatprep.mubr.bf16.mxu0 %v2074
      %4015 = vmatmul.mubr.bf16.gmra.mxu0 %v2073
      %v4016 = vpop.f32.mrf.mxu0
      %v4017 = vadd.f32 %v3974, %v4016
      %v4018 = vpop.f32.mrf.mxu0
      %v4019 = vadd.f32 %v3976, %v4018
      %v4020 = vpop.f32.mrf.mxu0
      %v4021 = vadd.f32 %v3978, %v4020
      %v4022 = vpop.f32.mrf.mxu0
      %v4023 = vadd.f32 %v3980, %v4022
      %4024 = vdwg.mxu0
      %v4025 = vld [vmem:[#allocation3] sm:$0xfc]
      %v4026 = vld [vmem:[#allocation3 + $0x8] sm:$0xfc]
      %v4027 = vld [vmem:[#allocation3 + $0x10] sm:$0xfc]
      %v4028 = vld [vmem:[#allocation3 + $0x18] sm:$0xfc]
      %v4029 = vld [vmem:[#allocation3 + $0x40] sm:$0x3]
      %v4030 = vld [vmem:[#allocation3 + $0x48] sm:$0x3]
      %v4031 = vld [vmem:[#allocation3 + $0x50] sm:$0x3]
      %v4032 = vld [vmem:[#allocation3 + $0x58] sm:$0x3]
      %v4033 = vpack.c.bf16 %v2067, %v4025
      %v4034 = vpack.c.bf16 %v2068, %v4026
      %v4035 = vpack.c.bf16 %v2069, %v4027
      %v4036 = vpack.c.bf16 %v2070, %v4028
      %v4037 = vpack.c.bf16 %v4029, %v4029
      %v4038 = vpack.c.bf16 %v4030, %v4030
      %v4039 = vpack.c.bf16 %v4031, %v4031
      %v4040 = vpack.c.bf16 %v4032, %v4032
      %s4041 = scalar_lea.vmem %s5, 2048
      %v4042 = vld [vmem:[%s4041] sm:$0xff]
      %v4043 = vld [vmem:[%s4041 + $0x8] sm:$0xff]
      %v4044 = vld [vmem:[%s4041 + $0x10] sm:$0xff]
      %v4045 = vld [vmem:[%s4041 + $0x18] sm:$0xff]
      %v4046 = vld [vmem:[%s4041 + $0x20] sm:$0xff]
      %v4047 = vld [vmem:[%s4041 + $0x28] sm:$0xff]
      %v4048 = vld [vmem:[%s4041 + $0x30] sm:$0xff]
      %v4049 = vld [vmem:[%s4041 + $0x38] sm:$0xff]
      %v4050 = vld [vmem:[%s4041 + $0x40] sm:$0xff]
      %v4051 = vld [vmem:[%s4041 + $0x48] sm:$0xff]
      %v4052 = vld [vmem:[%s4041 + $0x50] sm:$0xff]
      %v4053 = vld [vmem:[%s4041 + $0x58] sm:$0xff]
      %v4054 = vld [vmem:[%s4041 + $0x60] sm:$0xff]
      %v4055 = vld [vmem:[%s4041 + $0x68] sm:$0xff]
      %v4056 = vld [vmem:[%s4041 + $0x70] sm:$0xff]
      %v4057 = vld [vmem:[%s4041 + $0x78] sm:$0xff]
      %v4058 = vld [vmem:[%s4041 + $0x80] sm:$0xff]
      %v4059 = vld [vmem:[%s4041 + $0x88] sm:$0xff]
      %v4060 = vld [vmem:[%s4041 + $0x90] sm:$0xff]
      %v4061 = vld [vmem:[%s4041 + $0x98] sm:$0xff]
      %v4062 = vld [vmem:[%s4041 + $0xa0] sm:$0xff]
      %v4063 = vld [vmem:[%s4041 + $0xa8] sm:$0xff]
      %v4064 = vld [vmem:[%s4041 + $0xb0] sm:$0xff]
      %v4065 = vld [vmem:[%s4041 + $0xb8] sm:$0xff]
      %v4066 = vld [vmem:[%s4041 + $0xc0] sm:$0xff]
      %v4067 = vld [vmem:[%s4041 + $0xc8] sm:$0xff]
      %v4068 = vld [vmem:[%s4041 + $0xd0] sm:$0xff]
      %v4069 = vld [vmem:[%s4041 + $0xd8] sm:$0xff]
      %v4070 = vld [vmem:[%s4041 + $0xe0] sm:$0xff]
      %v4071 = vld [vmem:[%s4041 + $0xe8] sm:$0xff]
      %v4072 = vld [vmem:[%s4041 + $0xf0] sm:$0xff]
      %v4073 = vld [vmem:[%s4041 + $0xf8] sm:$0xff]
      %v4074 = vld [vmem:[%s4041 + $0x100] sm:$0xff]
      %v4075 = vld [vmem:[%s4041 + $0x108] sm:$0xff]
      %v4076 = vld [vmem:[%s4041 + $0x110] sm:$0xff]
      %v4077 = vld [vmem:[%s4041 + $0x118] sm:$0xff]
      %v4078 = vld [vmem:[%s4041 + $0x120] sm:$0xff]
      %v4079 = vld [vmem:[%s4041 + $0x128] sm:$0xff]
      %v4080 = vld [vmem:[%s4041 + $0x130] sm:$0xff]
      %v4081 = vld [vmem:[%s4041 + $0x138] sm:$0xff]
      %v4082 = vld [vmem:[%s4041 + $0x140] sm:$0xff]
      %v4083 = vld [vmem:[%s4041 + $0x148] sm:$0xff]
      %v4084 = vld [vmem:[%s4041 + $0x150] sm:$0xff]
      %v4085 = vld [vmem:[%s4041 + $0x158] sm:$0xff]
      %v4086 = vld [vmem:[%s4041 + $0x160] sm:$0xff]
      %v4087 = vld [vmem:[%s4041 + $0x168] sm:$0xff]
      %v4088 = vld [vmem:[%s4041 + $0x170] sm:$0xff]
      %v4089 = vld [vmem:[%s4041 + $0x178] sm:$0xff]
      %v4090 = vld [vmem:[%s4041 + $0x180] sm:$0xff]
      %v4091 = vld [vmem:[%s4041 + $0x188] sm:$0xff]
      %v4092 = vld [vmem:[%s4041 + $0x190] sm:$0xff]
      %v4093 = vld [vmem:[%s4041 + $0x198] sm:$0xff]
      %v4094 = vld [vmem:[%s4041 + $0x1a0] sm:$0xff]
      %v4095 = vld [vmem:[%s4041 + $0x1a8] sm:$0xff]
      %v4096 = vld [vmem:[%s4041 + $0x1b0] sm:$0xff]
      %v4097 = vld [vmem:[%s4041 + $0x1b8] sm:$0xff]
      %v4098 = vld [vmem:[%s4041 + $0x1c0] sm:$0xff]
      %v4099 = vld [vmem:[%s4041 + $0x1c8] sm:$0xff]
      %v4100 = vld [vmem:[%s4041 + $0x1d0] sm:$0xff]
      %v4101 = vld [vmem:[%s4041 + $0x1d8] sm:$0xff]
      %v4102 = vld [vmem:[%s4041 + $0x1e0] sm:$0xff]
      %v4103 = vld [vmem:[%s4041 + $0x1e8] sm:$0xff]
      %v4104 = vld [vmem:[%s4041 + $0x1f0] sm:$0xff]
      %v4105 = vld [vmem:[%s4041 + $0x1f8] sm:$0xff]
      %v4106 = vld [vmem:[%s4041 + $0x200] sm:$0xff]
      %v4107 = vld [vmem:[%s4041 + $0x208] sm:$0xff]
      %v4108 = vld [vmem:[%s4041 + $0x210] sm:$0xff]
      %v4109 = vld [vmem:[%s4041 + $0x218] sm:$0xff]
      %v4110 = vld [vmem:[%s4041 + $0x220] sm:$0xff]
      %v4111 = vld [vmem:[%s4041 + $0x228] sm:$0xff]
      %v4112 = vld [vmem:[%s4041 + $0x230] sm:$0xff]
      %v4113 = vld [vmem:[%s4041 + $0x238] sm:$0xff]
      %v4114 = vld [vmem:[%s4041 + $0x240] sm:$0xff]
      %v4115 = vld [vmem:[%s4041 + $0x248] sm:$0xff]
      %v4116 = vld [vmem:[%s4041 + $0x250] sm:$0xff]
      %v4117 = vld [vmem:[%s4041 + $0x258] sm:$0xff]
      %v4118 = vld [vmem:[%s4041 + $0x260] sm:$0xff]
      %v4119 = vld [vmem:[%s4041 + $0x268] sm:$0xff]
      %v4120 = vld [vmem:[%s4041 + $0x270] sm:$0xff]
      %v4121 = vld [vmem:[%s4041 + $0x278] sm:$0xff]
      %v4122 = vld [vmem:[%s4041 + $0x280] sm:$0xff]
      %v4123 = vld [vmem:[%s4041 + $0x288] sm:$0xff]
      %v4124 = vld [vmem:[%s4041 + $0x290] sm:$0xff]
      %v4125 = vld [vmem:[%s4041 + $0x298] sm:$0xff]
      %v4126 = vld [vmem:[%s4041 + $0x2a0] sm:$0xff]
      %v4127 = vld [vmem:[%s4041 + $0x2a8] sm:$0xff]
      %v4128 = vld [vmem:[%s4041 + $0x2b0] sm:$0xff]
      %v4129 = vld [vmem:[%s4041 + $0x2b8] sm:$0xff]
      %v4130 = vld [vmem:[%s4041 + $0x2c0] sm:$0xff]
      %v4131 = vld [vmem:[%s4041 + $0x2c8] sm:$0xff]
      %v4132 = vld [vmem:[%s4041 + $0x2d0] sm:$0xff]
      %v4133 = vld [vmem:[%s4041 + $0x2d8] sm:$0xff]
      %v4134 = vld [vmem:[%s4041 + $0x2e0] sm:$0xff]
      %v4135 = vld [vmem:[%s4041 + $0x2e8] sm:$0xff]
      %v4136 = vld [vmem:[%s4041 + $0x2f0] sm:$0xff]
      %v4137 = vld [vmem:[%s4041 + $0x2f8] sm:$0xff]
      %v4138 = vld [vmem:[%s4041 + $0x300] sm:$0xff]
      %v4139 = vld [vmem:[%s4041 + $0x308] sm:$0xff]
      %v4140 = vld [vmem:[%s4041 + $0x310] sm:$0xff]
      %v4141 = vld [vmem:[%s4041 + $0x318] sm:$0xff]
      %v4142 = vld [vmem:[%s4041 + $0x320] sm:$0xff]
      %v4143 = vld [vmem:[%s4041 + $0x328] sm:$0xff]
      %v4144 = vld [vmem:[%s4041 + $0x330] sm:$0xff]
      %v4145 = vld [vmem:[%s4041 + $0x338] sm:$0xff]
      %v4146 = vld [vmem:[%s4041 + $0x340] sm:$0xff]
      %v4147 = vld [vmem:[%s4041 + $0x348] sm:$0xff]
      %v4148 = vld [vmem:[%s4041 + $0x350] sm:$0xff]
      %v4149 = vld [vmem:[%s4041 + $0x358] sm:$0xff]
      %v4150 = vld [vmem:[%s4041 + $0x360] sm:$0xff]
      %v4151 = vld [vmem:[%s4041 + $0x368] sm:$0xff]
      %v4152 = vld [vmem:[%s4041 + $0x370] sm:$0xff]
      %v4153 = vld [vmem:[%s4041 + $0x378] sm:$0xff]
      %v4154 = vld [vmem:[%s4041 + $0x380] sm:$0xff]
      %v4155 = vld [vmem:[%s4041 + $0x388] sm:$0xff]
      %v4156 = vld [vmem:[%s4041 + $0x390] sm:$0xff]
      %v4157 = vld [vmem:[%s4041 + $0x398] sm:$0xff]
      %v4158 = vld [vmem:[%s4041 + $0x3a0] sm:$0xff]
      %v4159 = vld [vmem:[%s4041 + $0x3a8] sm:$0xff]
      %v4160 = vld [vmem:[%s4041 + $0x3b0] sm:$0xff]
      %v4161 = vld [vmem:[%s4041 + $0x3b8] sm:$0xff]
      %v4162 = vld [vmem:[%s4041 + $0x3c0] sm:$0xff]
      %v4163 = vld [vmem:[%s4041 + $0x3c8] sm:$0xff]
      %v4164 = vld [vmem:[%s4041 + $0x3d0] sm:$0xff]
      %v4165 = vld [vmem:[%s4041 + $0x3d8] sm:$0xff]
      %v4166 = vld [vmem:[%s4041 + $0x3e0] sm:$0xff]
      %v4167 = vld [vmem:[%s4041 + $0x3e8] sm:$0xff]
      %v4168 = vld [vmem:[%s4041 + $0x3f0] sm:$0xff]
      %v4169 = vld [vmem:[%s4041 + $0x3f8] sm:$0xff]
      %vm4178 = vcmask 1046528
      %v4179 = vrot.slane %v4033, 1
      %v4180 = vrot.slane %v4037, 1
      %v4181 = vsel %vm4178, %v4179, %v4180
      %v4182 = vrot.slane %v4034, 1
      %v4183 = vrot.slane %v4038, 1
      %v4184 = vsel %vm4178, %v4182, %v4183
      %v4185 = vrot.slane %v4035, 1
      %v4186 = vrot.slane %v4039, 1
      %v4187 = vsel %vm4178, %v4185, %v4186
      %v4188 = vrot.slane %v4036, 1
      %v4189 = vrot.slane %v4040, 1
      %v4190 = vsel %vm4178, %v4188, %v4189
      %v4323 = vunpack.c.l.b16 %v4042
      %v4324 = vunpack.c.h.b16 %v4042
      %v4325 = vunpack.c.l.b16 %v4043
      %v4326 = vunpack.c.h.b16 %v4043
      %v4327 = vunpack.c.l.b16 %v4044
      %v4328 = vunpack.c.h.b16 %v4044
      %v4329 = vunpack.c.l.b16 %v4045
      %v4330 = vunpack.c.h.b16 %v4045
      %v4331 = vunpack.c.l.b16 %v4046
      %v4332 = vunpack.c.h.b16 %v4046
      %v4333 = vunpack.c.l.b16 %v4047
      %v4334 = vunpack.c.h.b16 %v4047
      %v4335 = vunpack.c.l.b16 %v4048
      %v4336 = vunpack.c.h.b16 %v4048
      %v4337 = vunpack.c.l.b16 %v4049
      %v4338 = vunpack.c.h.b16 %v4049
      %v4339 = vunpack.c.l.b16 %v4050
      %v4340 = vunpack.c.h.b16 %v4050
      %v4341 = vunpack.c.l.b16 %v4051
      %v4342 = vunpack.c.h.b16 %v4051
      %v4343 = vunpack.c.l.b16 %v4052
      %v4344 = vunpack.c.h.b16 %v4052
      %v4345 = vunpack.c.l.b16 %v4053
      %v4346 = vunpack.c.h.b16 %v4053
      %v4347 = vunpack.c.l.b16 %v4054
      %v4348 = vunpack.c.h.b16 %v4054
      %v4349 = vunpack.c.l.b16 %v4055
      %v4350 = vunpack.c.h.b16 %v4055
      %v4351 = vunpack.c.l.b16 %v4056
      %v4352 = vunpack.c.h.b16 %v4056
      %v4353 = vunpack.c.l.b16 %v4057
      %v4354 = vunpack.c.h.b16 %v4057
      %v4355 = vunpack.c.l.b16 %v4058
      %v4356 = vunpack.c.h.b16 %v4058
      %v4357 = vunpack.c.l.b16 %v4059
      %v4358 = vunpack.c.h.b16 %v4059
      %v4359 = vunpack.c.l.b16 %v4060
      %v4360 = vunpack.c.h.b16 %v4060
      %v4361 = vunpack.c.l.b16 %v4061
      %v4362 = vunpack.c.h.b16 %v4061
      %v4363 = vunpack.c.l.b16 %v4062
      %v4364 = vunpack.c.h.b16 %v4062
      %v4365 = vunpack.c.l.b16 %v4063
      %v4366 = vunpack.c.h.b16 %v4063
      %v4367 = vunpack.c.l.b16 %v4064
      %v4368 = vunpack.c.h.b16 %v4064
      %v4369 = vunpack.c.l.b16 %v4065
      %v4370 = vunpack.c.h.b16 %v4065
      %v4371 = vunpack.c.l.b16 %v4066
      %v4372 = vunpack.c.h.b16 %v4066
      %v4373 = vunpack.c.l.b16 %v4067
      %v4374 = vunpack.c.h.b16 %v4067
      %v4375 = vunpack.c.l.b16 %v4068
      %v4376 = vunpack.c.h.b16 %v4068
      %v4377 = vunpack.c.l.b16 %v4069
      %v4378 = vunpack.c.h.b16 %v4069
      %v4379 = vunpack.c.l.b16 %v4070
      %v4380 = vunpack.c.h.b16 %v4070
      %v4381 = vunpack.c.l.b16 %v4071
      %v4382 = vunpack.c.h.b16 %v4071
      %v4383 = vunpack.c.l.b16 %v4072
      %v4384 = vunpack.c.h.b16 %v4072
      %v4385 = vunpack.c.l.b16 %v4073
      %v4386 = vunpack.c.h.b16 %v4073
      %v4387 = vunpack.c.l.b16 %v4074
      %v4388 = vunpack.c.h.b16 %v4074
      %v4389 = vunpack.c.l.b16 %v4075
      %v4390 = vunpack.c.h.b16 %v4075
      %v4391 = vunpack.c.l.b16 %v4076
      %v4392 = vunpack.c.h.b16 %v4076
      %v4393 = vunpack.c.l.b16 %v4077
      %v4394 = vunpack.c.h.b16 %v4077
      %v4395 = vunpack.c.l.b16 %v4078
      %v4396 = vunpack.c.h.b16 %v4078
      %v4397 = vunpack.c.l.b16 %v4079
      %v4398 = vunpack.c.h.b16 %v4079
      %v4399 = vunpack.c.l.b16 %v4080
      %v4400 = vunpack.c.h.b16 %v4080
      %v4401 = vunpack.c.l.b16 %v4081
      %v4402 = vunpack.c.h.b16 %v4081
      %v4403 = vunpack.c.l.b16 %v4082
      %v4404 = vunpack.c.h.b16 %v4082
      %v4405 = vunpack.c.l.b16 %v4083
      %v4406 = vunpack.c.h.b16 %v4083
      %v4407 = vunpack.c.l.b16 %v4084
      %v4408 = vunpack.c.h.b16 %v4084
      %v4409 = vunpack.c.l.b16 %v4085
      %v4410 = vunpack.c.h.b16 %v4085
      %v4411 = vunpack.c.l.b16 %v4086
      %v4412 = vunpack.c.h.b16 %v4086
      %v4413 = vunpack.c.l.b16 %v4087
      %v4414 = vunpack.c.h.b16 %v4087
      %v4415 = vunpack.c.l.b16 %v4088
      %v4416 = vunpack.c.h.b16 %v4088
      %v4417 = vunpack.c.l.b16 %v4089
      %v4418 = vunpack.c.h.b16 %v4089
      %v4419 = vunpack.c.l.b16 %v4090
      %v4420 = vunpack.c.h.b16 %v4090
      %v4421 = vunpack.c.l.b16 %v4091
      %v4422 = vunpack.c.h.b16 %v4091
      %v4423 = vunpack.c.l.b16 %v4092
      %v4424 = vunpack.c.h.b16 %v4092
      %v4425 = vunpack.c.l.b16 %v4093
      %v4426 = vunpack.c.h.b16 %v4093
      %v4427 = vunpack.c.l.b16 %v4094
      %v4428 = vunpack.c.h.b16 %v4094
      %v4429 = vunpack.c.l.b16 %v4095
      %v4430 = vunpack.c.h.b16 %v4095
      %v4431 = vunpack.c.l.b16 %v4096
      %v4432 = vunpack.c.h.b16 %v4096
      %v4433 = vunpack.c.l.b16 %v4097
      %v4434 = vunpack.c.h.b16 %v4097
      %v4435 = vunpack.c.l.b16 %v4098
      %v4436 = vunpack.c.h.b16 %v4098
      %v4437 = vunpack.c.l.b16 %v4099
      %v4438 = vunpack.c.h.b16 %v4099
      %v4439 = vunpack.c.l.b16 %v4100
      %v4440 = vunpack.c.h.b16 %v4100
      %v4441 = vunpack.c.l.b16 %v4101
      %v4442 = vunpack.c.h.b16 %v4101
      %v4443 = vunpack.c.l.b16 %v4102
      %v4444 = vunpack.c.h.b16 %v4102
      %v4445 = vunpack.c.l.b16 %v4103
      %v4446 = vunpack.c.h.b16 %v4103
      %v4447 = vunpack.c.l.b16 %v4104
      %v4448 = vunpack.c.h.b16 %v4104
      %v4449 = vunpack.c.l.b16 %v4105
      %v4450 = vunpack.c.h.b16 %v4105
      %v4451 = vunpack.c.l.b16 %v4106
      %v4452 = vunpack.c.h.b16 %v4106
      %v4453 = vunpack.c.l.b16 %v4107
      %v4454 = vunpack.c.h.b16 %v4107
      %v4455 = vunpack.c.l.b16 %v4108
      %v4456 = vunpack.c.h.b16 %v4108
      %v4457 = vunpack.c.l.b16 %v4109
      %v4458 = vunpack.c.h.b16 %v4109
      %v4459 = vunpack.c.l.b16 %v4110
      %v4460 = vunpack.c.h.b16 %v4110
      %v4461 = vunpack.c.l.b16 %v4111
      %v4462 = vunpack.c.h.b16 %v4111
      %v4463 = vunpack.c.l.b16 %v4112
      %v4464 = vunpack.c.h.b16 %v4112
      %v4465 = vunpack.c.l.b16 %v4113
      %v4466 = vunpack.c.h.b16 %v4113
      %v4467 = vunpack.c.l.b16 %v4114
      %v4468 = vunpack.c.h.b16 %v4114
      %v4469 = vunpack.c.l.b16 %v4115
      %v4470 = vunpack.c.h.b16 %v4115
      %v4471 = vunpack.c.l.b16 %v4116
      %v4472 = vunpack.c.h.b16 %v4116
      %v4473 = vunpack.c.l.b16 %v4117
      %v4474 = vunpack.c.h.b16 %v4117
      %v4475 = vunpack.c.l.b16 %v4118
      %v4476 = vunpack.c.h.b16 %v4118
      %v4477 = vunpack.c.l.b16 %v4119
      %v4478 = vunpack.c.h.b16 %v4119
      %v4479 = vunpack.c.l.b16 %v4120
      %v4480 = vunpack.c.h.b16 %v4120
      %v4481 = vunpack.c.l.b16 %v4121
      %v4482 = vunpack.c.h.b16 %v4121
      %v4483 = vunpack.c.l.b16 %v4122
      %v4484 = vunpack.c.h.b16 %v4122
      %v4485 = vunpack.c.l.b16 %v4123
      %v4486 = vunpack.c.h.b16 %v4123
      %v4487 = vunpack.c.l.b16 %v4124
      %v4488 = vunpack.c.h.b16 %v4124
      %v4489 = vunpack.c.l.b16 %v4125
      %v4490 = vunpack.c.h.b16 %v4125
      %v4491 = vunpack.c.l.b16 %v4126
      %v4492 = vunpack.c.h.b16 %v4126
      %v4493 = vunpack.c.l.b16 %v4127
      %v4494 = vunpack.c.h.b16 %v4127
      %v4495 = vunpack.c.l.b16 %v4128
      %v4496 = vunpack.c.h.b16 %v4128
      %v4497 = vunpack.c.l.b16 %v4129
      %v4498 = vunpack.c.h.b16 %v4129
      %v4499 = vunpack.c.l.b16 %v4130
      %v4500 = vunpack.c.h.b16 %v4130
      %v4501 = vunpack.c.l.b16 %v4131
      %v4502 = vunpack.c.h.b16 %v4131
      %v4503 = vunpack.c.l.b16 %v4132
      %v4504 = vunpack.c.h.b16 %v4132
      %v4505 = vunpack.c.l.b16 %v4133
      %v4506 = vunpack.c.h.b16 %v4133
      %v4507 = vunpack.c.l.b16 %v4134
      %v4508 = vunpack.c.h.b16 %v4134
      %v4509 = vunpack.c.l.b16 %v4135
      %v4510 = vunpack.c.h.b16 %v4135
      %v4511 = vunpack.c.l.b16 %v4136
      %v4512 = vunpack.c.h.b16 %v4136
      %v4513 = vunpack.c.l.b16 %v4137
      %v4514 = vunpack.c.h.b16 %v4137
      %v4515 = vunpack.c.l.b16 %v4138
      %v4516 = vunpack.c.h.b16 %v4138
      %v4517 = vunpack.c.l.b16 %v4139
      %v4518 = vunpack.c.h.b16 %v4139
      %v4519 = vunpack.c.l.b16 %v4140
      %v4520 = vunpack.c.h.b16 %v4140
      %v4521 = vunpack.c.l.b16 %v4141
      %v4522 = vunpack.c.h.b16 %v4141
      %v4523 = vunpack.c.l.b16 %v4142
      %v4524 = vunpack.c.h.b16 %v4142
      %v4525 = vunpack.c.l.b16 %v4143
      %v4526 = vunpack.c.h.b16 %v4143
      %v4527 = vunpack.c.l.b16 %v4144
      %v4528 = vunpack.c.h.b16 %v4144
      %v4529 = vunpack.c.l.b16 %v4145
      %v4530 = vunpack.c.h.b16 %v4145
      %v4531 = vunpack.c.l.b16 %v4146
      %v4532 = vunpack.c.h.b16 %v4146
      %v4533 = vunpack.c.l.b16 %v4147
      %v4534 = vunpack.c.h.b16 %v4147
      %v4535 = vunpack.c.l.b16 %v4148
      %v4536 = vunpack.c.h.b16 %v4148
      %v4537 = vunpack.c.l.b16 %v4149
      %v4538 = vunpack.c.h.b16 %v4149
      %v4539 = vunpack.c.l.b16 %v4150
      %v4540 = vunpack.c.h.b16 %v4150
      %v4541 = vunpack.c.l.b16 %v4151
      %v4542 = vunpack.c.h.b16 %v4151
      %v4543 = vunpack.c.l.b16 %v4152
      %v4544 = vunpack.c.h.b16 %v4152
      %v4545 = vunpack.c.l.b16 %v4153
      %v4546 = vunpack.c.h.b16 %v4153
      %v4547 = vunpack.c.l.b16 %v4154
      %v4548 = vunpack.c.h.b16 %v4154
      %v4549 = vunpack.c.l.b16 %v4155
      %v4550 = vunpack.c.h.b16 %v4155
      %v4551 = vunpack.c.l.b16 %v4156
      %v4552 = vunpack.c.h.b16 %v4156
      %v4553 = vunpack.c.l.b16 %v4157
      %v4554 = vunpack.c.h.b16 %v4157
      %v4555 = vunpack.c.l.b16 %v4158
      %v4556 = vunpack.c.h.b16 %v4158
      %v4557 = vunpack.c.l.b16 %v4159
      %v4558 = vunpack.c.h.b16 %v4159
      %v4559 = vunpack.c.l.b16 %v4160
      %v4560 = vunpack.c.h.b16 %v4160
      %v4561 = vunpack.c.l.b16 %v4161
      %v4562 = vunpack.c.h.b16 %v4161
      %v4563 = vunpack.c.l.b16 %v4162
      %v4564 = vunpack.c.h.b16 %v4162
      %v4565 = vunpack.c.l.b16 %v4163
      %v4566 = vunpack.c.h.b16 %v4163
      %v4567 = vunpack.c.l.b16 %v4164
      %v4568 = vunpack.c.h.b16 %v4164
      %v4569 = vunpack.c.l.b16 %v4165
      %v4570 = vunpack.c.h.b16 %v4165
      %v4571 = vunpack.c.l.b16 %v4166
      %v4572 = vunpack.c.h.b16 %v4166
      %v4573 = vunpack.c.l.b16 %v4167
      %v4574 = vunpack.c.h.b16 %v4167
      %v4575 = vunpack.c.l.b16 %v4168
      %v4576 = vunpack.c.h.b16 %v4168
      %v4577 = vunpack.c.l.b16 %v4169
      %v4578 = vunpack.c.h.b16 %v4169
      %v4579 = vpack.c.b16 %v4327, %v4323
      %v4580 = vpack.c.b16 %v4328, %v4324
      %v4581 = vpack.c.b16 %v4329, %v4325
      %v4582 = vpack.c.b16 %v4330, %v4326
      %v4583 = vpack.c.b16 %v4335, %v4331
      %v4584 = vpack.c.b16 %v4336, %v4332
      %v4585 = vpack.c.b16 %v4337, %v4333
      %v4586 = vpack.c.b16 %v4338, %v4334
      %v4587 = vpack.c.b16 %v4343, %v4339
      %v4588 = vpack.c.b16 %v4344, %v4340
      %v4589 = vpack.c.b16 %v4345, %v4341
      %v4590 = vpack.c.b16 %v4346, %v4342
      %v4591 = vpack.c.b16 %v4351, %v4347
      %v4592 = vpack.c.b16 %v4352, %v4348
      %v4593 = vpack.c.b16 %v4353, %v4349
      %v4594 = vpack.c.b16 %v4354, %v4350
      %v4595 = vpack.c.b16 %v4359, %v4355
      %v4596 = vpack.c.b16 %v4360, %v4356
      %v4597 = vpack.c.b16 %v4361, %v4357
      %v4598 = vpack.c.b16 %v4362, %v4358
      %v4599 = vpack.c.b16 %v4367, %v4363
      %v4600 = vpack.c.b16 %v4368, %v4364
      %v4601 = vpack.c.b16 %v4369, %v4365
      %v4602 = vpack.c.b16 %v4370, %v4366
      %v4603 = vpack.c.b16 %v4375, %v4371
      %v4604 = vpack.c.b16 %v4376, %v4372
      %v4605 = vpack.c.b16 %v4377, %v4373
      %v4606 = vpack.c.b16 %v4378, %v4374
      %v4607 = vpack.c.b16 %v4383, %v4379
      %v4608 = vpack.c.b16 %v4384, %v4380
      %v4609 = vpack.c.b16 %v4385, %v4381
      %v4610 = vpack.c.b16 %v4386, %v4382
      %v4611 = vpack.c.b16 %v4391, %v4387
      %v4612 = vpack.c.b16 %v4392, %v4388
      %v4613 = vpack.c.b16 %v4393, %v4389
      %v4614 = vpack.c.b16 %v4394, %v4390
      %v4615 = vpack.c.b16 %v4399, %v4395
      %v4616 = vpack.c.b16 %v4400, %v4396
      %v4617 = vpack.c.b16 %v4401, %v4397
      %v4618 = vpack.c.b16 %v4402, %v4398
      %v4619 = vpack.c.b16 %v4407, %v4403
      %v4620 = vpack.c.b16 %v4408, %v4404
      %v4621 = vpack.c.b16 %v4409, %v4405
      %v4622 = vpack.c.b16 %v4410, %v4406
      %v4623 = vpack.c.b16 %v4415, %v4411
      %v4624 = vpack.c.b16 %v4416, %v4412
      %v4625 = vpack.c.b16 %v4417, %v4413
      %v4626 = vpack.c.b16 %v4418, %v4414
      %v4627 = vpack.c.b16 %v4423, %v4419
      %v4628 = vpack.c.b16 %v4424, %v4420
      %v4629 = vpack.c.b16 %v4425, %v4421
      %v4630 = vpack.c.b16 %v4426, %v4422
      %v4631 = vpack.c.b16 %v4431, %v4427
      %v4632 = vpack.c.b16 %v4432, %v4428
      %v4633 = vpack.c.b16 %v4433, %v4429
      %v4634 = vpack.c.b16 %v4434, %v4430
      %v4635 = vpack.c.b16 %v4439, %v4435
      %v4636 = vpack.c.b16 %v4440, %v4436
      %v4637 = vpack.c.b16 %v4441, %v4437
      %v4638 = vpack.c.b16 %v4442, %v4438
      %v4639 = vpack.c.b16 %v4447, %v4443
      %v4640 = vpack.c.b16 %v4448, %v4444
      %v4641 = vpack.c.b16 %v4449, %v4445
      %v4642 = vpack.c.b16 %v4450, %v4446
      %v4643 = vpack.c.b16 %v4455, %v4451
      %v4644 = vpack.c.b16 %v4456, %v4452
      %v4645 = vpack.c.b16 %v4457, %v4453
      %v4646 = vpack.c.b16 %v4458, %v4454
      %v4647 = vpack.c.b16 %v4463, %v4459
      %v4648 = vpack.c.b16 %v4464, %v4460
      %v4649 = vpack.c.b16 %v4465, %v4461
      %v4650 = vpack.c.b16 %v4466, %v4462
      %v4651 = vpack.c.b16 %v4471, %v4467
      %v4652 = vpack.c.b16 %v4472, %v4468
      %v4653 = vpack.c.b16 %v4473, %v4469
      %v4654 = vpack.c.b16 %v4474, %v4470
      %v4655 = vpack.c.b16 %v4479, %v4475
      %v4656 = vpack.c.b16 %v4480, %v4476
      %v4657 = vpack.c.b16 %v4481, %v4477
      %v4658 = vpack.c.b16 %v4482, %v4478
      %v4659 = vpack.c.b16 %v4487, %v4483
      %v4660 = vpack.c.b16 %v4488, %v4484
      %v4661 = vpack.c.b16 %v4489, %v4485
      %v4662 = vpack.c.b16 %v4490, %v4486
      %v4663 = vpack.c.b16 %v4495, %v4491
      %v4664 = vpack.c.b16 %v4496, %v4492
      %v4665 = vpack.c.b16 %v4497, %v4493
      %v4666 = vpack.c.b16 %v4498, %v4494
      %v4667 = vpack.c.b16 %v4503, %v4499
      %v4668 = vpack.c.b16 %v4504, %v4500
      %v4669 = vpack.c.b16 %v4505, %v4501
      %v4670 = vpack.c.b16 %v4506, %v4502
      %v4671 = vpack.c.b16 %v4511, %v4507
      %v4672 = vpack.c.b16 %v4512, %v4508
      %v4673 = vpack.c.b16 %v4513, %v4509
      %v4674 = vpack.c.b16 %v4514, %v4510
      %v4675 = vpack.c.b16 %v4519, %v4515
      %v4676 = vpack.c.b16 %v4520, %v4516
      %v4677 = vpack.c.b16 %v4521, %v4517
      %v4678 = vpack.c.b16 %v4522, %v4518
      %v4679 = vpack.c.b16 %v4527, %v4523
      %v4680 = vpack.c.b16 %v4528, %v4524
      %v4681 = vpack.c.b16 %v4529, %v4525
      %v4682 = vpack.c.b16 %v4530, %v4526
      %v4683 = vpack.c.b16 %v4535, %v4531
      %v4684 = vpack.c.b16 %v4536, %v4532
      %v4685 = vpack.c.b16 %v4537, %v4533
      %v4686 = vpack.c.b16 %v4538, %v4534
      %v4687 = vpack.c.b16 %v4543, %v4539
      %v4688 = vpack.c.b16 %v4544, %v4540
      %v4689 = vpack.c.b16 %v4545, %v4541
      %v4690 = vpack.c.b16 %v4546, %v4542
      %v4691 = vpack.c.b16 %v4551, %v4547
      %v4692 = vpack.c.b16 %v4552, %v4548
      %v4693 = vpack.c.b16 %v4553, %v4549
      %v4694 = vpack.c.b16 %v4554, %v4550
      %v4695 = vpack.c.b16 %v4559, %v4555
      %v4696 = vpack.c.b16 %v4560, %v4556
      %v4697 = vpack.c.b16 %v4561, %v4557
      %v4698 = vpack.c.b16 %v4562, %v4558
      %v4699 = vpack.c.b16 %v4567, %v4563
      %v4700 = vpack.c.b16 %v4568, %v4564
      %v4701 = vpack.c.b16 %v4569, %v4565
      %v4702 = vpack.c.b16 %v4570, %v4566
      %v4703 = vpack.c.b16 %v4575, %v4571
      %v4704 = vpack.c.b16 %v4576, %v4572
      %v4705 = vpack.c.b16 %v4577, %v4573
      %v4706 = vpack.c.b16 %v4578, %v4574
      %4835 = vmatprep.subr.bf16.mxu0 %v4608
      %4836 = vmatpush1.bf16.msra.mxu0 %v4607
      %4837 = vmatprep.subr.bf16.mxu0 %v4604
      %4838 = vmatpush1.bf16.msra.mxu0 %v4603
      %4839 = vmatprep.subr.bf16.mxu0 %v4600
      %4840 = vmatpush1.bf16.msra.mxu0 %v4599
      %4841 = vmatprep.subr.bf16.mxu0 %v4596
      %4842 = vmatpush1.bf16.msra.mxu0 %v4595
      %4843 = vmatprep.subr.bf16.mxu0 %v4592
      %4844 = vmatpush1.bf16.msra.mxu0 %v4591
      %4845 = vmatprep.subr.bf16.mxu0 %v4588
      %4846 = vmatpush1.bf16.msra.mxu0 %v4587
      %4847 = vmatprep.subr.bf16.mxu0 %v4584
      %4848 = vmatpush1.bf16.msra.mxu0 %v4583
      %4849 = vmatprep.subr.bf16.mxu0 %v4580
      %4850 = vmatpush1.bf16.msra.mxu0 %v4579
      %4851 = vmatprep.subr.bf16.mxu0 %v4640
      %4852 = vmatpush2.bf16.msra.mxu0 %v4639
      %4853 = vmatprep.subr.bf16.mxu0 %v4636
      %4854 = vmatpush2.bf16.msra.mxu0 %v4635
      %4855 = vmatprep.subr.bf16.mxu0 %v4632
      %4856 = vmatpush2.bf16.msra.mxu0 %v4631
      %4857 = vmatprep.subr.bf16.mxu0 %v4628
      %4858 = vmatpush2.bf16.msra.mxu0 %v4627
      %4859 = vmatprep.subr.bf16.mxu0 %v4624
      %4860 = vmatpush2.bf16.msra.mxu0 %v4623
      %4861 = vmatprep.subr.bf16.mxu0 %v4620
      %4862 = vmatpush2.bf16.msra.mxu0 %v4619
      %4863 = vmatprep.subr.bf16.mxu0 %v4616
      %4864 = vmatpush2.bf16.msra.mxu0 %v4615
      %4865 = vmatprep.subr.bf16.mxu0 %v4612
      %4866 = vmatpush2.bf16.msra.mxu0 %v4611
      %4867 = vmatprep.mubr.bf16.mxu0 %v4184
      %4868 = vmatmul.mubr.bf16.gmra.mxu0 %v4181
      %v4869 = vpop.f32.mrf.mxu0
      %v4870 = vadd.f32 0.0, %v4869
      %v4871 = vpop.f32.mrf.mxu0
      %v4872 = vadd.f32 0.0, %v4871
      %v4873 = vpop.f32.mrf.mxu0
      %v4874 = vadd.f32 0.0, %v4873
      %v4875 = vpop.f32.mrf.mxu0
      %v4876 = vadd.f32 0.0, %v4875
      %4877 = vdwg.mxu0
      %4878 = vmatprep.subr.bf16.mxu0 %v4672
      %4879 = vmatpush1.bf16.msra.mxu0 %v4671
      %4880 = vmatprep.subr.bf16.mxu0 %v4668
      %4881 = vmatpush1.bf16.msra.mxu0 %v4667
      %4882 = vmatprep.subr.bf16.mxu0 %v4664
      %4883 = vmatpush1.bf16.msra.mxu0 %v4663
      %4884 = vmatprep.subr.bf16.mxu0 %v4660
      %4885 = vmatpush1.bf16.msra.mxu0 %v4659
      %4886 = vmatprep.subr.bf16.mxu0 %v4656
      %4887 = vmatpush1.bf16.msra.mxu0 %v4655
      %4888 = vmatprep.subr.bf16.mxu0 %v4652
      %4889 = vmatpush1.bf16.msra.mxu0 %v4651
      %4890 = vmatprep.subr.bf16.mxu0 %v4648
      %4891 = vmatpush1.bf16.msra.mxu0 %v4647
      %4892 = vmatprep.subr.bf16.mxu0 %v4644
      %4893 = vmatpush1.bf16.msra.mxu0 %v4643
      %4894 = vmatprep.subr.bf16.mxu0 %v4704
      %4895 = vmatpush2.bf16.msra.mxu0 %v4703
      %4896 = vmatprep.subr.bf16.mxu0 %v4700
      %4897 = vmatpush2.bf16.msra.mxu0 %v4699
      %4898 = vmatprep.subr.bf16.mxu0 %v4696
      %4899 = vmatpush2.bf16.msra.mxu0 %v4695
      %4900 = vmatprep.subr.bf16.mxu0 %v4692
      %4901 = vmatpush2.bf16.msra.mxu0 %v4691
      %4902 = vmatprep.subr.bf16.mxu0 %v4688
      %4903 = vmatpush2.bf16.msra.mxu0 %v4687
      %4904 = vmatprep.subr.bf16.mxu0 %v4684
      %4905 = vmatpush2.bf16.msra.mxu0 %v4683
      %4906 = vmatprep.subr.bf16.mxu0 %v4680
      %4907 = vmatpush2.bf16.msra.mxu0 %v4679
      %4908 = vmatprep.subr.bf16.mxu0 %v4676
      %4909 = vmatpush2.bf16.msra.mxu0 %v4675
      %4910 = vmatprep.mubr.bf16.mxu0 %v4190
      %4911 = vmatmul.mubr.bf16.gmra.mxu0 %v4187
      %v4912 = vpop.f32.mrf.mxu0
      %v4913 = vadd.f32 %v4870, %v4912
      %v4914 = vpop.f32.mrf.mxu0
      %v4915 = vadd.f32 %v4872, %v4914
      %v4916 = vpop.f32.mrf.mxu0
      %v4917 = vadd.f32 %v4874, %v4916
      %v4918 = vpop.f32.mrf.mxu0
      %v4919 = vadd.f32 %v4876, %v4918
      %4920 = vdwg.mxu0
      %4921 = vmatprep.subr.bf16.mxu0 %v4610
      %4922 = vmatpush1.bf16.msra.mxu0 %v4609
      %4923 = vmatprep.subr.bf16.mxu0 %v4606
      %4924 = vmatpush1.bf16.msra.mxu0 %v4605
      %4925 = vmatprep.subr.bf16.mxu0 %v4602
      %4926 = vmatpush1.bf16.msra.mxu0 %v4601
      %4927 = vmatprep.subr.bf16.mxu0 %v4598
      %4928 = vmatpush1.bf16.msra.mxu0 %v4597
      %4929 = vmatprep.subr.bf16.mxu0 %v4594
      %4930 = vmatpush1.bf16.msra.mxu0 %v4593
      %4931 = vmatprep.subr.bf16.mxu0 %v4590
      %4932 = vmatpush1.bf16.msra.mxu0 %v4589
      %4933 = vmatprep.subr.bf16.mxu0 %v4586
      %4934 = vmatpush1.bf16.msra.mxu0 %v4585
      %4935 = vmatprep.subr.bf16.mxu0 %v4582
      %4936 = vmatpush1.bf16.msra.mxu0 %v4581
      %4937 = vmatprep.subr.bf16.mxu0 %v4642
      %4938 = vmatpush2.bf16.msra.mxu0 %v4641
      %4939 = vmatprep.subr.bf16.mxu0 %v4638
      %4940 = vmatpush2.bf16.msra.mxu0 %v4637
      %4941 = vmatprep.subr.bf16.mxu0 %v4634
      %4942 = vmatpush2.bf16.msra.mxu0 %v4633
      %4943 = vmatprep.subr.bf16.mxu0 %v4630
      %4944 = vmatpush2.bf16.msra.mxu0 %v4629
      %4945 = vmatprep.subr.bf16.mxu0 %v4626
      %4946 = vmatpush2.bf16.msra.mxu0 %v4625
      %4947 = vmatprep.subr.bf16.mxu0 %v4622
      %4948 = vmatpush2.bf16.msra.mxu0 %v4621
      %4949 = vmatprep.subr.bf16.mxu0 %v4618
      %4950 = vmatpush2.bf16.msra.mxu0 %v4617
      %4951 = vmatprep.subr.bf16.mxu0 %v4614
      %4952 = vmatpush2.bf16.msra.mxu0 %v4613
      %4953 = vmatprep.mubr.bf16.mxu0 %v4184
      %4954 = vmatmul.mubr.bf16.gmra.mxu0 %v4181
      %v4955 = vpop.f32.mrf.mxu0
      %v4956 = vadd.f32 0.0, %v4955
      %v4957 = vpop.f32.mrf.mxu0
      %v4958 = vadd.f32 0.0, %v4957
      %v4959 = vpop.f32.mrf.mxu0
      %v4960 = vadd.f32 0.0, %v4959
      %v4961 = vpop.f32.mrf.mxu0
      %v4962 = vadd.f32 0.0, %v4961
      %4963 = vdwg.mxu0
      %4964 = vmatprep.subr.bf16.mxu0 %v4674
      %4965 = vmatpush1.bf16.msra.mxu0 %v4673
      %4966 = vmatprep.subr.bf16.mxu0 %v4670
      %4967 = vmatpush1.bf16.msra.mxu0 %v4669
      %4968 = vmatprep.subr.bf16.mxu0 %v4666
      %4969 = vmatpush1.bf16.msra.mxu0 %v4665
      %4970 = vmatprep.subr.bf16.mxu0 %v4662
      %4971 = vmatpush1.bf16.msra.mxu0 %v4661
      %4972 = vmatprep.subr.bf16.mxu0 %v4658
      %4973 = vmatpush1.bf16.msra.mxu0 %v4657
      %4974 = vmatprep.subr.bf16.mxu0 %v4654
      %4975 = vmatpush1.bf16.msra.mxu0 %v4653
      %4976 = vmatprep.subr.bf16.mxu0 %v4650
      %4977 = vmatpush1.bf16.msra.mxu0 %v4649
      %4978 = vmatprep.subr.bf16.mxu0 %v4646
      %4979 = vmatpush1.bf16.msra.mxu0 %v4645
      %4980 = vmatprep.subr.bf16.mxu0 %v4706
      %4981 = vmatpush2.bf16.msra.mxu0 %v4705
      %4982 = vmatprep.subr.bf16.mxu0 %v4702
      %4983 = vmatpush2.bf16.msra.mxu0 %v4701
      %4984 = vmatprep.subr.bf16.mxu0 %v4698
      %4985 = vmatpush2.bf16.msra.mxu0 %v4697
      %4986 = vmatprep.subr.bf16.mxu0 %v4694
      %4987 = vmatpush2.bf16.msra.mxu0 %v4693
      %4988 = vmatprep.subr.bf16.mxu0 %v4690
      %4989 = vmatpush2.bf16.msra.mxu0 %v4689
      %4990 = vmatprep.subr.bf16.mxu0 %v4686
      %4991 = vmatpush2.bf16.msra.mxu0 %v4685
      %4992 = vmatprep.subr.bf16.mxu0 %v4682
      %4993 = vmatpush2.bf16.msra.mxu0 %v4681
      %4994 = vmatprep.subr.bf16.mxu0 %v4678
      %4995 = vmatpush2.bf16.msra.mxu0 %v4677
      %4996 = vmatprep.mubr.bf16.mxu0 %v4190
      %4997 = vmatmul.mubr.bf16.gmra.mxu0 %v4187
      %v4998 = vpop.f32.mrf.mxu0
      %v4999 = vadd.f32 %v4956, %v4998
      %v5000 = vpop.f32.mrf.mxu0
      %v5001 = vadd.f32 %v4958, %v5000
      %v5002 = vpop.f32.mrf.mxu0
      %v5003 = vadd.f32 %v4960, %v5002
      %v5004 = vpop.f32.mrf.mxu0
      %v5005 = vadd.f32 %v4962, %v5004
      %5006 = vdwg.mxu0
      %v5007 = vadd.f32 %v3931, %v4913
      %v5008 = vadd.f32 %v3933, %v4915
      %v5009 = vadd.f32 %v4017, %v4999
      %v5010 = vadd.f32 %v4019, %v5001
      %v5011 = vadd.f32 %v3935, %v4917
      %v5012 = vadd.f32 %v3937, %v4919
      %v5013 = vadd.f32 %v4021, %v5003
      %v5014 = vadd.f32 %v4023, %v5005
      %v5015 = vld [vmem:[%s6] sm:$0xf]
      %v5017 = vlaneseq
      %v5018 = vshrl.u32 %v5017, 7
      %v5019 = vsub.s32 0, %v5018
      %v5020 = vrot.slane %v5015, %v5019
      %v5021 = vlaneseq
      %v5022 = vshrl.u32 %v5021, 7
      %v5023 = vsub.s32 1, %v5022
      %v5024 = vrot.slane %v5015, %v5023
      %v5025 = vlaneseq
      %v5026 = vshrl.u32 %v5025, 7
      %v5027 = vsub.s32 2, %v5026
      %v5028 = vrot.slane %v5015, %v5027
      %v5029 = vlaneseq
      %v5030 = vshrl.u32 %v5029, 7
      %v5031 = vsub.s32 3, %v5030
      %v5032 = vrot.slane %v5015, %v5031
      %v5037 = vadd.f32 %v5007, %v5020
      %v5038 = vadd.f32 %v5008, %v5024
      %v5039 = vadd.f32 %v5009, %v5028
      %v5040 = vadd.f32 %v5010, %v5032
      %v5041 = vadd.f32 %v5011, %v5020
      %v5042 = vadd.f32 %v5012, %v5024
      %v5043 = vadd.f32 %v5013, %v5028
      %v5044 = vadd.f32 %v5014, %v5032
      %v5045 = vld [vmem:[%s7] sm:$0xf]
      %v5046 = vld [vmem:[%s8] sm:$0xf]
      %v5047 = vadd.f32 %v5037, %v5041
      %v5048 = vrot.slane %v5047, 4
      %v5049 = vadd.f32 %v5047, %v5048
      %v5050 = vrot.slane %v5049, 2
      %v5051 = vadd.f32 %v5049, %v5050
      %v5052 = vrot.slane %v5051, 1
      %v5053 = vadd.f32 %v5051, %v5052
      %v5054 = vadd.f32 %v5038, %v5042
      %v5055 = vrot.slane %v5054, 4
      %v5056 = vadd.f32 %v5054, %v5055
      %v5057 = vrot.slane %v5056, 2
      %v5058 = vadd.f32 %v5056, %v5057
      %v5059 = vrot.slane %v5058, 1
      %v5060 = vadd.f32 %v5058, %v5059
      %v5061 = vadd.f32 %v5039, %v5043
      %v5062 = vrot.slane %v5061, 4
      %v5063 = vadd.f32 %v5061, %v5062
      %v5064 = vrot.slane %v5063, 2
      %v5065 = vadd.f32 %v5063, %v5064
      %v5066 = vrot.slane %v5065, 1
      %v5067 = vadd.f32 %v5065, %v5066
      %v5068 = vadd.f32 %v5040, %v5044
      %v5069 = vrot.slane %v5068, 4
      %v5070 = vadd.f32 %v5068, %v5069
      %v5071 = vrot.slane %v5070, 2
      %v5072 = vadd.f32 %v5070, %v5071
      %v5073 = vrot.slane %v5072, 1
      %v5074 = vadd.f32 %v5072, %v5073
      %5075 = vmatprep.subr.mxu0 %v422
      %5076 = vmatpush1.msra.mxu0 %v421
      %5077 = vmatprep.subr.mxu0 %v418
      %5078 = vmatpush1.msra.mxu0 %v417
      %5079 = vmatprep.subr.mxu0 %v414
      %5080 = vmatpush1.msra.mxu0 %v413
      %5081 = vmatprep.subr.mxu0 %v410
      %5082 = vmatpush1.msra.mxu0 %v409
      %5083 = vmatprep.subr.mxu0 %v406
      %5084 = vmatpush1.msra.mxu0 %v405
      %5085 = vmatprep.subr.mxu0 %v402
      %5086 = vmatpush1.msra.mxu0 %v401
      %5087 = vmatprep.subr.mxu0 %v398
      %5088 = vmatpush1.msra.mxu0 %v397
      %5089 = vmatprep.subr.mxu0 %v394
      %5090 = vmatpush1.msra.mxu0 %v393
      %5091 = vmatprep.subr.mxu0 %v390
      %5092 = vmatpush1.msra.mxu0 %v389
      %5093 = vmatprep.subr.mxu0 %v386
      %5094 = vmatpush1.msra.mxu0 %v385
      %5095 = vmatprep.subr.mxu0 %v382
      %5096 = vmatpush1.msra.mxu0 %v381
      %5097 = vmatprep.subr.mxu0 %v378
      %5098 = vmatpush1.msra.mxu0 %v377
      %5099 = vmatprep.subr.mxu0 %v374
      %5100 = vmatpush1.msra.mxu0 %v373
      %5101 = vmatprep.subr.mxu0 %v370
      %5102 = vmatpush1.msra.mxu0 %v369
      %5103 = vmatprep.subr.mxu0 %v366
      %5104 = vmatpush1.msra.mxu0 %v365
      %5105 = vmatprep.subr.mxu0 %v362
      %5106 = vmatpush1.msra.mxu0 %v361
      %5107 = vmatprep.subr.mxu0 %v486
      %5108 = vmatpush2.msra.mxu0 %v485
      %5109 = vmatprep.subr.mxu0 %v482
      %5110 = vmatpush2.msra.mxu0 %v481
      %5111 = vmatprep.subr.mxu0 %v478
      %5112 = vmatpush2.msra.mxu0 %v477
      %5113 = vmatprep.subr.mxu0 %v474
      %5114 = vmatpush2.msra.mxu0 %v473
      %5115 = vmatprep.subr.mxu0 %v470
      %5116 = vmatpush2.msra.mxu0 %v469
      %5117 = vmatprep.subr.mxu0 %v466
      %5118 = vmatpush2.msra.mxu0 %v465
      %5119 = vmatprep.subr.mxu0 %v462
      %5120 = vmatpush2.msra.mxu0 %v461
      %5121 = vmatprep.subr.mxu0 %v458
      %5122 = vmatpush2.msra.mxu0 %v457
      %5123 = vmatprep.subr.mxu0 %v454
      %5124 = vmatpush2.msra.mxu0 %v453
      %5125 = vmatprep.subr.mxu0 %v450
      %5126 = vmatpush2.msra.mxu0 %v449
      %5127 = vmatprep.subr.mxu0 %v446
      %5128 = vmatpush2.msra.mxu0 %v445
      %5129 = vmatprep.subr.mxu0 %v442
      %5130 = vmatpush2.msra.mxu0 %v441
      %5131 = vmatprep.subr.mxu0 %v438
      %5132 = vmatpush2.msra.mxu0 %v437
      %5133 = vmatprep.subr.mxu0 %v434
      %5134 = vmatpush2.msra.mxu0 %v433
      %5135 = vmatprep.subr.mxu0 %v430
      %5136 = vmatpush2.msra.mxu0 %v429
      %5137 = vmatprep.subr.mxu0 %v426
      %5138 = vmatpush2.msra.mxu0 %v425
      %5139 = vmatprep.mubr.f32.mxu0 %v5060
      %5140 = vmatmul.mubr.f32.gmra.mxu0 %v5053
      %v5141 = vpop.f32.mrf.mxu0
      %v5142 = vadd.f32 0.0, %v5141
      %v5143 = vpop.f32.mrf.mxu0
      %v5144 = vadd.f32 0.0, %v5143
      %5145 = vdwg.mxu0
      %5146 = vmatprep.subr.mxu0 %v550
      %5147 = vmatpush1.msra.mxu0 %v549
      %5148 = vmatprep.subr.mxu0 %v546
      %5149 = vmatpush1.msra.mxu0 %v545
      %5150 = vmatprep.subr.mxu0 %v542
      %5151 = vmatpush1.msra.mxu0 %v541
      %5152 = vmatprep.subr.mxu0 %v538
      %5153 = vmatpush1.msra.mxu0 %v537
      %5154 = vmatprep.subr.mxu0 %v534
      %5155 = vmatpush1.msra.mxu0 %v533
      %5156 = vmatprep.subr.mxu0 %v530
      %5157 = vmatpush1.msra.mxu0 %v529
      %5158 = vmatprep.subr.mxu0 %v526
      %5159 = vmatpush1.msra.mxu0 %v525
      %5160 = vmatprep.subr.mxu0 %v522
      %5161 = vmatpush1.msra.mxu0 %v521
      %5162 = vmatprep.subr.mxu0 %v518
      %5163 = vmatpush1.msra.mxu0 %v517
      %5164 = vmatprep.subr.mxu0 %v514
      %5165 = vmatpush1.msra.mxu0 %v513
      %5166 = vmatprep.subr.mxu0 %v510
      %5167 = vmatpush1.msra.mxu0 %v509
      %5168 = vmatprep.subr.mxu0 %v506
      %5169 = vmatpush1.msra.mxu0 %v505
      %5170 = vmatprep.subr.mxu0 %v502
      %5171 = vmatpush1.msra.mxu0 %v501
      %5172 = vmatprep.subr.mxu0 %v498
      %5173 = vmatpush1.msra.mxu0 %v497
      %5174 = vmatprep.subr.mxu0 %v494
      %5175 = vmatpush1.msra.mxu0 %v493
      %5176 = vmatprep.subr.mxu0 %v490
      %5177 = vmatpush1.msra.mxu0 %v489
      %5178 = vmatprep.subr.mxu0 %v614
      %5179 = vmatpush2.msra.mxu0 %v613
      %5180 = vmatprep.subr.mxu0 %v610
      %5181 = vmatpush2.msra.mxu0 %v609
      %5182 = vmatprep.subr.mxu0 %v606
      %5183 = vmatpush2.msra.mxu0 %v605
      %5184 = vmatprep.subr.mxu0 %v602
      %5185 = vmatpush2.msra.mxu0 %v601
      %5186 = vmatprep.subr.mxu0 %v598
      %5187 = vmatpush2.msra.mxu0 %v597
      %5188 = vmatprep.subr.mxu0 %v594
      %5189 = vmatpush2.msra.mxu0 %v593
      %5190 = vmatprep.subr.mxu0 %v590
      %5191 = vmatpush2.msra.mxu0 %v589
      %5192 = vmatprep.subr.mxu0 %v586
      %5193 = vmatpush2.msra.mxu0 %v585
      %5194 = vmatprep.subr.mxu0 %v582
      %5195 = vmatpush2.msra.mxu0 %v581
      %5196 = vmatprep.subr.mxu0 %v578
      %5197 = vmatpush2.msra.mxu0 %v577
      %5198 = vmatprep.subr.mxu0 %v574
      %5199 = vmatpush2.msra.mxu0 %v573
      %5200 = vmatprep.subr.mxu0 %v570
      %5201 = vmatpush2.msra.mxu0 %v569
      %5202 = vmatprep.subr.mxu0 %v566
      %5203 = vmatpush2.msra.mxu0 %v565
      %5204 = vmatprep.subr.mxu0 %v562
      %5205 = vmatpush2.msra.mxu0 %v561
      %5206 = vmatprep.subr.mxu0 %v558
      %5207 = vmatpush2.msra.mxu0 %v557
      %5208 = vmatprep.subr.mxu0 %v554
      %5209 = vmatpush2.msra.mxu0 %v553
      %5210 = vmatprep.mubr.f32.mxu0 %v5074
      %5211 = vmatmul.mubr.f32.gmra.mxu0 %v5067
      %v5212 = vpop.f32.mrf.mxu0
      %v5213 = vadd.f32 %v5142, %v5212
      %v5214 = vpop.f32.mrf.mxu0
      %v5215 = vadd.f32 %v5144, %v5214
      %5216 = vdwg.mxu0
      %5217 = vmatprep.subr.mxu0 %v424
      %5218 = vmatpush1.msra.mxu0 %v423
      %5219 = vmatprep.subr.mxu0 %v420
      %5220 = vmatpush1.msra.mxu0 %v419
      %5221 = vmatprep.subr.mxu0 %v416
      %5222 = vmatpush1.msra.mxu0 %v415
      %5223 = vmatprep.subr.mxu0 %v412
      %5224 = vmatpush1.msra.mxu0 %v411
      %5225 = vmatprep.subr.mxu0 %v408
      %5226 = vmatpush1.msra.mxu0 %v407
      %5227 = vmatprep.subr.mxu0 %v404
      %5228 = vmatpush1.msra.mxu0 %v403
      %5229 = vmatprep.subr.mxu0 %v400
      %5230 = vmatpush1.msra.mxu0 %v399
      %5231 = vmatprep.subr.mxu0 %v396
      %5232 = vmatpush1.msra.mxu0 %v395
      %5233 = vmatprep.subr.mxu0 %v392
      %5234 = vmatpush1.msra.mxu0 %v391
      %5235 = vmatprep.subr.mxu0 %v388
      %5236 = vmatpush1.msra.mxu0 %v387
      %5237 = vmatprep.subr.mxu0 %v384
      %5238 = vmatpush1.msra.mxu0 %v383
      %5239 = vmatprep.subr.mxu0 %v380
      %5240 = vmatpush1.msra.mxu0 %v379
      %5241 = vmatprep.subr.mxu0 %v376
      %5242 = vmatpush1.msra.mxu0 %v375
      %5243 = vmatprep.subr.mxu0 %v372
      %5244 = vmatpush1.msra.mxu0 %v371
      %5245 = vmatprep.subr.mxu0 %v368
      %5246 = vmatpush1.msra.mxu0 %v367
      %5247 = vmatprep.subr.mxu0 %v364
      %5248 = vmatpush1.msra.mxu0 %v363
      %5249 = vmatprep.subr.mxu0 %v488
      %5250 = vmatpush2.msra.mxu0 %v487
      %5251 = vmatprep.subr.mxu0 %v484
      %5252 = vmatpush2.msra.mxu0 %v483
      %5253 = vmatprep.subr.mxu0 %v480
      %5254 = vmatpush2.msra.mxu0 %v479
      %5255 = vmatprep.subr.mxu0 %v476
      %5256 = vmatpush2.msra.mxu0 %v475
      %5257 = vmatprep.subr.mxu0 %v472
      %5258 = vmatpush2.msra.mxu0 %v471
      %5259 = vmatprep.subr.mxu0 %v468
      %5260 = vmatpush2.msra.mxu0 %v467
      %5261 = vmatprep.subr.mxu0 %v464
      %5262 = vmatpush2.msra.mxu0 %v463
      %5263 = vmatprep.subr.mxu0 %v460
      %5264 = vmatpush2.msra.mxu0 %v459
      %5265 = vmatprep.subr.mxu0 %v456
      %5266 = vmatpush2.msra.mxu0 %v455
      %5267 = vmatprep.subr.mxu0 %v452
      %5268 = vmatpush2.msra.mxu0 %v451
      %5269 = vmatprep.subr.mxu0 %v448
      %5270 = vmatpush2.msra.mxu0 %v447
      %5271 = vmatprep.subr.mxu0 %v444
      %5272 = vmatpush2.msra.mxu0 %v443
      %5273 = vmatprep.subr.mxu0 %v440
      %5274 = vmatpush2.msra.mxu0 %v439
      %5275 = vmatprep.subr.mxu0 %v436
      %5276 = vmatpush2.msra.mxu0 %v435
      %5277 = vmatprep.subr.mxu0 %v432
      %5278 = vmatpush2.msra.mxu0 %v431
      %5279 = vmatprep.subr.mxu0 %v428
      %5280 = vmatpush2.msra.mxu0 %v427
      %5281 = vmatprep.mubr.f32.mxu0 %v5060
      %5282 = vmatmul.mubr.f32.gmra.mxu0 %v5053
      %v5283 = vpop.f32.mrf.mxu0
      %v5284 = vadd.f32 0.0, %v5283
      %v5285 = vpop.f32.mrf.mxu0
      %v5286 = vadd.f32 0.0, %v5285
      %5287 = vdwg.mxu0
      %5288 = vmatprep.subr.mxu0 %v552
      %5289 = vmatpush1.msra.mxu0 %v551
      %5290 = vmatprep.subr.mxu0 %v548
      %5291 = vmatpush1.msra.mxu0 %v547
      %5292 = vmatprep.subr.mxu0 %v544
      %5293 = vmatpush1.msra.mxu0 %v543
      %5294 = vmatprep.subr.mxu0 %v540
      %5295 = vmatpush1.msra.mxu0 %v539
      %5296 = vmatprep.subr.mxu0 %v536
      %5297 = vmatpush1.msra.mxu0 %v535
      %5298 = vmatprep.subr.mxu0 %v532
      %5299 = vmatpush1.msra.mxu0 %v531
      %5300 = vmatprep.subr.mxu0 %v528
      %5301 = vmatpush1.msra.mxu0 %v527
      %5302 = vmatprep.subr.mxu0 %v524
      %5303 = vmatpush1.msra.mxu0 %v523
      %5304 = vmatprep.subr.mxu0 %v520
      %5305 = vmatpush1.msra.mxu0 %v519
      %5306 = vmatprep.subr.mxu0 %v516
      %5307 = vmatpush1.msra.mxu0 %v515
      %5308 = vmatprep.subr.mxu0 %v512
      %5309 = vmatpush1.msra.mxu0 %v511
      %5310 = vmatprep.subr.mxu0 %v508
      %5311 = vmatpush1.msra.mxu0 %v507
      %5312 = vmatprep.subr.mxu0 %v504
      %5313 = vmatpush1.msra.mxu0 %v503
      %5314 = vmatprep.subr.mxu0 %v500
      %5315 = vmatpush1.msra.mxu0 %v499
      %5316 = vmatprep.subr.mxu0 %v496
      %5317 = vmatpush1.msra.mxu0 %v495
      %5318 = vmatprep.subr.mxu0 %v492
      %5319 = vmatpush1.msra.mxu0 %v491
      %5320 = vmatprep.subr.mxu0 %v616
      %5321 = vmatpush2.msra.mxu0 %v615
      %5322 = vmatprep.subr.mxu0 %v612
      %5323 = vmatpush2.msra.mxu0 %v611
      %5324 = vmatprep.subr.mxu0 %v608
      %5325 = vmatpush2.msra.mxu0 %v607
      %5326 = vmatprep.subr.mxu0 %v604
      %5327 = vmatpush2.msra.mxu0 %v603
      %5328 = vmatprep.subr.mxu0 %v600
      %5329 = vmatpush2.msra.mxu0 %v599
      %5330 = vmatprep.subr.mxu0 %v596
      %5331 = vmatpush2.msra.mxu0 %v595
      %5332 = vmatprep.subr.mxu0 %v592
      %5333 = vmatpush2.msra.mxu0 %v591
      %5334 = vmatprep.subr.mxu0 %v588
      %5335 = vmatpush2.msra.mxu0 %v587
      %5336 = vmatprep.subr.mxu0 %v584
      %5337 = vmatpush2.msra.mxu0 %v583
      %5338 = vmatprep.subr.mxu0 %v580
      %5339 = vmatpush2.msra.mxu0 %v579
      %5340 = vmatprep.subr.mxu0 %v576
      %5341 = vmatpush2.msra.mxu0 %v575
      %5342 = vmatprep.subr.mxu0 %v572
      %5343 = vmatpush2.msra.mxu0 %v571
      %5344 = vmatprep.subr.mxu0 %v568
      %5345 = vmatpush2.msra.mxu0 %v567
      %5346 = vmatprep.subr.mxu0 %v564
      %5347 = vmatpush2.msra.mxu0 %v563
      %5348 = vmatprep.subr.mxu0 %v560
      %5349 = vmatpush2.msra.mxu0 %v559
      %5350 = vmatprep.subr.mxu0 %v556
      %5351 = vmatpush2.msra.mxu0 %v555
      %5352 = vmatprep.mubr.f32.mxu0 %v5074
      %5353 = vmatmul.mubr.f32.gmra.mxu0 %v5067
      %v5354 = vpop.f32.mrf.mxu0
      %v5355 = vadd.f32 %v5284, %v5354
      %v5356 = vpop.f32.mrf.mxu0
      %v5357 = vadd.f32 %v5286, %v5356
      %5358 = vdwg.mxu0
      %v5359 = vlaneseq
      %v5360 = vshrl.u32 %v5359, 7
      %v5361 = vsub.s32 0, %v5360
      %v5362 = vrot.slane %v5213, %v5361
      %v5363 = vlaneseq
      %v5364 = vshrl.u32 %v5363, 7
      %v5365 = vsub.s32 0, %v5364
      %v5366 = vrot.slane %v5215, %v5365
      %v5367 = vlaneseq
      %v5368 = vshrl.u32 %v5367, 7
      %v5369 = vsub.s32 0, %v5368
      %v5370 = vrot.slane %v5355, %v5369
      %v5371 = vlaneseq
      %v5372 = vshrl.u32 %v5371, 7
      %v5373 = vsub.s32 0, %v5372
      %v5374 = vrot.slane %v5357, %v5373
      %v5375 = vsub.f32 %v5037, %v5362
      %v5376 = vsub.f32 %v5038, %v5366
      %v5377 = vsub.f32 %v5039, %v5370
      %v5378 = vsub.f32 %v5040, %v5374
      %v5379 = vsub.f32 %v5041, %v5362
      %v5380 = vsub.f32 %v5042, %v5366
      %v5381 = vsub.f32 %v5043, %v5370
      %v5382 = vsub.f32 %v5044, %v5374
      %v5383 = vmul.f32 %v5375, %v5375
      %v5384 = vmul.f32 %v5376, %v5376
      %v5385 = vmul.f32 %v5377, %v5377
      %v5386 = vmul.f32 %v5378, %v5378
      %v5387 = vmul.f32 %v5379, %v5379
      %v5388 = vmul.f32 %v5380, %v5380
      %v5389 = vmul.f32 %v5381, %v5381
      %v5390 = vmul.f32 %v5382, %v5382
      %v5391 = vadd.f32 %v5383, %v5387
      %v5392 = vrot.slane %v5391, 4
      %v5393 = vadd.f32 %v5391, %v5392
      %v5394 = vrot.slane %v5393, 2
      %v5395 = vadd.f32 %v5393, %v5394
      %v5396 = vrot.slane %v5395, 1
      %v5397 = vadd.f32 %v5395, %v5396
      %v5398 = vadd.f32 %v5384, %v5388
      %v5399 = vrot.slane %v5398, 4
      %v5400 = vadd.f32 %v5398, %v5399
      %v5401 = vrot.slane %v5400, 2
      %v5402 = vadd.f32 %v5400, %v5401
      %v5403 = vrot.slane %v5402, 1
      %v5404 = vadd.f32 %v5402, %v5403
      %v5405 = vadd.f32 %v5385, %v5389
      %v5406 = vrot.slane %v5405, 4
      %v5407 = vadd.f32 %v5405, %v5406
      %v5408 = vrot.slane %v5407, 2
      %v5409 = vadd.f32 %v5407, %v5408
      %v5410 = vrot.slane %v5409, 1
      %v5411 = vadd.f32 %v5409, %v5410
      %v5412 = vadd.f32 %v5386, %v5390
      %v5413 = vrot.slane %v5412, 4
      %v5414 = vadd.f32 %v5412, %v5413
      %v5415 = vrot.slane %v5414, 2
      %v5416 = vadd.f32 %v5414, %v5415
      %v5417 = vrot.slane %v5416, 1
      %v5418 = vadd.f32 %v5416, %v5417
      %5419 = vmatprep.subr.mxu0 %v422
      %5420 = vmatpush1.msra.mxu0 %v421
      %5421 = vmatprep.subr.mxu0 %v418
      %5422 = vmatpush1.msra.mxu0 %v417
      %5423 = vmatprep.subr.mxu0 %v414
      %5424 = vmatpush1.msra.mxu0 %v413
      %5425 = vmatprep.subr.mxu0 %v410
      %5426 = vmatpush1.msra.mxu0 %v409
      %5427 = vmatprep.subr.mxu0 %v406
      %5428 = vmatpush1.msra.mxu0 %v405
      %5429 = vmatprep.subr.mxu0 %v402
      %5430 = vmatpush1.msra.mxu0 %v401
      %5431 = vmatprep.subr.mxu0 %v398
      %5432 = vmatpush1.msra.mxu0 %v397
      %5433 = vmatprep.subr.mxu0 %v394
      %5434 = vmatpush1.msra.mxu0 %v393
      %5435 = vmatprep.subr.mxu0 %v390
      %5436 = vmatpush1.msra.mxu0 %v389
      %5437 = vmatprep.subr.mxu0 %v386
      %5438 = vmatpush1.msra.mxu0 %v385
      %5439 = vmatprep.subr.mxu0 %v382
      %5440 = vmatpush1.msra.mxu0 %v381
      %5441 = vmatprep.subr.mxu0 %v378
      %5442 = vmatpush1.msra.mxu0 %v377
      %5443 = vmatprep.subr.mxu0 %v374
      %5444 = vmatpush1.msra.mxu0 %v373
      %5445 = vmatprep.subr.mxu0 %v370
      %5446 = vmatpush1.msra.mxu0 %v369
      %5447 = vmatprep.subr.mxu0 %v366
      %5448 = vmatpush1.msra.mxu0 %v365
      %5449 = vmatprep.subr.mxu0 %v362
      %5450 = vmatpush1.msra.mxu0 %v361
      %5451 = vmatprep.subr.mxu0 %v486
      %5452 = vmatpush2.msra.mxu0 %v485
      %5453 = vmatprep.subr.mxu0 %v482
      %5454 = vmatpush2.msra.mxu0 %v481
      %5455 = vmatprep.subr.mxu0 %v478
      %5456 = vmatpush2.msra.mxu0 %v477
      %5457 = vmatprep.subr.mxu0 %v474
      %5458 = vmatpush2.msra.mxu0 %v473
      %5459 = vmatprep.subr.mxu0 %v470
      %5460 = vmatpush2.msra.mxu0 %v469
      %5461 = vmatprep.subr.mxu0 %v466
      %5462 = vmatpush2.msra.mxu0 %v465
      %5463 = vmatprep.subr.mxu0 %v462
      %5464 = vmatpush2.msra.mxu0 %v461
      %5465 = vmatprep.subr.mxu0 %v458
      %5466 = vmatpush2.msra.mxu0 %v457
      %5467 = vmatprep.subr.mxu0 %v454
      %5468 = vmatpush2.msra.mxu0 %v453
      %5469 = vmatprep.subr.mxu0 %v450
      %5470 = vmatpush2.msra.mxu0 %v449
      %5471 = vmatprep.subr.mxu0 %v446
      %5472 = vmatpush2.msra.mxu0 %v445
      %5473 = vmatprep.subr.mxu0 %v442
      %5474 = vmatpush2.msra.mxu0 %v441
      %5475 = vmatprep.subr.mxu0 %v438
      %5476 = vmatpush2.msra.mxu0 %v437
      %5477 = vmatprep.subr.mxu0 %v434
      %5478 = vmatpush2.msra.mxu0 %v433
      %5479 = vmatprep.subr.mxu0 %v430
      %5480 = vmatpush2.msra.mxu0 %v429
      %5481 = vmatprep.subr.mxu0 %v426
      %5482 = vmatpush2.msra.mxu0 %v425
      %5483 = vmatprep.mubr.f32.mxu0 %v5404
      %5484 = vmatmul.mubr.f32.gmra.mxu0 %v5397
      %v5485 = vpop.f32.mrf.mxu0
      %v5486 = vadd.f32 1e-05, %v5485
      %v5487 = vpop.f32.mrf.mxu0
      %v5488 = vadd.f32 1e-05, %v5487
      %5489 = vdwg.mxu0
      %5490 = vmatprep.subr.mxu0 %v550
      %5491 = vmatpush1.msra.mxu0 %v549
      %5492 = vmatprep.subr.mxu0 %v546
      %5493 = vmatpush1.msra.mxu0 %v545
      %5494 = vmatprep.subr.mxu0 %v542
      %5495 = vmatpush1.msra.mxu0 %v541
      %5496 = vmatprep.subr.mxu0 %v538
      %5497 = vmatpush1.msra.mxu0 %v537
      %5498 = vmatprep.subr.mxu0 %v534
      %5499 = vmatpush1.msra.mxu0 %v533
      %5500 = vmatprep.subr.mxu0 %v530
      %5501 = vmatpush1.msra.mxu0 %v529
      %5502 = vmatprep.subr.mxu0 %v526
      %5503 = vmatpush1.msra.mxu0 %v525
      %5504 = vmatprep.subr.mxu0 %v522
      %5505 = vmatpush1.msra.mxu0 %v521
      %5506 = vmatprep.subr.mxu0 %v518
      %5507 = vmatpush1.msra.mxu0 %v517
      %5508 = vmatprep.subr.mxu0 %v514
      %5509 = vmatpush1.msra.mxu0 %v513
      %5510 = vmatprep.subr.mxu0 %v510
      %5511 = vmatpush1.msra.mxu0 %v509
      %5512 = vmatprep.subr.mxu0 %v506
      %5513 = vmatpush1.msra.mxu0 %v505
      %5514 = vmatprep.subr.mxu0 %v502
      %5515 = vmatpush1.msra.mxu0 %v501
      %5516 = vmatprep.subr.mxu0 %v498
      %5517 = vmatpush1.msra.mxu0 %v497
      %5518 = vmatprep.subr.mxu0 %v494
      %5519 = vmatpush1.msra.mxu0 %v493
      %5520 = vmatprep.subr.mxu0 %v490
      %5521 = vmatpush1.msra.mxu0 %v489
      %5522 = vmatprep.subr.mxu0 %v614
      %5523 = vmatpush2.msra.mxu0 %v613
      %5524 = vmatprep.subr.mxu0 %v610
      %5525 = vmatpush2.msra.mxu0 %v609
      %5526 = vmatprep.subr.mxu0 %v606
      %5527 = vmatpush2.msra.mxu0 %v605
      %5528 = vmatprep.subr.mxu0 %v602
      %5529 = vmatpush2.msra.mxu0 %v601
      %5530 = vmatprep.subr.mxu0 %v598
      %5531 = vmatpush2.msra.mxu0 %v597
      %5532 = vmatprep.subr.mxu0 %v594
      %5533 = vmatpush2.msra.mxu0 %v593
      %5534 = vmatprep.subr.mxu0 %v590
      %5535 = vmatpush2.msra.mxu0 %v589
      %5536 = vmatprep.subr.mxu0 %v586
      %5537 = vmatpush2.msra.mxu0 %v585
      %5538 = vmatprep.subr.mxu0 %v582
      %5539 = vmatpush2.msra.mxu0 %v581
      %5540 = vmatprep.subr.mxu0 %v578
      %5541 = vmatpush2.msra.mxu0 %v577
      %5542 = vmatprep.subr.mxu0 %v574
      %5543 = vmatpush2.msra.mxu0 %v573
      %5544 = vmatprep.subr.mxu0 %v570
      %5545 = vmatpush2.msra.mxu0 %v569
      %5546 = vmatprep.subr.mxu0 %v566
      %5547 = vmatpush2.msra.mxu0 %v565
      %5548 = vmatprep.subr.mxu0 %v562
      %5549 = vmatpush2.msra.mxu0 %v561
      %5550 = vmatprep.subr.mxu0 %v558
      %5551 = vmatpush2.msra.mxu0 %v557
      %5552 = vmatprep.subr.mxu0 %v554
      %5553 = vmatpush2.msra.mxu0 %v553
      %5554 = vmatprep.mubr.f32.mxu0 %v5418
      %5555 = vmatmul.mubr.f32.gmra.mxu0 %v5411
      %v5556 = vpop.f32.mrf.mxu0
      %v5557 = vadd.f32 %v5486, %v5556
      %v5558 = vpop.f32.mrf.mxu0
      %v5559 = vadd.f32 %v5488, %v5558
      %5560 = vdwg.mxu0
      %5561 = vmatprep.subr.mxu0 %v424
      %5562 = vmatpush1.msra.mxu0 %v423
      %5563 = vmatprep.subr.mxu0 %v420
      %5564 = vmatpush1.msra.mxu0 %v419
      %5565 = vmatprep.subr.mxu0 %v416
      %5566 = vmatpush1.msra.mxu0 %v415
      %5567 = vmatprep.subr.mxu0 %v412
      %5568 = vmatpush1.msra.mxu0 %v411
      %5569 = vmatprep.subr.mxu0 %v408
      %5570 = vmatpush1.msra.mxu0 %v407
      %5571 = vmatprep.subr.mxu0 %v404
      %5572 = vmatpush1.msra.mxu0 %v403
      %5573 = vmatprep.subr.mxu0 %v400
      %5574 = vmatpush1.msra.mxu0 %v399
      %5575 = vmatprep.subr.mxu0 %v396
      %5576 = vmatpush1.msra.mxu0 %v395
      %5577 = vmatprep.subr.mxu0 %v392
      %5578 = vmatpush1.msra.mxu0 %v391
      %5579 = vmatprep.subr.mxu0 %v388
      %5580 = vmatpush1.msra.mxu0 %v387
      %5581 = vmatprep.subr.mxu0 %v384
      %5582 = vmatpush1.msra.mxu0 %v383
      %5583 = vmatprep.subr.mxu0 %v380
      %5584 = vmatpush1.msra.mxu0 %v379
      %5585 = vmatprep.subr.mxu0 %v376
      %5586 = vmatpush1.msra.mxu0 %v375
      %5587 = vmatprep.subr.mxu0 %v372
      %5588 = vmatpush1.msra.mxu0 %v371
      %5589 = vmatprep.subr.mxu0 %v368
      %5590 = vmatpush1.msra.mxu0 %v367
      %5591 = vmatprep.subr.mxu0 %v364
      %5592 = vmatpush1.msra.mxu0 %v363
      %5593 = vmatprep.subr.mxu0 %v488
      %5594 = vmatpush2.msra.mxu0 %v487
      %5595 = vmatprep.subr.mxu0 %v484
      %5596 = vmatpush2.msra.mxu0 %v483
      %5597 = vmatprep.subr.mxu0 %v480
      %5598 = vmatpush2.msra.mxu0 %v479
      %5599 = vmatprep.subr.mxu0 %v476
      %5600 = vmatpush2.msra.mxu0 %v475
      %5601 = vmatprep.subr.mxu0 %v472
      %5602 = vmatpush2.msra.mxu0 %v471
      %5603 = vmatprep.subr.mxu0 %v468
      %5604 = vmatpush2.msra.mxu0 %v467
      %5605 = vmatprep.subr.mxu0 %v464
      %5606 = vmatpush2.msra.mxu0 %v463
      %5607 = vmatprep.subr.mxu0 %v460
      %5608 = vmatpush2.msra.mxu0 %v459
      %5609 = vmatprep.subr.mxu0 %v456
      %5610 = vmatpush2.msra.mxu0 %v455
      %5611 = vmatprep.subr.mxu0 %v452
      %5612 = vmatpush2.msra.mxu0 %v451
      %5613 = vmatprep.subr.mxu0 %v448
      %5614 = vmatpush2.msra.mxu0 %v447
      %5615 = vmatprep.subr.mxu0 %v444
      %5616 = vmatpush2.msra.mxu0 %v443
      %5617 = vmatprep.subr.mxu0 %v440
      %5618 = vmatpush2.msra.mxu0 %v439
      %5619 = vmatprep.subr.mxu0 %v436
      %5620 = vmatpush2.msra.mxu0 %v435
      %5621 = vmatprep.subr.mxu0 %v432
      %5622 = vmatpush2.msra.mxu0 %v431
      %5623 = vmatprep.subr.mxu0 %v428
      %5624 = vmatpush2.msra.mxu0 %v427
      %5625 = vmatprep.mubr.f32.mxu0 %v5404
      %5626 = vmatmul.mubr.f32.gmra.mxu0 %v5397
      %v5627 = vpop.f32.mrf.mxu0
      %v5628 = vadd.f32 1e-05, %v5627
      %v5629 = vpop.f32.mrf.mxu0
      %v5630 = vadd.f32 1e-05, %v5629
      %5631 = vdwg.mxu0
      %5632 = vmatprep.subr.mxu0 %v552
      %5633 = vmatpush1.msra.mxu0 %v551
      %5634 = vmatprep.subr.mxu0 %v548
      %5635 = vmatpush1.msra.mxu0 %v547
      %5636 = vmatprep.subr.mxu0 %v544
      %5637 = vmatpush1.msra.mxu0 %v543
      %5638 = vmatprep.subr.mxu0 %v540
      %5639 = vmatpush1.msra.mxu0 %v539
      %5640 = vmatprep.subr.mxu0 %v536
      %5641 = vmatpush1.msra.mxu0 %v535
      %5642 = vmatprep.subr.mxu0 %v532
      %5643 = vmatpush1.msra.mxu0 %v531
      %5644 = vmatprep.subr.mxu0 %v528
      %5645 = vmatpush1.msra.mxu0 %v527
      %5646 = vmatprep.subr.mxu0 %v524
      %5647 = vmatpush1.msra.mxu0 %v523
      %5648 = vmatprep.subr.mxu0 %v520
      %5649 = vmatpush1.msra.mxu0 %v519
      %5650 = vmatprep.subr.mxu0 %v516
      %5651 = vmatpush1.msra.mxu0 %v515
      %5652 = vmatprep.subr.mxu0 %v512
      %5653 = vmatpush1.msra.mxu0 %v511
      %5654 = vmatprep.subr.mxu0 %v508
      %5655 = vmatpush1.msra.mxu0 %v507
      %5656 = vmatprep.subr.mxu0 %v504
      %5657 = vmatpush1.msra.mxu0 %v503
      %5658 = vmatprep.subr.mxu0 %v500
      %5659 = vmatpush1.msra.mxu0 %v499
      %5660 = vmatprep.subr.mxu0 %v496
      %5661 = vmatpush1.msra.mxu0 %v495
      %5662 = vmatprep.subr.mxu0 %v492
      %5663 = vmatpush1.msra.mxu0 %v491
      %5664 = vmatprep.subr.mxu0 %v616
      %5665 = vmatpush2.msra.mxu0 %v615
      %5666 = vmatprep.subr.mxu0 %v612
      %5667 = vmatpush2.msra.mxu0 %v611
      %5668 = vmatprep.subr.mxu0 %v608
      %5669 = vmatpush2.msra.mxu0 %v607
      %5670 = vmatprep.subr.mxu0 %v604
      %5671 = vmatpush2.msra.mxu0 %v603
      %5672 = vmatprep.subr.mxu0 %v600
      %5673 = vmatpush2.msra.mxu0 %v599
      %5674 = vmatprep.subr.mxu0 %v596
      %5675 = vmatpush2.msra.mxu0 %v595
      %5676 = vmatprep.subr.mxu0 %v592
      %5677 = vmatpush2.msra.mxu0 %v591
      %5678 = vmatprep.subr.mxu0 %v588
      %5679 = vmatpush2.msra.mxu0 %v587
      %5680 = vmatprep.subr.mxu0 %v584
      %5681 = vmatpush2.msra.mxu0 %v583
      %5682 = vmatprep.subr.mxu0 %v580
      %5683 = vmatpush2.msra.mxu0 %v579
      %5684 = vmatprep.subr.mxu0 %v576
      %5685 = vmatpush2.msra.mxu0 %v575
      %5686 = vmatprep.subr.mxu0 %v572
      %5687 = vmatpush2.msra.mxu0 %v571
      %5688 = vmatprep.subr.mxu0 %v568
      %5689 = vmatpush2.msra.mxu0 %v567
      %5690 = vmatprep.subr.mxu0 %v564
      %5691 = vmatpush2.msra.mxu0 %v563
      %5692 = vmatprep.subr.mxu0 %v560
      %5693 = vmatpush2.msra.mxu0 %v559
      %5694 = vmatprep.subr.mxu0 %v556
      %5695 = vmatpush2.msra.mxu0 %v555
      %5696 = vmatprep.mubr.f32.mxu0 %v5418
      %5697 = vmatmul.mubr.f32.gmra.mxu0 %v5411
      %v5698 = vpop.f32.mrf.mxu0
      %v5699 = vadd.f32 %v5628, %v5698
      %v5700 = vpop.f32.mrf.mxu0
      %v5701 = vadd.f32 %v5630, %v5700
      %5702 = vdwg.mxu0
      %v5703 = vrsqrt.pop %v5557
      %v5704 = vrsqrt.pop %v5559
      %v5705 = vrsqrt.pop %v5699
      %v5706 = vrsqrt.pop %v5701
      %v5708 = vlaneseq
      %v5709 = vshrl.u32 %v5708, 7
      %v5710 = vsub.s32 0, %v5709
      %v5711 = vrot.slane %v5045, %v5710
      %v5712 = vlaneseq
      %v5713 = vshrl.u32 %v5712, 7
      %v5714 = vsub.s32 1, %v5713
      %v5715 = vrot.slane %v5045, %v5714
      %v5716 = vlaneseq
      %v5717 = vshrl.u32 %v5716, 7
      %v5718 = vsub.s32 2, %v5717
      %v5719 = vrot.slane %v5045, %v5718
      %v5720 = vlaneseq
      %v5721 = vshrl.u32 %v5720, 7
      %v5722 = vsub.s32 3, %v5721
      %v5723 = vrot.slane %v5045, %v5722
      %v5728 = vmul.f32 %v5703, %v5711
      %v5729 = vmul.f32 %v5704, %v5715
      %v5730 = vmul.f32 %v5705, %v5719
      %v5731 = vmul.f32 %v5706, %v5723
      %v5732 = vlaneseq
      %v5733 = vshrl.u32 %v5732, 7
      %v5734 = vsub.s32 0, %v5733
      %v5735 = vrot.slane %v5728, %v5734
      %v5736 = vlaneseq
      %v5737 = vshrl.u32 %v5736, 7
      %v5738 = vsub.s32 0, %v5737
      %v5739 = vrot.slane %v5729, %v5738
      %v5740 = vlaneseq
      %v5741 = vshrl.u32 %v5740, 7
      %v5742 = vsub.s32 0, %v5741
      %v5743 = vrot.slane %v5730, %v5742
      %v5744 = vlaneseq
      %v5745 = vshrl.u32 %v5744, 7
      %v5746 = vsub.s32 0, %v5745
      %v5747 = vrot.slane %v5731, %v5746
      %v5748 = vmul.f32 %v5375, %v5735
      %v5749 = vmul.f32 %v5376, %v5739
      %v5750 = vmul.f32 %v5377, %v5743
      %v5751 = vmul.f32 %v5378, %v5747
      %v5752 = vmul.f32 %v5379, %v5735
      %v5753 = vmul.f32 %v5380, %v5739
      %v5754 = vmul.f32 %v5381, %v5743
      %v5755 = vmul.f32 %v5382, %v5747
      %v5757 = vlaneseq
      %v5758 = vshrl.u32 %v5757, 7
      %v5759 = vsub.s32 0, %v5758
      %v5760 = vrot.slane %v5046, %v5759
      %v5761 = vlaneseq
      %v5762 = vshrl.u32 %v5761, 7
      %v5763 = vsub.s32 1, %v5762
      %v5764 = vrot.slane %v5046, %v5763
      %v5765 = vlaneseq
      %v5766 = vshrl.u32 %v5765, 7
      %v5767 = vsub.s32 2, %v5766
      %v5768 = vrot.slane %v5046, %v5767
      %v5769 = vlaneseq
      %v5770 = vshrl.u32 %v5769, 7
      %v5771 = vsub.s32 3, %v5770
      %v5772 = vrot.slane %v5046, %v5771
      %v5777 = vadd.f32 %v5748, %v5760
      %v5778 = vadd.f32 %v5749, %v5764
      %v5779 = vadd.f32 %v5750, %v5768
      %v5780 = vadd.f32 %v5751, %v5772
      %v5781 = vadd.f32 %v5752, %v5760
      %v5782 = vadd.f32 %v5753, %v5764
      %v5783 = vadd.f32 %v5754, %v5768
      %v5784 = vadd.f32 %v5755, %v5772
      %v5785 = vmul.f32 %v5777, 0.5
      %v5786 = vmul.f32 %v5778, 0.5
      %v5787 = vmul.f32 %v5779, 0.5
      %v5788 = vmul.f32 %v5780, 0.5
      %v5789 = vmul.f32 %v5781, 0.5
      %v5790 = vmul.f32 %v5782, 0.5
      %v5791 = vmul.f32 %v5783, 0.5
      %v5792 = vmul.f32 %v5784, 0.5
      %v5793 = vmul.f32 %v5777, 0.70710677
      %v5794 = vmul.f32 %v5778, 0.70710677
      %v5795 = vmul.f32 %v5779, 0.70710677
      %v5796 = vmul.f32 %v5780, 0.70710677
      %v5797 = vmul.f32 %v5781, 0.70710677
      %v5798 = vmul.f32 %v5782, 0.70710677
      %v5799 = vmul.f32 %v5783, 0.70710677
      %v5800 = vmul.f32 %v5784, 0.70710677
      %v5801 = verf.f32.pop %v5793
      %v5802 = verf.f32.pop %v5794
      %v5803 = verf.f32.pop %v5795
      %v5804 = verf.f32.pop %v5796
      %v5805 = verf.f32.pop %v5797
      %v5806 = verf.f32.pop %v5798
      %v5807 = verf.f32.pop %v5799
      %v5808 = verf.f32.pop %v5800
      %v5809 = vadd.f32 %v5801, 1.0
      %v5810 = vadd.f32 %v5802, 1.0
      %v5811 = vadd.f32 %v5803, 1.0
      %v5812 = vadd.f32 %v5804, 1.0
      %v5813 = vadd.f32 %v5805, 1.0
      %v5814 = vadd.f32 %v5806, 1.0
      %v5815 = vadd.f32 %v5807, 1.0
      %v5816 = vadd.f32 %v5808, 1.0
      %v5817 = vmul.f32 %v5785, %v5809
      %v5818 = vmul.f32 %v5786, %v5810
      %v5819 = vmul.f32 %v5787, %v5811
      %v5820 = vmul.f32 %v5788, %v5812
      %v5821 = vmul.f32 %v5789, %v5813
      %v5822 = vmul.f32 %v5790, %v5814
      %v5823 = vmul.f32 %v5791, %v5815
      %v5824 = vmul.f32 %v5792, %v5816
      %5825 = vst [vmem:[%s359] sm:$0xff] %v5817
      %5826 = vst [vmem:[%s359 + $0x8] sm:$0xff] %v5818
      %5827 = vst [vmem:[%s359 + $0x10] sm:$0xff] %v5819
      %5828 = vst [vmem:[%s359 + $0x18] sm:$0xff] %v5820
      %5829 = vst [vmem:[%s359 + $0x20] sm:$0xff] %v5821
      %5830 = vst [vmem:[%s359 + $0x28] sm:$0xff] %v5822
      %5831 = vst [vmem:[%s359 + $0x30] sm:$0xff] %v5823
      %5832 = vst [vmem:[%s359 + $0x38] sm:$0xff] %v5824
      %p5833 = scmp.lt.s32.totalorder %s21, 1
      %s5834 = scalar_select %p5833, %s21, 1
      %s5835 = smul.addr %s5834, 8
      %s5836 = smul.addr %s5835, 8
      %s5837 = scalar_lea.vmem %s10, %s5836
      // Predicated region
      $region61: #{conv_block_forward.1} parent=59 // pred_check
        %p5838 = pneg %p254
      $region62: #{conv_block_forward.1} parent=59 // pred_check_branch
        %5840 = sbr.rel (%p5838) target = $region64
      $region63: #{conv_block_forward.1} parent=59 // pred_region
        _
      $region64: #{conv_block_forward.1} parent=59 // pred_fallthru
        _
    $region60: #{conv_block_forward.1} parent=5 // pred_fallthru
      _
    %p5841 = scmp.le.s32.totalorder 2, %s16
    // Predicated region
    $region65: #{conv_block_forward.1} parent=5 // pred_check
      %p5842 = pneg %p5841
    $region66: #{conv_block_forward.1} parent=5 // pred_check_branch
      %5844 = sbr.rel (%p5842) target = $region68
    $region67: #{conv_block_forward.1} parent=5 // pred_region
      %s5845 = ssub.s32 %s16, 2
      // Predicated region
      $region69: #{conv_block_forward.1} parent=67 // pred_check
        %p5846 = pneg %p260
      $region70: #{conv_block_forward.1} parent=67 // pred_check_branch
        %5848 = sbr.rel (%p5846) target = $region72
      $region71: #{conv_block_forward.1} parent=67 // pred_region
        %p5849 = scmp.lt.s32.totalorder %s22, 1
        %s5850 = scalar_select %p5849, %s22, 1
        %s5851 = smul.addr %s5850, 8
        %s5852 = smul.addr %s5851, 8
        %s5853 = scalar_lea.vmem %s10, %s5852
      $region72: #{conv_block_forward.1} parent=67 // pred_fallthru
        _
    $region68: #{conv_block_forward.1} parent=5 // pred_fallthru
      _
  $region6: #{conv_block_forward.1} parent=0 // loop_footer
    %s20 = sadd.s32 1, %s16
  $region7: #{conv_block_forward.1} parent=0 // loop_footer_branch
    %15 = sbr.rel target = $region3
  $region8: #{conv_block_forward.1} parent=0 // loop_exit
    _

</llo_original>
